<compile_context>
chip_gen: v7x
topology: tpu7x:2x2x1
jax: 0.10.0
libtpu: 0.0.40
codegen_flags: <defaults>
</compile_context>

<pallas_src>
import functools

import jax
import jax.numpy as jnp
from jax.experimental import pallas as pl
from jax.experimental.pallas import tpu as pltpu


def _rup(x, m):
    return ((x + m - 1) // m) * m


def _vmem_block_bytes(shape, dtype):
    """Bytes a (..., S, L) block really occupies in VMEM (lane/sublane padded)."""
    itemsize = jnp.dtype(dtype).itemsize
    sublane = 8 * (4 // max(itemsize, 1)) if itemsize < 4 else 8   # 8 f32 / 16 bf16 / 32 i8
    if len(shape) < 2:
        return _rup(int(shape[0]) if shape else 1, 128) * itemsize
    lead = 1
    for d in shape[:-2]:
        lead *= int(d)
    return lead * _rup(int(shape[-2]), sublane) * _rup(int(shape[-1]), 128) * itemsize


def _vmem_capacity_bytes():
    try:
        return int(pltpu.get_tpu_info().vmem_capacity_bytes)
    except Exception:
        return 64 * 2 ** 20        # conservative (v7x-sized) fallback


# ----------------------------- Pallas kernel ------------------------------ #
def _make_kernel(phases, tq, rp, co, out_dtype):
    """phases: list of (col0, [(tap_idx, off_h, off_w), ...]); all static ints."""

    def kernel(x_ref, w_ref, o_ref):
        # x_ref: (Hg, Wg, Cip)    padded input sample, resident across row tiles
        # w_ref: (T, Cip, Co)     all kernel taps grouped by phase (grid-invariant)
        # o_ref: (Tq, Rp, s*s*Co) output row tile; columns = depth-to-space phases
        qt = pl.program_id(1)
        q0 = qt * tq
        if tq % 8 == 0:
            q0 = pl.multiple_of(q0, 8)
        for col0, taps in phases:
            if not taps:            # phase with no kernel taps (only if stride > K)
                o_ref[:, :, col0:col0 + co] = jnp.zeros((tq, rp, co), out_dtype)
                continue
            acc = None
            for t, off_h, off_w in taps:        # static unrolled tap loop
                xw = x_ref[pl.ds(q0 + off_h, tq), pl.ds(off_w, rp), :]   # (Tq,Rp,Cip)
                a = xw.reshape(tq * rp, xw.shape[-1])                    # (M, Cip)
                part = jnp.dot(a, w_ref[t], preferred_element_type=jnp.float32)
                acc = part if acc is None else acc + part
            y = jnp.maximum(acc, 0.0).reshape(tq, rp, co).astype(out_dtype)
            o_ref[:, :, col0:col0 + co] = y
        # TODO(synk): for very large Ci*Co (weight block no longer VMEM-resident,
        # matters first on v7x's 64 MiB) add a trailing "arbitrary" tap/K grid axis
        # with a VMEM f32 accumulator + pl.when finalize.

    return kernel


# ------------------------------ JAX wrapper -------------------------------- #
@functools.partial(jax.jit, static_argnames=("stride", "padding", "compute_dtype"))
def conv_block_t(x, w, *, stride, padding, compute_dtype=None):
    """ConvTranspose2d(bias=False) + ReLU (NCHW in/out, PyTorch weight layout).

    x: (N, Ci, H, W); w: (Ci, Co, K, K).  Output: (N, Co, Ho, Wo) with
    Ho = (H-1)*stride - 2*padding + K.
    compute_dtype: MXU operand dtype.  jnp.bfloat16 is recommended on v5e, v6e
    and v7x (v7x's MXU is bf16/fp8-only) and halves input/weight HBM bytes;
    accumulation, ReLU and the stored output stay float32 / x.dtype.
    """
    n, ci, h, wdim = x.shape
    wci, co, kh_, kw_ = w.shape
    assert wci == ci and kh_ == kw_, "expected ConvTranspose2d weight (Ci, Co, K, K)"
    k, s, p = int(kh_), int(stride), int(padding)
    ho = (h - 1) * s - 2 * p + k
    wo = (wdim - 1) * s - 2 * p + k
    if ho <= 0 or wo <= 0:
        raise ValueError("non-positive output spatial size")

    out_dtype = x.dtype
    op_dtype = jnp.dtype(out_dtype if compute_dtype is None else compute_dtype)

    qp = -(-ho // s)                 # pixel-shuffle rows  (ceil(Ho / s))
    rp = -(-wo // s)                 # pixel-shuffle cols  (ceil(Wo / s))
    cout = s * s * co                # fused depth-to-space output columns

    # Sub-pixel geometry: output o = Q*s + sh uses kernel taps kd = ph + s*j
    # (ph = (sh + p) % s) and input rows  Q - delta - j,  delta = (ph - p)//s.
    def _geom(res):
        ph = (res + p) % s
        delta = (ph - p) // s
        ntap = len(range(ph, k, s))
        return ph, delta, ntap

    hgeo = [_geom(sh) for sh in range(s)]
    wgeo = [_geom(sw) for sw in range(s)]

    pad_t = max(0, max(d + nt - 1 for (_, d, nt) in hgeo))
    pad_l = max(0, max(d + nt - 1 for (_, d, nt) in wgeo))
    pad_r = max(0, max(rp - d - wdim for (_, d, _) in wgeo))
    wg = wdim + pad_l + pad_r

    ci_p = _rup(ci, 8)               # contraction dim >= one sublane tile
    ntaps_total = sum(nh * nw for (_, _, nh) in hgeo for (_, _, nw) in wgeo)

    # ---- generation-aware VMEM budget & row-tile (Tq) selection -------------
    cap = _vmem_capacity_bytes()
    budget = int(0.45 * cap)         # ~58 MiB on v5e/v6e, ~29 MiB on v7x

    def _pad_b(q_cover):
        return max(0, max(q_cover - d - h for (_, d, _) in hgeo))

    def _working_set(tq_):
        q_cover_ = _rup(qp, tq_)
        hg_ = h + pad_t + _pad_b(q_cover_)
        in_blk = _vmem_block_bytes((hg_, wg, ci_p), op_dtype)
        w_blk = _vmem_block_bytes((max(ntaps_total, 1), ci_p, co), op_dtype)
        out_blk = _vmem_block_bytes((tq_, rp, cout), out_dtype)
        m = tq_ * rp
        temps = (_vmem_block_bytes((m, ci_p), op_dtype)
                 + 2 * _vmem_block_bytes((m, co), jnp.float32))
        # input/output (and, by default, the grid-invariant weight block) are
        # double-buffered by the Pallas pipeline.
        return 2 * (in_blk + w_blk + out_blk) + temps

    tq = qp if qp < 8 else _rup(qp, 8)
    while tq > 8 and _working_set(tq) > budget:
        tq = max(8, _rup(tq // 2, 8))
    # >= 4 grid steps when there is enough work: v7x's two TensorCores want
    # >= 2 steps each on the "parallel" axes; megacore on v5e/v6e likewise.
    while n * (-(-qp // tq)) < 4 and tq > 8 and qp > 8:
        tq = max(8, _rup(-(-tq // 2), 8))

    q_cover = _rup(qp, tq)
    qt_steps = q_cover // tq
    pad_b = _pad_b(q_cover)
    hg = h + pad_t + pad_b

    ws = _working_set(tq)
    vmem_limit = int(min(0.9 * cap, max(ws + (16 << 20), 32 << 20)))
    # TODO(synk): if the whole padded sample + weight taps cannot be VMEM-resident
    # (very large spatial / Ci*Co), switch to a row-window manual-DMA double
    # buffer (memory_space=pl.ANY + pltpu.make_async_copy) and a K-split
    # accumulator; not needed at DCGAN-scale shapes.

    # ---- operands ------------------------------------------------------------
    # One NCHW -> NHWC transpose of the small pre-expansion input; spatial halo
    # and the Ci -> ci_p channel pad are folded into a single jnp.pad.
    x_nhwc = jnp.transpose(x, (0, 2, 3, 1)).astype(op_dtype)
    xg = jnp.pad(x_nhwc, ((0, 0), (pad_t, pad_b), (pad_l, pad_r), (0, ci_p - ci)))

    w_op = w.astype(op_dtype)
    if ci_p != ci:
        w_op = jnp.pad(w_op, ((0, ci_p - ci), (0, 0), (0, 0), (0, 0)))

    # Weight taps grouped by phase + static per-tap metadata for the kernel.
    tap_mats = []
    phases = []
    for sh in range(s):
        ph, dh, nh = hgeo[sh]
        for sw in range(s):
            pw, dw, nw = wgeo[sw]
            col0 = (sh * s + sw) * co
            taps = []
            for j in range(nh):
                off_h = pad_t - dh - j
                for i in range(nw):
                    off_w = pad_l - dw - i
                    taps.append((len(tap_mats), off_h, off_w))
                    tap_mats.append(w_op[:, :, ph + s * j, pw + s * i])   # (ci_p, co)
            phases.append((col0, taps))
    w_all = jnp.stack(tap_mats, axis=0) if tap_mats else jnp.zeros((1, ci_p, co), op_dtype)

    kernel = _make_kernel(phases, tq, rp, co, out_dtype)

    out = pl.pallas_call(
        kernel,
        out_shape=jax.ShapeDtypeStruct((n, q_cover, rp, cout), out_dtype),
        grid=(n, qt_steps),
        in_specs=[
            # full padded sample; index constant across the inner row-tile axis
            # so it stays VMEM-resident (one DMA per sample).
            pl.BlockSpec((None, hg, wg, ci_p), lambda b, qt: (b, 0, 0, 0)),
            # grid-invariant weight taps (fetched once, stays resident).
            pl.BlockSpec((int(w_all.shape[0]), ci_p, co), lambda b, qt: (0, 0, 0)),
        ],
        out_specs=pl.BlockSpec((None, tq, rp, cout), lambda b, qt: (b, qt, 0, 0)),
        compiler_params=pltpu.CompilerParams(
            dimension_semantics=("parallel", "parallel"),
            vmem_limit_bytes=vmem_limit,
        ),
    )(xg, w_all)

    # Depth-to-space de-interleave fused with the NHWC -> NCHW module-boundary
    # transpose: (N, Q, R, sh, sw, Co) -> (N, Co, Q, sh, R, sw) -> crop.
    y = out.reshape(n, q_cover, rp, s, s, co)
    y = jnp.transpose(y, (0, 5, 1, 3, 2, 4)).reshape(n, co, q_cover * s, rp * s)
    return y[:, :, :ho, :wo]


# --------------------------------- main ------------------------------------ #
if __name__ == "__main__":
    # ConvBlockT(in_channels=4, out_channels=8, kernel_size=4, stride=2, padding=1)
    in_channels, out_channels, kernel_size, stride, padding = 4, 8, 4, 2, 1
    batch, spatial = 2, 16

    key = jax.random.PRNGKey(0)
    kx, kw = jax.random.split(key)
    x = jax.random.normal(kx, (batch, in_channels, spatial, spatial), jnp.float32)
    fan = in_channels * kernel_size * kernel_size
    w = jax.random.normal(
        kw, (in_channels, out_channels, kernel_size, kernel_size), jnp.float32
    ) * (1.0 / jnp.sqrt(fan))

    # f32 path (exact module semantics)
    y = conv_block_t(x, w, stride=stride, padding=padding)
    y = jax.block_until_ready(y)

    # reference: lhs-dilated conv == conv transpose, + ReLU
    w_conv = jnp.transpose(w[:, :, ::-1, ::-1], (1, 0, 2, 3))   # (Co, Ci, K, K)
    ref = jax.lax.conv_general_dilated(
        x, w_conv, window_strides=(1, 1),
        padding=[(kernel_size - 1 - padding,) * 2] * 2,
        lhs_dilation=(stride, stride),
        dimension_numbers=("NCHW", "OIHW", "NCHW"),
    )
    ref = jnp.maximum(ref, 0.0)

    ho = (spatial - 1) * stride - 2 * padding + kernel_size
    assert y.shape == (batch, out_channels, ho, ho)
    assert jnp.allclose(y, ref, atol=1e-5, rtol=1e-5)

    # bf16 MXU-operand path (recommended on v5e/v6e/v7x; f32 accumulation in-kernel)
    y_bf16 = conv_block_t(x, w, stride=stride, padding=padding,
                          compute_dtype=jnp.bfloat16)
    y_bf16 = jax.block_until_ready(y_bf16)
    assert jnp.allclose(y_bf16, ref, atol=5e-2, rtol=5e-2)

    print("KERNEL_OK")
</pallas_src>

<mosaic_0001>
module attributes {stable_mosaic.version = 11 : i64} {
  func.func @kernel(%arg0: i32, %arg1: i32, %arg2: memref<1x18x18x8xf32, #tpu.memory_space<vmem>>, %arg3: memref<16x8x8xf32, #tpu.memory_space<vmem>>, %arg4: memref<1x8x16x32xf32, #tpu.memory_space<vmem>>) attributes {dimension_semantics = [#tpu.dimension_semantics<parallel>, #tpu.dimension_semantics<parallel>], iteration_bounds = array<i64: 2, 2>, scalar_prefetch = 0 : i64, scratch_operands = 0 : i64, tpu.core_type = #tpu.core_type<tc>, window_params = [{transform_indices = @transform_0, window_bounds = array<i64: 1, 18, 18, 8>}, {pipeline_mode = #tpu.pipeline_mode<synchronous>, transform_indices = @transform_1, window_bounds = array<i64: 16, 8, 8>}, {transform_indices = @transform_2, window_bounds = array<i64: 1, 8, 16, 32>}]} {
    %c8_i32 = arith.constant 8 : i32
    %0 = arith.muli %arg1, %c8_i32 : i32
    %1 = tpu.assume_multiple %0, 8 : i32
    %c1_i32 = arith.constant 1 : i32
    %2 = arith.addi %1, %c1_i32 : i32
    %c0 = arith.constant 0 : index
    %3 = arith.index_cast %2 : i32 to index
    %c1 = arith.constant 1 : index
    %c0_0 = arith.constant 0 : index
    %4 = vector.load %arg2[%c0, %3, %c1, %c0_0] : memref<1x18x18x8xf32, #tpu.memory_space<vmem>>, vector<1x8x16x8xf32>
    %5 = vector.shape_cast %4 : vector<1x8x16x8xf32> to vector<8x16x8xf32>
    %6 = vector.shape_cast %5 : vector<8x16x8xf32> to vector<128x8xf32>
    %c0_1 = arith.constant 0 : index
    %c0_2 = arith.constant 0 : index
    %c0_3 = arith.constant 0 : index
    %7 = vector.load %arg3[%c0_1, %c0_2, %c0_3] : memref<16x8x8xf32, #tpu.memory_space<vmem>>, vector<1x8x8xf32>
    %8 = vector.shape_cast %7 : vector<1x8x8xf32> to vector<8x8xf32>
    %cst = arith.constant dense<0.000000e+00> : vector<128x8xf32>
    %9 = tpu.matmul %6, %8, %cst {dimension_numbers = #tpu.dot_dimension_numbers<[1], [0], [0], [1], [0, 0, 1, 1], [], []>} : vector<128x8xf32>, vector<8x8xf32>, vector<128x8xf32> -> vector<128x8xf32>
    %c1_i32_4 = arith.constant 1 : i32
    %10 = arith.addi %1, %c1_i32_4 : i32
    %c0_5 = arith.constant 0 : index
    %11 = arith.index_cast %10 : i32 to index
    %c0_6 = arith.constant 0 : index
    %c0_7 = arith.constant 0 : index
    %12 = vector.load %arg2[%c0_5, %11, %c0_6, %c0_7] : memref<1x18x18x8xf32, #tpu.memory_space<vmem>>, vector<1x8x16x8xf32>
    %13 = vector.shape_cast %12 : vector<1x8x16x8xf32> to vector<8x16x8xf32>
    %14 = vector.shape_cast %13 : vector<8x16x8xf32> to vector<128x8xf32>
    %c1_8 = arith.constant 1 : index
    %c0_9 = arith.constant 0 : index
    %c0_10 = arith.constant 0 : index
    %15 = vector.load %arg3[%c1_8, %c0_9, %c0_10] : memref<16x8x8xf32, #tpu.memory_space<vmem>>, vector<1x8x8xf32>
    %16 = vector.shape_cast %15 : vector<1x8x8xf32> to vector<8x8xf32>
    %cst_11 = arith.constant dense<0.000000e+00> : vector<128x8xf32>
    %17 = tpu.matmul %14, %16, %cst_11 {dimension_numbers = #tpu.dot_dimension_numbers<[1], [0], [0], [1], [0, 0, 1, 1], [], []>} : vector<128x8xf32>, vector<8x8xf32>, vector<128x8xf32> -> vector<128x8xf32>
    %18 = arith.addf %9, %17 : vector<128x8xf32>
    %c0_i32 = arith.constant 0 : i32
    %19 = arith.addi %1, %c0_i32 : i32
    %c0_12 = arith.constant 0 : index
    %20 = arith.index_cast %19 : i32 to index
    %c1_13 = arith.constant 1 : index
    %c0_14 = arith.constant 0 : index
    %21 = vector.load %arg2[%c0_12, %20, %c1_13, %c0_14] : memref<1x18x18x8xf32, #tpu.memory_space<vmem>>, vector<1x8x16x8xf32>
    %22 = vector.shape_cast %21 : vector<1x8x16x8xf32> to vector<8x16x8xf32>
    %23 = vector.shape_cast %22 : vector<8x16x8xf32> to vector<128x8xf32>
    %c2 = arith.constant 2 : index
    %c0_15 = arith.constant 0 : index
    %c0_16 = arith.constant 0 : index
    %24 = vector.load %arg3[%c2, %c0_15, %c0_16] : memref<16x8x8xf32, #tpu.memory_space<vmem>>, vector<1x8x8xf32>
    %25 = vector.shape_cast %24 : vector<1x8x8xf32> to vector<8x8xf32>
    %cst_17 = arith.constant dense<0.000000e+00> : vector<128x8xf32>
    %26 = tpu.matmul %23, %25, %cst_17 {dimension_numbers = #tpu.dot_dimension_numbers<[1], [0], [0], [1], [0, 0, 1, 1], [], []>} : vector<128x8xf32>, vector<8x8xf32>, vector<128x8xf32> -> vector<128x8xf32>
    %27 = arith.addf %18, %26 : vector<128x8xf32>
    %c0_i32_18 = arith.constant 0 : i32
    %28 = arith.addi %1, %c0_i32_18 : i32
    %c0_19 = arith.constant 0 : index
    %29 = arith.index_cast %28 : i32 to index
    %c0_20 = arith.constant 0 : index
    %c0_21 = arith.constant 0 : index
    %30 = vector.load %arg2[%c0_19, %29, %c0_20, %c0_21] : memref<1x18x18x8xf32, #tpu.memory_space<vmem>>, vector<1x8x16x8xf32>
    %31 = vector.shape_cast %30 : vector<1x8x16x8xf32> to vector<8x16x8xf32>
    %32 = vector.shape_cast %31 : vector<8x16x8xf32> to vector<128x8xf32>
    %c3 = arith.constant 3 : index
    %c0_22 = arith.constant 0 : index
    %c0_23 = arith.constant 0 : index
    %33 = vector.load %arg3[%c3, %c0_22, %c0_23] : memref<16x8x8xf32, #tpu.memory_space<vmem>>, vector<1x8x8xf32>
    %34 = vector.shape_cast %33 : vector<1x8x8xf32> to vector<8x8xf32>
    %cst_24 = arith.constant dense<0.000000e+00> : vector<128x8xf32>
    %35 = tpu.matmul %32, %34, %cst_24 {dimension_numbers = #tpu.dot_dimension_numbers<[1], [0], [0], [1], [0, 0, 1, 1], [], []>} : vector<128x8xf32>, vector<8x8xf32>, vector<128x8xf32> -> vector<128x8xf32>
    %36 = arith.addf %27, %35 : vector<128x8xf32>
    %cst_25 = arith.constant 0.000000e+00 : f32
    %37 = vector.broadcast %cst_25 : f32 to vector<128x8xf32>
    %38 = arith.maximumf %36, %37 : vector<128x8xf32>
    %39 = vector.shape_cast %38 : vector<128x8xf32> to vector<8x16x8xf32>
    %c0_26 = arith.constant 0 : index
    %c0_27 = arith.constant 0 : index
    %c0_28 = arith.constant 0 : index
    %c0_29 = arith.constant 0 : index
    %40 = vector.load %arg4[%c0_26, %c0_27, %c0_28, %c0_29] : memref<1x8x16x32xf32, #tpu.memory_space<vmem>>, vector<1x8x16x8xf32>
    %41 = vector.shape_cast %40 : vector<1x8x16x8xf32> to vector<8x16x8xf32>
    %42 = vector.shape_cast %39 : vector<8x16x8xf32> to vector<1x8x16x8xf32>
    tpu.vector_store %arg4[%c0_26, %c0_27, %c0_28, %c0_29], %42 {strides = array<i32>} : memref<1x8x16x32xf32, #tpu.memory_space<vmem>>, vector<1x8x16x8xf32>,
    %c1_i32_30 = arith.constant 1 : i32
    %43 = arith.addi %1, %c1_i32_30 : i32
    %c0_31 = arith.constant 0 : index
    %44 = arith.index_cast %43 : i32 to index
    %c2_32 = arith.constant 2 : index
    %c0_33 = arith.constant 0 : index
    %45 = vector.load %arg2[%c0_31, %44, %c2_32, %c0_33] : memref<1x18x18x8xf32, #tpu.memory_space<vmem>>, vector<1x8x16x8xf32>
    %46 = vector.shape_cast %45 : vector<1x8x16x8xf32> to vector<8x16x8xf32>
    %47 = vector.shape_cast %46 : vector<8x16x8xf32> to vector<128x8xf32>
    %c4 = arith.constant 4 : index
    %c0_34 = arith.constant 0 : index
    %c0_35 = arith.constant 0 : index
    %48 = vector.load %arg3[%c4, %c0_34, %c0_35] : memref<16x8x8xf32, #tpu.memory_space<vmem>>, vector<1x8x8xf32>
    %49 = vector.shape_cast %48 : vector<1x8x8xf32> to vector<8x8xf32>
    %cst_36 = arith.constant dense<0.000000e+00> : vector<128x8xf32>
    %50 = tpu.matmul %47, %49, %cst_36 {dimension_numbers = #tpu.dot_dimension_numbers<[1], [0], [0], [1], [0, 0, 1, 1], [], []>} : vector<128x8xf32>, vector<8x8xf32>, vector<128x8xf32> -> vector<128x8xf32>
    %c1_i32_37 = arith.constant 1 : i32
    %51 = arith.addi %1, %c1_i32_37 : i32
    %c0_38 = arith.constant 0 : index
    %52 = arith.index_cast %51 : i32 to index
    %c1_39 = arith.constant 1 : index
    %c0_40 = arith.constant 0 : index
    %53 = vector.load %arg2[%c0_38, %52, %c1_39, %c0_40] : memref<1x18x18x8xf32, #tpu.memory_space<vmem>>, vector<1x8x16x8xf32>
    %54 = vector.shape_cast %53 : vector<1x8x16x8xf32> to vector<8x16x8xf32>
    %55 = vector.shape_cast %54 : vector<8x16x8xf32> to vector<128x8xf32>
    %c5 = arith.constant 5 : index
    %c0_41 = arith.constant 0 : index
    %c0_42 = arith.constant 0 : index
    %56 = vector.load %arg3[%c5, %c0_41, %c0_42] : memref<16x8x8xf32, #tpu.memory_space<vmem>>, vector<1x8x8xf32>
    %57 = vector.shape_cast %56 : vector<1x8x8xf32> to vector<8x8xf32>
    %cst_43 = arith.constant dense<0.000000e+00> : vector<128x8xf32>
    %58 = tpu.matmul %55, %57, %cst_43 {dimension_numbers = #tpu.dot_dimension_numbers<[1], [0], [0], [1], [0, 0, 1, 1], [], []>} : vector<128x8xf32>, vector<8x8xf32>, vector<128x8xf32> -> vector<128x8xf32>
    %59 = arith.addf %50, %58 : vector<128x8xf32>
    %c0_i32_44 = arith.constant 0 : i32
    %60 = arith.addi %1, %c0_i32_44 : i32
    %c0_45 = arith.constant 0 : index
    %61 = arith.index_cast %60 : i32 to index
    %c2_46 = arith.constant 2 : index
    %c0_47 = arith.constant 0 : index
    %62 = vector.load %arg2[%c0_45, %61, %c2_46, %c0_47] : memref<1x18x18x8xf32, #tpu.memory_space<vmem>>, vector<1x8x16x8xf32>
    %63 = vector.shape_cast %62 : vector<1x8x16x8xf32> to vector<8x16x8xf32>
    %64 = vector.shape_cast %63 : vector<8x16x8xf32> to vector<128x8xf32>
    %c6 = arith.constant 6 : index
    %c0_48 = arith.constant 0 : index
    %c0_49 = arith.constant 0 : index
    %65 = vector.load %arg3[%c6, %c0_48, %c0_49] : memref<16x8x8xf32, #tpu.memory_space<vmem>>, vector<1x8x8xf32>
    %66 = vector.shape_cast %65 : vector<1x8x8xf32> to vector<8x8xf32>
    %cst_50 = arith.constant dense<0.000000e+00> : vector<128x8xf32>
    %67 = tpu.matmul %64, %66, %cst_50 {dimension_numbers = #tpu.dot_dimension_numbers<[1], [0], [0], [1], [0, 0, 1, 1], [], []>} : vector<128x8xf32>, vector<8x8xf32>, vector<128x8xf32> -> vector<128x8xf32>
    %68 = arith.addf %59, %67 : vector<128x8xf32>
    %c0_i32_51 = arith.constant 0 : i32
    %69 = arith.addi %1, %c0_i32_51 : i32
    %c0_52 = arith.constant 0 : index
    %70 = arith.index_cast %69 : i32 to index
    %c1_53 = arith.constant 1 : index
    %c0_54 = arith.constant 0 : index
    %71 = vector.load %arg2[%c0_52, %70, %c1_53, %c0_54] : memref<1x18x18x8xf32, #tpu.memory_space<vmem>>, vector<1x8x16x8xf32>
    %72 = vector.shape_cast %71 : vector<1x8x16x8xf32> to vector<8x16x8xf32>
    %73 = vector.shape_cast %72 : vector<8x16x8xf32> to vector<128x8xf32>
    %c7 = arith.constant 7 : index
    %c0_55 = arith.constant 0 : index
    %c0_56 = arith.constant 0 : index
    %74 = vector.load %arg3[%c7, %c0_55, %c0_56] : memref<16x8x8xf32, #tpu.memory_space<vmem>>, vector<1x8x8xf32>
    %75 = vector.shape_cast %74 : vector<1x8x8xf32> to vector<8x8xf32>
    %cst_57 = arith.constant dense<0.000000e+00> : vector<128x8xf32>
    %76 = tpu.matmul %73, %75, %cst_57 {dimension_numbers = #tpu.dot_dimension_numbers<[1], [0], [0], [1], [0, 0, 1, 1], [], []>} : vector<128x8xf32>, vector<8x8xf32>, vector<128x8xf32> -> vector<128x8xf32>
    %77 = arith.addf %68, %76 : vector<128x8xf32>
    %cst_58 = arith.constant 0.000000e+00 : f32
    %78 = vector.broadcast %cst_58 : f32 to vector<128x8xf32>
    %79 = arith.maximumf %77, %78 : vector<128x8xf32>
    %80 = vector.shape_cast %79 : vector<128x8xf32> to vector<8x16x8xf32>
    %c0_59 = arith.constant 0 : index
    %c0_60 = arith.constant 0 : index
    %c0_61 = arith.constant 0 : index
    %c8 = arith.constant 8 : index
    %81 = vector.load %arg4[%c0_59, %c0_60, %c0_61, %c8] : memref<1x8x16x32xf32, #tpu.memory_space<vmem>>, vector<1x8x16x8xf32>
    %82 = vector.shape_cast %81 : vector<1x8x16x8xf32> to vector<8x16x8xf32>
    %83 = vector.shape_cast %80 : vector<8x16x8xf32> to vector<1x8x16x8xf32>
    tpu.vector_store %arg4[%c0_59, %c0_60, %c0_61, %c8], %83 {strides = array<i32>} : memref<1x8x16x32xf32, #tpu.memory_space<vmem>>, vector<1x8x16x8xf32>,
    %c2_i32 = arith.constant 2 : i32
    %84 = arith.addi %1, %c2_i32 : i32
    %c0_62 = arith.constant 0 : index
    %85 = arith.index_cast %84 : i32 to index
    %c1_63 = arith.constant 1 : index
    %c0_64 = arith.constant 0 : index
    %86 = vector.load %arg2[%c0_62, %85, %c1_63, %c0_64] : memref<1x18x18x8xf32, #tpu.memory_space<vmem>>, vector<1x8x16x8xf32>
    %87 = vector.shape_cast %86 : vector<1x8x16x8xf32> to vector<8x16x8xf32>
    %88 = vector.shape_cast %87 : vector<8x16x8xf32> to vector<128x8xf32>
    %c8_65 = arith.constant 8 : index
    %c0_66 = arith.constant 0 : index
    %c0_67 = arith.constant 0 : index
    %89 = vector.load %arg3[%c8_65, %c0_66, %c0_67] : memref<16x8x8xf32, #tpu.memory_space<vmem>>, vector<1x8x8xf32>
    %90 = vector.shape_cast %89 : vector<1x8x8xf32> to vector<8x8xf32>
    %cst_68 = arith.constant dense<0.000000e+00> : vector<128x8xf32>
    %91 = tpu.matmul %88, %90, %cst_68 {dimension_numbers = #tpu.dot_dimension_numbers<[1], [0], [0], [1], [0, 0, 1, 1], [], []>} : vector<128x8xf32>, vector<8x8xf32>, vector<128x8xf32> -> vector<128x8xf32>
    %c2_i32_69 = arith.constant 2 : i32
    %92 = arith.addi %1, %c2_i32_69 : i32
    %c0_70 = arith.constant 0 : index
    %93 = arith.index_cast %92 : i32 to index
    %c0_71 = arith.constant 0 : index
    %c0_72 = arith.constant 0 : index
    %94 = vector.load %arg2[%c0_70, %93, %c0_71, %c0_72] : memref<1x18x18x8xf32, #tpu.memory_space<vmem>>, vector<1x8x16x8xf32>
    %95 = vector.shape_cast %94 : vector<1x8x16x8xf32> to vector<8x16x8xf32>
    %96 = vector.shape_cast %95 : vector<8x16x8xf32> to vector<128x8xf32>
    %c9 = arith.constant 9 : index
    %c0_73 = arith.constant 0 : index
    %c0_74 = arith.constant 0 : index
    %97 = vector.load %arg3[%c9, %c0_73, %c0_74] : memref<16x8x8xf32, #tpu.memory_space<vmem>>, vector<1x8x8xf32>
    %98 = vector.shape_cast %97 : vector<1x8x8xf32> to vector<8x8xf32>
    %cst_75 = arith.constant dense<0.000000e+00> : vector<128x8xf32>
    %99 = tpu.matmul %96, %98, %cst_75 {dimension_numbers = #tpu.dot_dimension_numbers<[1], [0], [0], [1], [0, 0, 1, 1], [], []>} : vector<128x8xf32>, vector<8x8xf32>, vector<128x8xf32> -> vector<128x8xf32>
    %100 = arith.addf %91, %99 : vector<128x8xf32>
    %c1_i32_76 = arith.constant 1 : i32
    %101 = arith.addi %1, %c1_i32_76 : i32
    %c0_77 = arith.constant 0 : index
    %102 = arith.index_cast %101 : i32 to index
    %c1_78 = arith.constant 1 : index
    %c0_79 = arith.constant 0 : index
    %103 = vector.load %arg2[%c0_77, %102, %c1_78, %c0_79] : memref<1x18x18x8xf32, #tpu.memory_space<vmem>>, vector<1x8x16x8xf32>
    %104 = vector.shape_cast %103 : vector<1x8x16x8xf32> to vector<8x16x8xf32>
    %105 = vector.shape_cast %104 : vector<8x16x8xf32> to vector<128x8xf32>
    %c10 = arith.constant 10 : index
    %c0_80 = arith.constant 0 : index
    %c0_81 = arith.constant 0 : index
    %106 = vector.load %arg3[%c10, %c0_80, %c0_81] : memref<16x8x8xf32, #tpu.memory_space<vmem>>, vector<1x8x8xf32>
    %107 = vector.shape_cast %106 : vector<1x8x8xf32> to vector<8x8xf32>
    %cst_82 = arith.constant dense<0.000000e+00> : vector<128x8xf32>
    %108 = tpu.matmul %105, %107, %cst_82 {dimension_numbers = #tpu.dot_dimension_numbers<[1], [0], [0], [1], [0, 0, 1, 1], [], []>} : vector<128x8xf32>, vector<8x8xf32>, vector<128x8xf32> -> vector<128x8xf32>
    %109 = arith.addf %100, %108 : vector<128x8xf32>
    %c1_i32_83 = arith.constant 1 : i32
    %110 = arith.addi %1, %c1_i32_83 : i32
    %c0_84 = arith.constant 0 : index
    %111 = arith.index_cast %110 : i32 to index
    %c0_85 = arith.constant 0 : index
    %c0_86 = arith.constant 0 : index
    %112 = vector.load %arg2[%c0_84, %111, %c0_85, %c0_86] : memref<1x18x18x8xf32, #tpu.memory_space<vmem>>, vector<1x8x16x8xf32>
    %113 = vector.shape_cast %112 : vector<1x8x16x8xf32> to vector<8x16x8xf32>
    %114 = vector.shape_cast %113 : vector<8x16x8xf32> to vector<128x8xf32>
    %c11 = arith.constant 11 : index
    %c0_87 = arith.constant 0 : index
    %c0_88 = arith.constant 0 : index
    %115 = vector.load %arg3[%c11, %c0_87, %c0_88] : memref<16x8x8xf32, #tpu.memory_space<vmem>>, vector<1x8x8xf32>
    %116 = vector.shape_cast %115 : vector<1x8x8xf32> to vector<8x8xf32>
    %cst_89 = arith.constant dense<0.000000e+00> : vector<128x8xf32>
    %117 = tpu.matmul %114, %116, %cst_89 {dimension_numbers = #tpu.dot_dimension_numbers<[1], [0], [0], [1], [0, 0, 1, 1], [], []>} : vector<128x8xf32>, vector<8x8xf32>, vector<128x8xf32> -> vector<128x8xf32>
    %118 = arith.addf %109, %117 : vector<128x8xf32>
    %cst_90 = arith.constant 0.000000e+00 : f32
    %119 = vector.broadcast %cst_90 : f32 to vector<128x8xf32>
    %120 = arith.maximumf %118, %119 : vector<128x8xf32>
    %121 = vector.shape_cast %120 : vector<128x8xf32> to vector<8x16x8xf32>
    %c0_91 = arith.constant 0 : index
    %c0_92 = arith.constant 0 : index
    %c0_93 = arith.constant 0 : index
    %c16 = arith.constant 16 : index
    %122 = vector.load %arg4[%c0_91, %c0_92, %c0_93, %c16] : memref<1x8x16x32xf32, #tpu.memory_space<vmem>>, vector<1x8x16x8xf32>
    %123 = vector.shape_cast %122 : vector<1x8x16x8xf32> to vector<8x16x8xf32>
    %124 = vector.shape_cast %121 : vector<8x16x8xf32> to vector<1x8x16x8xf32>
    tpu.vector_store %arg4[%c0_91, %c0_92, %c0_93, %c16], %124 {strides = array<i32>} : memref<1x8x16x32xf32, #tpu.memory_space<vmem>>, vector<1x8x16x8xf32>,
    %c2_i32_94 = arith.constant 2 : i32
    %125 = arith.addi %1, %c2_i32_94 : i32
    %c0_95 = arith.constant 0 : index
    %126 = arith.index_cast %125 : i32 to index
    %c2_96 = arith.constant 2 : index
    %c0_97 = arith.constant 0 : index
    %127 = vector.load %arg2[%c0_95, %126, %c2_96, %c0_97] : memref<1x18x18x8xf32, #tpu.memory_space<vmem>>, vector<1x8x16x8xf32>
    %128 = vector.shape_cast %127 : vector<1x8x16x8xf32> to vector<8x16x8xf32>
    %129 = vector.shape_cast %128 : vector<8x16x8xf32> to vector<128x8xf32>
    %c12 = arith.constant 12 : index
    %c0_98 = arith.constant 0 : index
    %c0_99 = arith.constant 0 : index
    %130 = vector.load %arg3[%c12, %c0_98, %c0_99] : memref<16x8x8xf32, #tpu.memory_space<vmem>>, vector<1x8x8xf32>
    %131 = vector.shape_cast %130 : vector<1x8x8xf32> to vector<8x8xf32>
    %cst_100 = arith.constant dense<0.000000e+00> : vector<128x8xf32>
    %132 = tpu.matmul %129, %131, %cst_100 {dimension_numbers = #tpu.dot_dimension_numbers<[1], [0], [0], [1], [0, 0, 1, 1], [], []>} : vector<128x8xf32>, vector<8x8xf32>, vector<128x8xf32> -> vector<128x8xf32>
    %c2_i32_101 = arith.constant 2 : i32
    %133 = arith.addi %1, %c2_i32_101 : i32
    %c0_102 = arith.constant 0 : index
    %134 = arith.index_cast %133 : i32 to index
    %c1_103 = arith.constant 1 : index
    %c0_104 = arith.constant 0 : index
    %135 = vector.load %arg2[%c0_102, %134, %c1_103, %c0_104] : memref<1x18x18x8xf32, #tpu.memory_space<vmem>>, vector<1x8x16x8xf32>
    %136 = vector.shape_cast %135 : vector<1x8x16x8xf32> to vector<8x16x8xf32>
    %137 = vector.shape_cast %136 : vector<8x16x8xf32> to vector<128x8xf32>
    %c13 = arith.constant 13 : index
    %c0_105 = arith.constant 0 : index
    %c0_106 = arith.constant 0 : index
    %138 = vector.load %arg3[%c13, %c0_105, %c0_106] : memref<16x8x8xf32, #tpu.memory_space<vmem>>, vector<1x8x8xf32>
    %139 = vector.shape_cast %138 : vector<1x8x8xf32> to vector<8x8xf32>
    %cst_107 = arith.constant dense<0.000000e+00> : vector<128x8xf32>
    %140 = tpu.matmul %137, %139, %cst_107 {dimension_numbers = #tpu.dot_dimension_numbers<[1], [0], [0], [1], [0, 0, 1, 1], [], []>} : vector<128x8xf32>, vector<8x8xf32>, vector<128x8xf32> -> vector<128x8xf32>
    %141 = arith.addf %132, %140 : vector<128x8xf32>
    %c1_i32_108 = arith.constant 1 : i32
    %142 = arith.addi %1, %c1_i32_108 : i32
    %c0_109 = arith.constant 0 : index
    %143 = arith.index_cast %142 : i32 to index
    %c2_110 = arith.constant 2 : index
    %c0_111 = arith.constant 0 : index
    %144 = vector.load %arg2[%c0_109, %143, %c2_110, %c0_111] : memref<1x18x18x8xf32, #tpu.memory_space<vmem>>, vector<1x8x16x8xf32>
    %145 = vector.shape_cast %144 : vector<1x8x16x8xf32> to vector<8x16x8xf32>
    %146 = vector.shape_cast %145 : vector<8x16x8xf32> to vector<128x8xf32>
    %c14 = arith.constant 14 : index
    %c0_112 = arith.constant 0 : index
    %c0_113 = arith.constant 0 : index
    %147 = vector.load %arg3[%c14, %c0_112, %c0_113] : memref<16x8x8xf32, #tpu.memory_space<vmem>>, vector<1x8x8xf32>
    %148 = vector.shape_cast %147 : vector<1x8x8xf32> to vector<8x8xf32>
    %cst_114 = arith.constant dense<0.000000e+00> : vector<128x8xf32>
    %149 = tpu.matmul %146, %148, %cst_114 {dimension_numbers = #tpu.dot_dimension_numbers<[1], [0], [0], [1], [0, 0, 1, 1], [], []>} : vector<128x8xf32>, vector<8x8xf32>, vector<128x8xf32> -> vector<128x8xf32>
    %150 = arith.addf %141, %149 : vector<128x8xf32>
    %c1_i32_115 = arith.constant 1 : i32
    %151 = arith.addi %1, %c1_i32_115 : i32
    %c0_116 = arith.constant 0 : index
    %152 = arith.index_cast %151 : i32 to index
    %c1_117 = arith.constant 1 : index
    %c0_118 = arith.constant 0 : index
    %153 = vector.load %arg2[%c0_116, %152, %c1_117, %c0_118] : memref<1x18x18x8xf32, #tpu.memory_space<vmem>>, vector<1x8x16x8xf32>
    %154 = vector.shape_cast %153 : vector<1x8x16x8xf32> to vector<8x16x8xf32>
    %155 = vector.shape_cast %154 : vector<8x16x8xf32> to vector<128x8xf32>
    %c15 = arith.constant 15 : index
    %c0_119 = arith.constant 0 : index
    %c0_120 = arith.constant 0 : index
    %156 = vector.load %arg3[%c15, %c0_119, %c0_120] : memref<16x8x8xf32, #tpu.memory_space<vmem>>, vector<1x8x8xf32>
    %157 = vector.shape_cast %156 : vector<1x8x8xf32> to vector<8x8xf32>
    %cst_121 = arith.constant dense<0.000000e+00> : vector<128x8xf32>
    %158 = tpu.matmul %155, %157, %cst_121 {dimension_numbers = #tpu.dot_dimension_numbers<[1], [0], [0], [1], [0, 0, 1, 1], [], []>} : vector<128x8xf32>, vector<8x8xf32>, vector<128x8xf32> -> vector<128x8xf32>
    %159 = arith.addf %150, %158 : vector<128x8xf32>
    %cst_122 = arith.constant 0.000000e+00 : f32
    %160 = vector.broadcast %cst_122 : f32 to vector<128x8xf32>
    %161 = arith.maximumf %159, %160 : vector<128x8xf32>
    %162 = vector.shape_cast %161 : vector<128x8xf32> to vector<8x16x8xf32>
    %c0_123 = arith.constant 0 : index
    %c0_124 = arith.constant 0 : index
    %c0_125 = arith.constant 0 : index
    %c24 = arith.constant 24 : index
    %163 = vector.load %arg4[%c0_123, %c0_124, %c0_125, %c24] : memref<1x8x16x32xf32, #tpu.memory_space<vmem>>, vector<1x8x16x8xf32>
    %164 = vector.shape_cast %163 : vector<1x8x16x8xf32> to vector<8x16x8xf32>
    %165 = vector.shape_cast %162 : vector<8x16x8xf32> to vector<1x8x16x8xf32>
    tpu.vector_store %arg4[%c0_123, %c0_124, %c0_125, %c24], %165 {strides = array<i32>} : memref<1x8x16x32xf32, #tpu.memory_space<vmem>>, vector<1x8x16x8xf32>,
    return
  }
  func.func @transform_0(%arg0: i32, %arg1: i32) -> (i32, i32, i32, i32) {
    %c0_i32 = arith.constant 0 : i32
    %c0_i32_0 = arith.constant 0 : i32
    %c0_i32_1 = arith.constant 0 : i32
    %c0_i32_2 = arith.constant 0 : i32
    return %arg0, %c0_i32, %c0_i32_0, %c0_i32_1 : i32, i32, i32, i32
  }
  func.func @transform_1(%arg0: i32, %arg1: i32) -> (i32, i32, i32) {
    %c0_i32 = arith.constant 0 : i32
    %c0_i32_0 = arith.constant 0 : i32
    %c0_i32_1 = arith.constant 0 : i32
    %c0_i32_2 = arith.constant 0 : i32
    return %c0_i32, %c0_i32_0, %c0_i32_1 : i32, i32, i32
  }
  func.func @transform_2(%arg0: i32, %arg1: i32) -> (i32, i32, i32, i32) {
    %c0_i32 = arith.constant 0 : i32
    %c0_i32_0 = arith.constant 0 : i32
    %c0_i32_1 = arith.constant 0 : i32
    return %arg0, %arg1, %c0_i32, %c0_i32_0 : i32, i32, i32, i32
  }
}

</mosaic_0001>

<llo_original>
// kernel: conv_block_t.1
$region0: #{conv_block_t.1}
  #allocation0 [shape = 'u32[]', space=smem, size = 0x4, offset = 0x4, fixed_abs, tag = 'smem constant byte address 0x4 - core index']
  #allocation1 [shape = 'u32[144,128]{1,0:T(1,128)}', space=vmem, size = 0x12000, scoped, tag = 'internal scratch']
  %s0 = inlined_call_operand.vmem [shape: f32[2,18,18,8], index: 0, kind: input, shape index: {}]
  %s1 = inlined_call_operand.vmem [shape: f32[16,8,8], index: 1, kind: input, shape index: {}]
  %s2 = inlined_call_operand.vmem [shape: f32[2,16,16,32], index: 2, kind: output, shape index: {}]
  %s3 = sld [smem:[#allocation0]]
  $region41: #{conv_block_t.1} parent=0
    _
  %s5 = ssub.s32 1, %s3
  %s6 = scalar_select 0, %s5, %s3
  loop: start=0, step=1, limit=6
  $region2: #{conv_block_t.1} parent=0 // loop_pre_header
    _
  $region3: #{conv_block_t.1} parent=0 // loop_header
    %s8 = sphi 0, %s12
    %p9 = scmp.ge.s32.totalorder %s8, 6
    %s15 = sphi 0, %s27
    %s16 = sphi 0, %s23
    %s17 = sphi 0, %s15
    %s18 = sphi 0, %s16
    %s19 = sphi 0, %s17
    %s20 = sphi 0, %s18
    %s30 = sphi 0, %s32
    %s33 = sphi 0, %s30
    %s34 = sphi 0, %s33
    %s50 = sphi 0, %s34
    %s54 = sphi 0, %s54
    %s56 = sphi 0, %s54
    %s57 = sphi 0, %s56
    %s71 = sphi 0, %s57
    %s79 = sphi 0, %s81
    %s82 = sphi 0, %s79
    %s83 = sphi 0, %s82
    %s99 = sphi 0, %s83
  $region4: #{conv_block_t.1} parent=0 // loop_header_branch
    %11 = sbr.rel (%p9) target = $region8
  $region5: #{conv_block_t.1} parent=0 // loop_body
    %s13 = ssub.s32 %s8, 1
    %s14 = ssub.s32 %s8, 2
    %s21 = sadd.s32 1, %s16
    %p22 = scmp.ge.s32.totalorder %s21, 2
    %s23 = scalar_select %p22, 0, %s21
    %s24 = sadd.s32 1, %s15
    %s25 = scalar_select %p22, %s24, %s15
    %p26 = scmp.ge.s32.totalorder %s25, 2
    %s27 = scalar_select %p26, 0, %s25
    %s28 = ssub.s32 %s15, %s27
    %p29 = scmp.eq.s32.totalorder %s28, 0
    %s31 = sadd.s32 %s30, 1
    %s32 = scalar_select %p29, %s30, %s31
    %p35 = pneg %p29
    %p36 = scmp.eq.s32.totalorder %s8, 3
    %p37 = por %p35, %p36
    %p38 = scmp.ne.s32.totalorder %s30, %s33
    %p39 = scmp.eq.s32.totalorder %s8, 0
    %p40 = por %p38, %p39
    %p41 = scmp.ne.s32.totalorder %s30, %s33
    %p42 = scmp.eq.s32.totalorder %s13, 3
    %p43 = por %p41, %p42
    %p44 = scmp.ne.s32.totalorder %s33, %s34
    %p45 = scmp.eq.s32.totalorder %s13, 0
    %p46 = por %p44, %p45
    %p47 = scmp.ne.s32.totalorder %s33, %s34
    %p48 = scmp.eq.s32.totalorder %s14, 3
    %p49 = por %p47, %p48
    %p51 = scmp.ne.s32.totalorder %s34, %s50
    %p52 = scmp.eq.s32.totalorder %s14, 0
    %p53 = por %p51, %p52
    %s55 = sadd.s32 %s54, 1
    %p58 = scmp.eq.s32.totalorder %s8, 3
    %p59 = scmp.ne.s32.totalorder %s54, %s56
    %p60 = scmp.eq.s32.totalorder %s8, 0
    %p61 = por %p59, %p60
    %p62 = scmp.ne.s32.totalorder %s54, %s56
    %p63 = scmp.eq.s32.totalorder %s13, 3
    %p64 = por %p62, %p63
    %p65 = scmp.ne.s32.totalorder %s56, %s57
    %p66 = scmp.eq.s32.totalorder %s13, 0
    %p67 = por %p65, %p66
    %p68 = scmp.ne.s32.totalorder %s56, %s57
    %p69 = scmp.eq.s32.totalorder %s14, 3
    %p70 = por %p68, %p69
    %p72 = scmp.ne.s32.totalorder %s57, %s71
    %p73 = scmp.eq.s32.totalorder %s14, 0
    %p74 = por %p72, %p73
    %s75 = ssub.s32 %s15, %s27
    %s76 = ssub.s32 %s16, %s23
    %s77 = sor.u32 %s75, %s76
    %p78 = scmp.eq.s32.totalorder %s77, 0
    %s80 = sadd.s32 %s79, 1
    %s81 = scalar_select %p78, %s79, %s80
    %p84 = pneg %p78
    %p85 = scmp.eq.s32.totalorder %s8, 3
    %p86 = por %p84, %p85
    %p87 = scmp.ne.s32.totalorder %s79, %s82
    %p88 = scmp.eq.s32.totalorder %s8, 0
    %p89 = por %p87, %p88
    %p90 = scmp.ne.s32.totalorder %s79, %s82
    %p91 = scmp.eq.s32.totalorder %s13, 3
    %p92 = por %p90, %p91
    %p93 = scmp.ne.s32.totalorder %s82, %s83
    %p94 = scmp.eq.s32.totalorder %s13, 0
    %p95 = por %p93, %p94
    %p96 = scmp.ne.s32.totalorder %s82, %s83
    %p97 = scmp.eq.s32.totalorder %s14, 3
    %p98 = por %p96, %p97
    %p100 = scmp.ne.s32.totalorder %s83, %s99
    %p101 = scmp.eq.s32.totalorder %s14, 0
    %p102 = por %p100, %p101
    %p103 = scmp.le.s32.totalorder 1, %s8
    %p104 = scmp.lt.s32.totalorder %s8, 5
    %p105 = pnand %p103, %p104
    %p106 = pneg %p105
    // Predicated region
    $region9: #{conv_block_t.1} parent=5 // pred_check
      _
    $region10: #{conv_block_t.1} parent=5 // pred_check_branch
      %108 = sbr.rel (%p105) target = $region12
    $region11: #{conv_block_t.1} parent=5 // pred_region
      %s109 = ssub.s32 %s8, 1
      // Predicated region
      $region13: #{conv_block_t.1} parent=11 // pred_check
        %p110 = pneg %p67
      $region14: #{conv_block_t.1} parent=11 // pred_check_branch
        %112 = sbr.rel (%p110) target = $region16
      $region15: #{conv_block_t.1} parent=11 // pred_region
        _
      $region16: #{conv_block_t.1} parent=11 // pred_fallthru
        _
    $region12: #{conv_block_t.1} parent=5 // pred_fallthru
      _
    %p113 = scmp.lt.s32.totalorder %s8, 4
    // Predicated region
    $region17: #{conv_block_t.1} parent=5 // pred_check
      %p114 = pneg %p113
    $region18: #{conv_block_t.1} parent=5 // pred_check_branch
      %116 = sbr.rel (%p114) target = $region20
    $region19: #{conv_block_t.1} parent=5 // pred_region
      // Predicated region
      $region21: #{conv_block_t.1} parent=19 // pred_check
        %p117 = pneg %p40
      $region22: #{conv_block_t.1} parent=19 // pred_check_branch
        %119 = sbr.rel (%p117) target = $region24
      $region23: #{conv_block_t.1} parent=19 // pred_region
        %p120 = scmp.lt.s32.totalorder %s15, 1
        %s121 = scalar_select %p120, %s15, 1
        %s122 = smul.addr %s121, 54
        %s123 = smul.addr %s122, 8
        %s124 = scalar_lea.vmem %s0, %s123
      $region24: #{conv_block_t.1} parent=19 // pred_fallthru
        _
    $region20: #{conv_block_t.1} parent=5 // pred_fallthru
      _
    %p125 = scmp.le.s32.totalorder 1, %s8
    %p126 = scmp.lt.s32.totalorder %s8, 5
    %p127 = pnand %p125, %p126
    %p128 = pneg %p127
    // Predicated region
    $region25: #{conv_block_t.1} parent=5 // pred_check
      _
    $region26: #{conv_block_t.1} parent=5 // pred_check_branch
      %130 = sbr.rel (%p127) target = $region28
    $region27: #{conv_block_t.1} parent=5 // pred_region
      %s131 = ssub.s32 %s8, 1
      %p132 = scmp.lt.s32.totalorder %s17, 1
      %s133 = scalar_select %p132, %s17, 1
      %s134 = smul.addr %s133, 54
      %s135 = smul.addr %s134, 8
      %s136 = scalar_lea.vmem %s0, %s135
      %p137 = pneg %p46
      %p138 = pneg %p43
      %p139 = pneg %p67
      %p140 = pneg %p64
      %p141 = pneg %p95
      %p142 = pneg %p92
      %s143 = smul.u32 8, %s18
      %p144 = scmp.lt.s32.totalorder %s17, 1
      %s145 = scalar_select %p144, %s17, 1
      %p146 = scmp.lt.s32.totalorder %s143, 15
      %s147 = scalar_select %p146, %s143, 15
      %s148 = smul.addr %s147, 2
      %s149 = smul.addr %s145, 32
      %s150 = sadd.s32 %s148, %s149
      %s151 = smul.addr %s150, 8
      %s152 = scalar_lea.vmem %s2, %s151
      %p153 = scmp.lt.s32.totalorder %s17, 1
      %s154 = scalar_select %p153, %s17, 1
      %s155 = smul.addr %s154, 54
      %s156 = smul.addr %s155, 8
      %s157 = scalar_lea.vmem %s0, %s156
      %s158 = smul.u32 8, %s18
      %p159 = scmp.lt.s32.totalorder %s17, 1
      %s160 = scalar_select %p159, %s17, 1
      %p161 = scmp.lt.s32.totalorder %s158, 15
      %s162 = scalar_select %p161, %s158, 15
      %s163 = smul.addr %s162, 2
      %s164 = smul.addr %s160, 32
      %s165 = sadd.s32 %s163, %s164
      %s166 = smul.addr %s165, 8
      %s167 = scalar_lea.vmem %s2, %s166
      %s168 = smul.u32 8, %s18
      %s169 = smul.u32 %s18, 8
      %s170 = sadd.s32 %s169, 1
      %s171 = smul.u32 %s170, 24
      %s172 = scalar_lea.vmem %s157, %s171
      %v173 = vld [vmem:[%s172 + $0x1] sm:$0xff]
      %v174 = vld [vmem:[%s172 + $0x9] sm:$0xff]
      %v175 = vld [vmem:[%s172 + $0x19] sm:$0xff]
      %v176 = vld [vmem:[%s172 + $0x21] sm:$0xff]
      %v177 = vld [vmem:[%s172 + $0x31] sm:$0xff]
      %v178 = vld [vmem:[%s172 + $0x39] sm:$0xff]
      %v179 = vld [vmem:[%s172 + $0x49] sm:$0xff]
      %v180 = vld [vmem:[%s172 + $0x51] sm:$0xff]
      %v181 = vld [vmem:[%s172 + $0x61] sm:$0xff]
      %v182 = vld [vmem:[%s172 + $0x69] sm:$0xff]
      %v183 = vld [vmem:[%s172 + $0x79] sm:$0xff]
      %v184 = vld [vmem:[%s172 + $0x81] sm:$0xff]
      %v185 = vld [vmem:[%s172 + $0x91] sm:$0xff]
      %v186 = vld [vmem:[%s172 + $0x99] sm:$0xff]
      %v187 = vld [vmem:[%s172 + $0xa9] sm:$0xff]
      %v188 = vld [vmem:[%s172 + $0xb1] sm:$0xff]
      %v189 = vld [vmem:[%s1] sm:$0xff]
      %v190 = vld [vmem:[%s172] sm:$0xff]
      %v191 = vld [vmem:[%s172 + $0x8] sm:$0xff]
      %v192 = vld [vmem:[%s172 + $0x18] sm:$0xff]
      %v193 = vld [vmem:[%s172 + $0x20] sm:$0xff]
      %v194 = vld [vmem:[%s172 + $0x30] sm:$0xff]
      %v195 = vld [vmem:[%s172 + $0x38] sm:$0xff]
      %v196 = vld [vmem:[%s172 + $0x48] sm:$0xff]
      %v197 = vld [vmem:[%s172 + $0x50] sm:$0xff]
      %v198 = vld [vmem:[%s172 + $0x60] sm:$0xff]
      %v199 = vld [vmem:[%s172 + $0x68] sm:$0xff]
      %v200 = vld [vmem:[%s172 + $0x78] sm:$0xff]
      %v201 = vld [vmem:[%s172 + $0x80] sm:$0xff]
      %v202 = vld [vmem:[%s172 + $0x90] sm:$0xff]
      %v203 = vld [vmem:[%s172 + $0x98] sm:$0xff]
      %v204 = vld [vmem:[%s172 + $0xa8] sm:$0xff]
      %v205 = vld [vmem:[%s172 + $0xb0] sm:$0xff]
      %s206 = scalar_lea.vmem %s1, 8
      %v207 = vld [vmem:[%s206] sm:$0xff]
      %vm208 = vcmask 64512
      %v210 = vsel %vm208, %v190, 0
      %v213 = vsel %vm208, %v191, 0
      %v216 = vsel %vm208, %v192, 0
      %v219 = vsel %vm208, %v193, 0
      %v222 = vsel %vm208, %v194, 0
      %v225 = vsel %vm208, %v195, 0
      %v228 = vsel %vm208, %v196, 0
      %v231 = vsel %vm208, %v197, 0
      %v234 = vsel %vm208, %v198, 0
      %v237 = vsel %vm208, %v199, 0
      %v240 = vsel %vm208, %v200, 0
      %v243 = vsel %vm208, %v201, 0
      %v246 = vsel %vm208, %v202, 0
      %v249 = vsel %vm208, %v203, 0
      %v252 = vsel %vm208, %v204, 0
      %v255 = vsel %vm208, %v205, 0
      %257 = vmatprep.subr.mxu0 0.0
      %258 = vmatpush1.msra.mxu0 %v207
      %259 = vmatprep.subr.mxu0 0.0
      %260 = vmatpush1.msra.mxu0 0.0
      %261 = vmatprep.subr.mxu0 0.0
      %262 = vmatpush1.msra.mxu0 0.0
      %263 = vmatprep.subr.mxu0 0.0
      %264 = vmatpush1.msra.mxu0 0.0
      %265 = vmatprep.subr.mxu0 0.0
      %266 = vmatpush1.msra.mxu0 0.0
      %267 = vmatprep.subr.mxu0 0.0
      %268 = vmatpush1.msra.mxu0 0.0
      %269 = vmatprep.subr.mxu0 0.0
      %270 = vmatpush1.msra.mxu0 0.0
      %271 = vmatprep.subr.mxu0 0.0
      %272 = vmatpush1.msra.mxu0 0.0
      %273 = vmatprep.subr.mxu0 0.0
      %274 = vmatpush1.msra.mxu0 0.0
      %275 = vmatprep.subr.mxu0 0.0
      %276 = vmatpush1.msra.mxu0 0.0
      %277 = vmatprep.subr.mxu0 0.0
      %278 = vmatpush1.msra.mxu0 0.0
      %279 = vmatprep.subr.mxu0 0.0
      %280 = vmatpush1.msra.mxu0 0.0
      %281 = vmatprep.subr.mxu0 0.0
      %282 = vmatpush1.msra.mxu0 0.0
      %283 = vmatprep.subr.mxu0 0.0
      %284 = vmatpush1.msra.mxu0 0.0
      %285 = vmatprep.subr.mxu0 0.0
      %286 = vmatpush1.msra.mxu0 0.0
      %287 = vmatprep.subr.mxu0 0.0
      %288 = vmatpush1.msra.mxu0 0.0
      %289 = vmatprep.subr.mxu0 0.0
      %290 = vmatpush1.msra.mxu0 0.0
      %291 = vmatprep.subr.mxu0 0.0
      %292 = vmatpush1.msra.mxu0 0.0
      %293 = vmatprep.subr.mxu0 0.0
      %294 = vmatpush1.msra.mxu0 0.0
      %295 = vmatprep.subr.mxu0 0.0
      %296 = vmatpush1.msra.mxu0 0.0
      %297 = vmatprep.subr.mxu0 0.0
      %298 = vmatpush1.msra.mxu0 0.0
      %299 = vmatprep.subr.mxu0 0.0
      %300 = vmatpush1.msra.mxu0 0.0
      %301 = vmatprep.subr.mxu0 0.0
      %302 = vmatpush1.msra.mxu0 0.0
      %303 = vmatprep.subr.mxu0 0.0
      %304 = vmatpush1.msra.mxu0 0.0
      %305 = vmatprep.subr.mxu0 0.0
      %306 = vmatpush1.msra.mxu0 0.0
      %307 = vmatprep.subr.mxu0 0.0
      %308 = vmatpush1.msra.mxu0 0.0
      %309 = vmatprep.subr.mxu0 0.0
      %310 = vmatpush1.msra.mxu0 0.0
      %311 = vmatprep.subr.mxu0 0.0
      %312 = vmatpush1.msra.mxu0 0.0
      %313 = vmatprep.subr.mxu0 0.0
      %314 = vmatpush1.msra.mxu0 0.0
      %315 = vmatprep.subr.mxu0 0.0
      %316 = vmatpush1.msra.mxu0 0.0
      %317 = vmatprep.subr.mxu0 0.0
      %318 = vmatpush1.msra.mxu0 0.0
      %319 = vmatprep.subr.mxu0 0.0
      %320 = vmatpush1.msra.mxu0 0.0
      %321 = vmatprep.mubr.f32.mxu0 0.0
      %322 = vmatmul.mubr.f32.gmra.mrb[0].mxu0 %v210
      %v323 = vpop.f32.mrb[0].mxu0
      %v324 = vadd.f32 0.0, %v323
      %v325 = vpop.f32.mrb[0].mxu0
      %326 = vmatprep.mubr.f32.mxu0 0.0
      %327 = vmatmul.mubr.f32.gmra.mrb[0].mxu0 %v213
      %v328 = vpop.f32.mrb[0].mxu0
      %v329 = vadd.f32 0.0, %v328
      %v330 = vpop.f32.mrb[0].mxu0
      %331 = vmatprep.mubr.f32.mxu0 0.0
      %332 = vmatmul.mubr.f32.gmra.mrb[0].mxu0 %v216
      %v333 = vpop.f32.mrb[0].mxu0
      %v334 = vadd.f32 0.0, %v333
      %v335 = vpop.f32.mrb[0].mxu0
      %336 = vmatprep.mubr.f32.mxu0 0.0
      %337 = vmatmul.mubr.f32.gmra.mrb[0].mxu0 %v219
      %v338 = vpop.f32.mrb[0].mxu0
      %v339 = vadd.f32 0.0, %v338
      %v340 = vpop.f32.mrb[0].mxu0
      %341 = vmatprep.mubr.f32.mxu0 0.0
      %342 = vmatmul.mubr.f32.gmra.mrb[0].mxu0 %v222
      %v343 = vpop.f32.mrb[0].mxu0
      %v344 = vadd.f32 0.0, %v343
      %v345 = vpop.f32.mrb[0].mxu0
      %346 = vmatprep.mubr.f32.mxu0 0.0
      %347 = vmatmul.mubr.f32.gmra.mrb[0].mxu0 %v225
      %v348 = vpop.f32.mrb[0].mxu0
      %v349 = vadd.f32 0.0, %v348
      %v350 = vpop.f32.mrb[0].mxu0
      %351 = vmatprep.mubr.f32.mxu0 0.0
      %352 = vmatmul.mubr.f32.gmra.mrb[0].mxu0 %v228
      %v353 = vpop.f32.mrb[0].mxu0
      %v354 = vadd.f32 0.0, %v353
      %v355 = vpop.f32.mrb[0].mxu0
      %356 = vmatprep.mubr.f32.mxu0 0.0
      %357 = vmatmul.mubr.f32.gmra.mrb[0].mxu0 %v231
      %v358 = vpop.f32.mrb[0].mxu0
      %v359 = vadd.f32 0.0, %v358
      %v360 = vpop.f32.mrb[0].mxu0
      %361 = vmatprep.mubr.f32.mxu0 0.0
      %362 = vmatmul.mubr.f32.gmra.mrb[0].mxu0 %v234
      %v363 = vpop.f32.mrb[0].mxu0
      %v364 = vadd.f32 0.0, %v363
      %v365 = vpop.f32.mrb[0].mxu0
      %366 = vmatprep.mubr.f32.mxu0 0.0
      %367 = vmatmul.mubr.f32.gmra.mrb[0].mxu0 %v237
      %v368 = vpop.f32.mrb[0].mxu0
      %v369 = vadd.f32 0.0, %v368
      %v370 = vpop.f32.mrb[0].mxu0
      %371 = vmatprep.mubr.f32.mxu0 0.0
      %372 = vmatmul.mubr.f32.gmra.mrb[0].mxu0 %v240
      %v373 = vpop.f32.mrb[0].mxu0
      %v374 = vadd.f32 0.0, %v373
      %v375 = vpop.f32.mrb[0].mxu0
      %376 = vmatprep.mubr.f32.mxu0 0.0
      %377 = vmatmul.mubr.f32.gmra.mrb[0].mxu0 %v243
      %v378 = vpop.f32.mrb[0].mxu0
      %v379 = vadd.f32 0.0, %v378
      %v380 = vpop.f32.mrb[0].mxu0
      %381 = vmatprep.mubr.f32.mxu0 0.0
      %382 = vmatmul.mubr.f32.gmra.mrb[0].mxu0 %v246
      %v383 = vpop.f32.mrb[0].mxu0
      %v384 = vadd.f32 0.0, %v383
      %v385 = vpop.f32.mrb[0].mxu0
      %386 = vmatprep.mubr.f32.mxu0 0.0
      %387 = vmatmul.mubr.f32.gmra.mrb[0].mxu0 %v249
      %v388 = vpop.f32.mrb[0].mxu0
      %v389 = vadd.f32 0.0, %v388
      %v390 = vpop.f32.mrb[0].mxu0
      %391 = vmatprep.mubr.f32.mxu0 0.0
      %392 = vmatmul.mubr.f32.gmra.mrb[0].mxu0 %v252
      %v393 = vpop.f32.mrb[0].mxu0
      %v394 = vadd.f32 0.0, %v393
      %v395 = vpop.f32.mrb[0].mxu0
      %396 = vmatprep.mubr.f32.mxu0 0.0
      %397 = vmatmul.mubr.f32.gmra.mrb[0].mxu0 %v255
      %v398 = vpop.f32.mrb[0].mxu0
      %v399 = vadd.f32 0.0, %v398
      %v400 = vpop.f32.mrb[0].mxu0
      %401 = vdwg.mxu0
      %v403 = vsel %vm208, %v173, 0
      %v406 = vsel %vm208, %v174, 0
      %v409 = vsel %vm208, %v175, 0
      %v412 = vsel %vm208, %v176, 0
      %v415 = vsel %vm208, %v177, 0
      %v418 = vsel %vm208, %v178, 0
      %v421 = vsel %vm208, %v179, 0
      %v424 = vsel %vm208, %v180, 0
      %v427 = vsel %vm208, %v181, 0
      %v430 = vsel %vm208, %v182, 0
      %v433 = vsel %vm208, %v183, 0
      %v436 = vsel %vm208, %v184, 0
      %v439 = vsel %vm208, %v185, 0
      %v442 = vsel %vm208, %v186, 0
      %v445 = vsel %vm208, %v187, 0
      %v448 = vsel %vm208, %v188, 0
      %450 = vmatprep.subr.mxu0 0.0
      %451 = vmatpush1.msra.mxu0 %v189
      %452 = vmatprep.subr.mxu0 0.0
      %453 = vmatpush1.msra.mxu0 0.0
      %454 = vmatprep.subr.mxu0 0.0
      %455 = vmatpush1.msra.mxu0 0.0
      %456 = vmatprep.subr.mxu0 0.0
      %457 = vmatpush1.msra.mxu0 0.0
      %458 = vmatprep.subr.mxu0 0.0
      %459 = vmatpush1.msra.mxu0 0.0
      %460 = vmatprep.subr.mxu0 0.0
      %461 = vmatpush1.msra.mxu0 0.0
      %462 = vmatprep.subr.mxu0 0.0
      %463 = vmatpush1.msra.mxu0 0.0
      %464 = vmatprep.subr.mxu0 0.0
      %465 = vmatpush1.msra.mxu0 0.0
      %466 = vmatprep.subr.mxu0 0.0
      %467 = vmatpush1.msra.mxu0 0.0
      %468 = vmatprep.subr.mxu0 0.0
      %469 = vmatpush1.msra.mxu0 0.0
      %470 = vmatprep.subr.mxu0 0.0
      %471 = vmatpush1.msra.mxu0 0.0
      %472 = vmatprep.subr.mxu0 0.0
      %473 = vmatpush1.msra.mxu0 0.0
      %474 = vmatprep.subr.mxu0 0.0
      %475 = vmatpush1.msra.mxu0 0.0
      %476 = vmatprep.subr.mxu0 0.0
      %477 = vmatpush1.msra.mxu0 0.0
      %478 = vmatprep.subr.mxu0 0.0
      %479 = vmatpush1.msra.mxu0 0.0
      %480 = vmatprep.subr.mxu0 0.0
      %481 = vmatpush1.msra.mxu0 0.0
      %482 = vmatprep.subr.mxu0 0.0
      %483 = vmatpush1.msra.mxu0 0.0
      %484 = vmatprep.subr.mxu0 0.0
      %485 = vmatpush1.msra.mxu0 0.0
      %486 = vmatprep.subr.mxu0 0.0
      %487 = vmatpush1.msra.mxu0 0.0
      %488 = vmatprep.subr.mxu0 0.0
      %489 = vmatpush1.msra.mxu0 0.0
      %490 = vmatprep.subr.mxu0 0.0
      %491 = vmatpush1.msra.mxu0 0.0
      %492 = vmatprep.subr.mxu0 0.0
      %493 = vmatpush1.msra.mxu0 0.0
      %494 = vmatprep.subr.mxu0 0.0
      %495 = vmatpush1.msra.mxu0 0.0
      %496 = vmatprep.subr.mxu0 0.0
      %497 = vmatpush1.msra.mxu0 0.0
      %498 = vmatprep.subr.mxu0 0.0
      %499 = vmatpush1.msra.mxu0 0.0
      %500 = vmatprep.subr.mxu0 0.0
      %501 = vmatpush1.msra.mxu0 0.0
      %502 = vmatprep.subr.mxu0 0.0
      %503 = vmatpush1.msra.mxu0 0.0
      %504 = vmatprep.subr.mxu0 0.0
      %505 = vmatpush1.msra.mxu0 0.0
      %506 = vmatprep.subr.mxu0 0.0
      %507 = vmatpush1.msra.mxu0 0.0
      %508 = vmatprep.subr.mxu0 0.0
      %509 = vmatpush1.msra.mxu0 0.0
      %510 = vmatprep.subr.mxu0 0.0
      %511 = vmatpush1.msra.mxu0 0.0
      %512 = vmatprep.subr.mxu0 0.0
      %513 = vmatpush1.msra.mxu0 0.0
      %514 = vmatprep.mubr.f32.mxu0 0.0
      %515 = vmatmul.mubr.f32.gmra.mrb[0].mxu0 %v403
      %v516 = vpop.f32.mrb[0].mxu0
      %v517 = vadd.f32 %v324, %v516
      %v518 = vpop.f32.mrb[0].mxu0
      %519 = vmatprep.mubr.f32.mxu0 0.0
      %520 = vmatmul.mubr.f32.gmra.mrb[0].mxu0 %v406
      %v521 = vpop.f32.mrb[0].mxu0
      %v522 = vadd.f32 %v329, %v521
      %v523 = vpop.f32.mrb[0].mxu0
      %524 = vmatprep.mubr.f32.mxu0 0.0
      %525 = vmatmul.mubr.f32.gmra.mrb[0].mxu0 %v409
      %v526 = vpop.f32.mrb[0].mxu0
      %v527 = vadd.f32 %v334, %v526
      %v528 = vpop.f32.mrb[0].mxu0
      %529 = vmatprep.mubr.f32.mxu0 0.0
      %530 = vmatmul.mubr.f32.gmra.mrb[0].mxu0 %v412
      %v531 = vpop.f32.mrb[0].mxu0
      %v532 = vadd.f32 %v339, %v531
      %v533 = vpop.f32.mrb[0].mxu0
      %534 = vmatprep.mubr.f32.mxu0 0.0
      %535 = vmatmul.mubr.f32.gmra.mrb[0].mxu0 %v415
      %v536 = vpop.f32.mrb[0].mxu0
      %v537 = vadd.f32 %v344, %v536
      %v538 = vpop.f32.mrb[0].mxu0
      %539 = vmatprep.mubr.f32.mxu0 0.0
      %540 = vmatmul.mubr.f32.gmra.mrb[0].mxu0 %v418
      %v541 = vpop.f32.mrb[0].mxu0
      %v542 = vadd.f32 %v349, %v541
      %v543 = vpop.f32.mrb[0].mxu0
      %544 = vmatprep.mubr.f32.mxu0 0.0
      %545 = vmatmul.mubr.f32.gmra.mrb[0].mxu0 %v421
      %v546 = vpop.f32.mrb[0].mxu0
      %v547 = vadd.f32 %v354, %v546
      %v548 = vpop.f32.mrb[0].mxu0
      %549 = vmatprep.mubr.f32.mxu0 0.0
      %550 = vmatmul.mubr.f32.gmra.mrb[0].mxu0 %v424
      %v551 = vpop.f32.mrb[0].mxu0
      %v552 = vadd.f32 %v359, %v551
      %v553 = vpop.f32.mrb[0].mxu0
      %554 = vmatprep.mubr.f32.mxu0 0.0
      %555 = vmatmul.mubr.f32.gmra.mrb[0].mxu0 %v427
      %v556 = vpop.f32.mrb[0].mxu0
      %v557 = vadd.f32 %v364, %v556
      %v558 = vpop.f32.mrb[0].mxu0
      %559 = vmatprep.mubr.f32.mxu0 0.0
      %560 = vmatmul.mubr.f32.gmra.mrb[0].mxu0 %v430
      %v561 = vpop.f32.mrb[0].mxu0
      %v562 = vadd.f32 %v369, %v561
      %v563 = vpop.f32.mrb[0].mxu0
      %564 = vmatprep.mubr.f32.mxu0 0.0
      %565 = vmatmul.mubr.f32.gmra.mrb[0].mxu0 %v433
      %v566 = vpop.f32.mrb[0].mxu0
      %v567 = vadd.f32 %v374, %v566
      %v568 = vpop.f32.mrb[0].mxu0
      %569 = vmatprep.mubr.f32.mxu0 0.0
      %570 = vmatmul.mubr.f32.gmra.mrb[0].mxu0 %v436
      %v571 = vpop.f32.mrb[0].mxu0
      %v572 = vadd.f32 %v379, %v571
      %v573 = vpop.f32.mrb[0].mxu0
      %574 = vmatprep.mubr.f32.mxu0 0.0
      %575 = vmatmul.mubr.f32.gmra.mrb[0].mxu0 %v439
      %v576 = vpop.f32.mrb[0].mxu0
      %v577 = vadd.f32 %v384, %v576
      %v578 = vpop.f32.mrb[0].mxu0
      %579 = vmatprep.mubr.f32.mxu0 0.0
      %580 = vmatmul.mubr.f32.gmra.mrb[0].mxu0 %v442
      %v581 = vpop.f32.mrb[0].mxu0
      %v582 = vadd.f32 %v389, %v581
      %v583 = vpop.f32.mrb[0].mxu0
      %584 = vmatprep.mubr.f32.mxu0 0.0
      %585 = vmatmul.mubr.f32.gmra.mrb[0].mxu0 %v445
      %v586 = vpop.f32.mrb[0].mxu0
      %v587 = vadd.f32 %v394, %v586
      %v588 = vpop.f32.mrb[0].mxu0
      %589 = vmatprep.mubr.f32.mxu0 0.0
      %590 = vmatmul.mubr.f32.gmra.mrb[0].mxu0 %v448
      %v591 = vpop.f32.mrb[0].mxu0
      %v592 = vadd.f32 %v399, %v591
      %v593 = vpop.f32.mrb[0].mxu0
      %594 = vdwg.mxu0
      %s595 = smul.u32 %s169, 24
      %s596 = scalar_lea.vmem %s157, %s595
      %v597 = vld [vmem:[%s596 + $0x1] sm:$0xff]
      %v598 = vld [vmem:[%s596 + $0x9] sm:$0xff]
      %v599 = vld [vmem:[%s596 + $0x19] sm:$0xff]
      %v600 = vld [vmem:[%s596 + $0x21] sm:$0xff]
      %v601 = vld [vmem:[%s596 + $0x31] sm:$0xff]
      %v602 = vld [vmem:[%s596 + $0x39] sm:$0xff]
      %v603 = vld [vmem:[%s596 + $0x49] sm:$0xff]
      %v604 = vld [vmem:[%s596 + $0x51] sm:$0xff]
      %v605 = vld [vmem:[%s596 + $0x61] sm:$0xff]
      %v606 = vld [vmem:[%s596 + $0x69] sm:$0xff]
      %v607 = vld [vmem:[%s596 + $0x79] sm:$0xff]
      %v608 = vld [vmem:[%s596 + $0x81] sm:$0xff]
      %v609 = vld [vmem:[%s596 + $0x91] sm:$0xff]
      %v610 = vld [vmem:[%s596 + $0x99] sm:$0xff]
      %v611 = vld [vmem:[%s596 + $0xa9] sm:$0xff]
      %v612 = vld [vmem:[%s596 + $0xb1] sm:$0xff]
      %s613 = scalar_lea.vmem %s1, 16
      %v614 = vld [vmem:[%s613] sm:$0xff]
      %v616 = vsel %vm208, %v597, 0
      %v619 = vsel %vm208, %v598, 0
      %v622 = vsel %vm208, %v599, 0
      %v625 = vsel %vm208, %v600, 0
      %v628 = vsel %vm208, %v601, 0
      %v631 = vsel %vm208, %v602, 0
      %v634 = vsel %vm208, %v603, 0
      %v637 = vsel %vm208, %v604, 0
      %v640 = vsel %vm208, %v605, 0
      %v643 = vsel %vm208, %v606, 0
      %v646 = vsel %vm208, %v607, 0
      %v649 = vsel %vm208, %v608, 0
      %v652 = vsel %vm208, %v609, 0
      %v655 = vsel %vm208, %v610, 0
      %v658 = vsel %vm208, %v611, 0
      %v661 = vsel %vm208, %v612, 0
      %663 = vmatprep.subr.mxu0 0.0
      %664 = vmatpush1.msra.mxu0 %v614
      %665 = vmatprep.subr.mxu0 0.0
      %666 = vmatpush1.msra.mxu0 0.0
      %667 = vmatprep.subr.mxu0 0.0
      %668 = vmatpush1.msra.mxu0 0.0
      %669 = vmatprep.subr.mxu0 0.0
      %670 = vmatpush1.msra.mxu0 0.0
      %671 = vmatprep.subr.mxu0 0.0
      %672 = vmatpush1.msra.mxu0 0.0
      %673 = vmatprep.subr.mxu0 0.0
      %674 = vmatpush1.msra.mxu0 0.0
      %675 = vmatprep.subr.mxu0 0.0
      %676 = vmatpush1.msra.mxu0 0.0
      %677 = vmatprep.subr.mxu0 0.0
      %678 = vmatpush1.msra.mxu0 0.0
      %679 = vmatprep.subr.mxu0 0.0
      %680 = vmatpush1.msra.mxu0 0.0
      %681 = vmatprep.subr.mxu0 0.0
      %682 = vmatpush1.msra.mxu0 0.0
      %683 = vmatprep.subr.mxu0 0.0
      %684 = vmatpush1.msra.mxu0 0.0
      %685 = vmatprep.subr.mxu0 0.0
      %686 = vmatpush1.msra.mxu0 0.0
      %687 = vmatprep.subr.mxu0 0.0
      %688 = vmatpush1.msra.mxu0 0.0
      %689 = vmatprep.subr.mxu0 0.0
      %690 = vmatpush1.msra.mxu0 0.0
      %691 = vmatprep.subr.mxu0 0.0
      %692 = vmatpush1.msra.mxu0 0.0
      %693 = vmatprep.subr.mxu0 0.0
      %694 = vmatpush1.msra.mxu0 0.0
      %695 = vmatprep.subr.mxu0 0.0
      %696 = vmatpush1.msra.mxu0 0.0
      %697 = vmatprep.subr.mxu0 0.0
      %698 = vmatpush1.msra.mxu0 0.0
      %699 = vmatprep.subr.mxu0 0.0
      %700 = vmatpush1.msra.mxu0 0.0
      %701 = vmatprep.subr.mxu0 0.0
      %702 = vmatpush1.msra.mxu0 0.0
      %703 = vmatprep.subr.mxu0 0.0
      %704 = vmatpush1.msra.mxu0 0.0
      %705 = vmatprep.subr.mxu0 0.0
      %706 = vmatpush1.msra.mxu0 0.0
      %707 = vmatprep.subr.mxu0 0.0
      %708 = vmatpush1.msra.mxu0 0.0
      %709 = vmatprep.subr.mxu0 0.0
      %710 = vmatpush1.msra.mxu0 0.0
      %711 = vmatprep.subr.mxu0 0.0
      %712 = vmatpush1.msra.mxu0 0.0
      %713 = vmatprep.subr.mxu0 0.0
      %714 = vmatpush1.msra.mxu0 0.0
      %715 = vmatprep.subr.mxu0 0.0
      %716 = vmatpush1.msra.mxu0 0.0
      %717 = vmatprep.subr.mxu0 0.0
      %718 = vmatpush1.msra.mxu0 0.0
      %719 = vmatprep.subr.mxu0 0.0
      %720 = vmatpush1.msra.mxu0 0.0
      %721 = vmatprep.subr.mxu0 0.0
      %722 = vmatpush1.msra.mxu0 0.0
      %723 = vmatprep.subr.mxu0 0.0
      %724 = vmatpush1.msra.mxu0 0.0
      %725 = vmatprep.subr.mxu0 0.0
      %726 = vmatpush1.msra.mxu0 0.0
      %727 = vmatprep.mubr.f32.mxu0 0.0
      %728 = vmatmul.mubr.f32.gmra.mrb[0].mxu0 %v616
      %v729 = vpop.f32.mrb[0].mxu0
      %v730 = vadd.f32 0.0, %v729
      %v731 = vpop.f32.mrb[0].mxu0
      %732 = vmatprep.mubr.f32.mxu0 0.0
      %733 = vmatmul.mubr.f32.gmra.mrb[0].mxu0 %v619
      %v734 = vpop.f32.mrb[0].mxu0
      %v735 = vadd.f32 0.0, %v734
      %v736 = vpop.f32.mrb[0].mxu0
      %737 = vmatprep.mubr.f32.mxu0 0.0
      %738 = vmatmul.mubr.f32.gmra.mrb[0].mxu0 %v622
      %v739 = vpop.f32.mrb[0].mxu0
      %v740 = vadd.f32 0.0, %v739
      %v741 = vpop.f32.mrb[0].mxu0
      %742 = vmatprep.mubr.f32.mxu0 0.0
      %743 = vmatmul.mubr.f32.gmra.mrb[0].mxu0 %v625
      %v744 = vpop.f32.mrb[0].mxu0
      %v745 = vadd.f32 0.0, %v744
      %v746 = vpop.f32.mrb[0].mxu0
      %747 = vmatprep.mubr.f32.mxu0 0.0
      %748 = vmatmul.mubr.f32.gmra.mrb[0].mxu0 %v628
      %v749 = vpop.f32.mrb[0].mxu0
      %v750 = vadd.f32 0.0, %v749
      %v751 = vpop.f32.mrb[0].mxu0
      %752 = vmatprep.mubr.f32.mxu0 0.0
      %753 = vmatmul.mubr.f32.gmra.mrb[0].mxu0 %v631
      %v754 = vpop.f32.mrb[0].mxu0
      %v755 = vadd.f32 0.0, %v754
      %v756 = vpop.f32.mrb[0].mxu0
      %757 = vmatprep.mubr.f32.mxu0 0.0
      %758 = vmatmul.mubr.f32.gmra.mrb[0].mxu0 %v634
      %v759 = vpop.f32.mrb[0].mxu0
      %v760 = vadd.f32 0.0, %v759
      %v761 = vpop.f32.mrb[0].mxu0
      %762 = vmatprep.mubr.f32.mxu0 0.0
      %763 = vmatmul.mubr.f32.gmra.mrb[0].mxu0 %v637
      %v764 = vpop.f32.mrb[0].mxu0
      %v765 = vadd.f32 0.0, %v764
      %v766 = vpop.f32.mrb[0].mxu0
      %767 = vmatprep.mubr.f32.mxu0 0.0
      %768 = vmatmul.mubr.f32.gmra.mrb[0].mxu0 %v640
      %v769 = vpop.f32.mrb[0].mxu0
      %v770 = vadd.f32 0.0, %v769
      %v771 = vpop.f32.mrb[0].mxu0
      %772 = vmatprep.mubr.f32.mxu0 0.0
      %773 = vmatmul.mubr.f32.gmra.mrb[0].mxu0 %v643
      %v774 = vpop.f32.mrb[0].mxu0
      %v775 = vadd.f32 0.0, %v774
      %v776 = vpop.f32.mrb[0].mxu0
      %777 = vmatprep.mubr.f32.mxu0 0.0
      %778 = vmatmul.mubr.f32.gmra.mrb[0].mxu0 %v646
      %v779 = vpop.f32.mrb[0].mxu0
      %v780 = vadd.f32 0.0, %v779
      %v781 = vpop.f32.mrb[0].mxu0
      %782 = vmatprep.mubr.f32.mxu0 0.0
      %783 = vmatmul.mubr.f32.gmra.mrb[0].mxu0 %v649
      %v784 = vpop.f32.mrb[0].mxu0
      %v785 = vadd.f32 0.0, %v784
      %v786 = vpop.f32.mrb[0].mxu0
      %787 = vmatprep.mubr.f32.mxu0 0.0
      %788 = vmatmul.mubr.f32.gmra.mrb[0].mxu0 %v652
      %v789 = vpop.f32.mrb[0].mxu0
      %v790 = vadd.f32 0.0, %v789
      %v791 = vpop.f32.mrb[0].mxu0
      %792 = vmatprep.mubr.f32.mxu0 0.0
      %793 = vmatmul.mubr.f32.gmra.mrb[0].mxu0 %v655
      %v794 = vpop.f32.mrb[0].mxu0
      %v795 = vadd.f32 0.0, %v794
      %v796 = vpop.f32.mrb[0].mxu0
      %797 = vmatprep.mubr.f32.mxu0 0.0
      %798 = vmatmul.mubr.f32.gmra.mrb[0].mxu0 %v658
      %v799 = vpop.f32.mrb[0].mxu0
      %v800 = vadd.f32 0.0, %v799
      %v801 = vpop.f32.mrb[0].mxu0
      %802 = vmatprep.mubr.f32.mxu0 0.0
      %803 = vmatmul.mubr.f32.gmra.mrb[0].mxu0 %v661
      %v804 = vpop.f32.mrb[0].mxu0
      %v805 = vadd.f32 0.0, %v804
      %v806 = vpop.f32.mrb[0].mxu0
      %807 = vdwg.mxu0
      %v808 = vadd.f32 %v517, %v730
      %v809 = vadd.f32 %v522, %v735
      %v810 = vadd.f32 %v527, %v740
      %v811 = vadd.f32 %v532, %v745
      %v812 = vadd.f32 %v537, %v750
      %v813 = vadd.f32 %v542, %v755
      %v814 = vadd.f32 %v547, %v760
      %v815 = vadd.f32 %v552, %v765
      %v816 = vadd.f32 %v557, %v770
      %v817 = vadd.f32 %v562, %v775
      %v818 = vadd.f32 %v567, %v780
      %v819 = vadd.f32 %v572, %v785
      %v820 = vadd.f32 %v577, %v790
      %v821 = vadd.f32 %v582, %v795
      %v822 = vadd.f32 %v587, %v800
      %v823 = vadd.f32 %v592, %v805
      %v824 = vld [vmem:[%s596] sm:$0xff]
      %v825 = vld [vmem:[%s596 + $0x8] sm:$0xff]
      %v826 = vld [vmem:[%s596 + $0x18] sm:$0xff]
      %v827 = vld [vmem:[%s596 + $0x20] sm:$0xff]
      %v828 = vld [vmem:[%s596 + $0x30] sm:$0xff]
      %v829 = vld [vmem:[%s596 + $0x38] sm:$0xff]
      %v830 = vld [vmem:[%s596 + $0x48] sm:$0xff]
      %v831 = vld [vmem:[%s596 + $0x50] sm:$0xff]
      %v832 = vld [vmem:[%s596 + $0x60] sm:$0xff]
      %v833 = vld [vmem:[%s596 + $0x68] sm:$0xff]
      %v834 = vld [vmem:[%s596 + $0x78] sm:$0xff]
      %v835 = vld [vmem:[%s596 + $0x80] sm:$0xff]
      %v836 = vld [vmem:[%s596 + $0x90] sm:$0xff]
      %v837 = vld [vmem:[%s596 + $0x98] sm:$0xff]
      %v838 = vld [vmem:[%s596 + $0xa8] sm:$0xff]
      %v839 = vld [vmem:[%s596 + $0xb0] sm:$0xff]
      %s840 = scalar_lea.vmem %s1, 24
      %v841 = vld [vmem:[%s840] sm:$0xff]
      %v843 = vsel %vm208, %v824, 0
      %v846 = vsel %vm208, %v825, 0
      %v849 = vsel %vm208, %v826, 0
      %v852 = vsel %vm208, %v827, 0
      %v855 = vsel %vm208, %v828, 0
      %v858 = vsel %vm208, %v829, 0
      %v861 = vsel %vm208, %v830, 0
      %v864 = vsel %vm208, %v831, 0
      %v867 = vsel %vm208, %v832, 0
      %v870 = vsel %vm208, %v833, 0
      %v873 = vsel %vm208, %v834, 0
      %v876 = vsel %vm208, %v835, 0
      %v879 = vsel %vm208, %v836, 0
      %v882 = vsel %vm208, %v837, 0
      %v885 = vsel %vm208, %v838, 0
      %v888 = vsel %vm208, %v839, 0
      %890 = vmatprep.subr.mxu0 0.0
      %891 = vmatpush1.msra.mxu0 %v841
      %892 = vmatprep.subr.mxu0 0.0
      %893 = vmatpush1.msra.mxu0 0.0
      %894 = vmatprep.subr.mxu0 0.0
      %895 = vmatpush1.msra.mxu0 0.0
      %896 = vmatprep.subr.mxu0 0.0
      %897 = vmatpush1.msra.mxu0 0.0
      %898 = vmatprep.subr.mxu0 0.0
      %899 = vmatpush1.msra.mxu0 0.0
      %900 = vmatprep.subr.mxu0 0.0
      %901 = vmatpush1.msra.mxu0 0.0
      %902 = vmatprep.subr.mxu0 0.0
      %903 = vmatpush1.msra.mxu0 0.0
      %904 = vmatprep.subr.mxu0 0.0
      %905 = vmatpush1.msra.mxu0 0.0
      %906 = vmatprep.subr.mxu0 0.0
      %907 = vmatpush1.msra.mxu0 0.0
      %908 = vmatprep.subr.mxu0 0.0
      %909 = vmatpush1.msra.mxu0 0.0
      %910 = vmatprep.subr.mxu0 0.0
      %911 = vmatpush1.msra.mxu0 0.0
      %912 = vmatprep.subr.mxu0 0.0
      %913 = vmatpush1.msra.mxu0 0.0
      %914 = vmatprep.subr.mxu0 0.0
      %915 = vmatpush1.msra.mxu0 0.0
      %916 = vmatprep.subr.mxu0 0.0
      %917 = vmatpush1.msra.mxu0 0.0
      %918 = vmatprep.subr.mxu0 0.0
      %919 = vmatpush1.msra.mxu0 0.0
      %920 = vmatprep.subr.mxu0 0.0
      %921 = vmatpush1.msra.mxu0 0.0
      %922 = vmatprep.subr.mxu0 0.0
      %923 = vmatpush1.msra.mxu0 0.0
      %924 = vmatprep.subr.mxu0 0.0
      %925 = vmatpush1.msra.mxu0 0.0
      %926 = vmatprep.subr.mxu0 0.0
      %927 = vmatpush1.msra.mxu0 0.0
      %928 = vmatprep.subr.mxu0 0.0
      %929 = vmatpush1.msra.mxu0 0.0
      %930 = vmatprep.subr.mxu0 0.0
      %931 = vmatpush1.msra.mxu0 0.0
      %932 = vmatprep.subr.mxu0 0.0
      %933 = vmatpush1.msra.mxu0 0.0
      %934 = vmatprep.subr.mxu0 0.0
      %935 = vmatpush1.msra.mxu0 0.0
      %936 = vmatprep.subr.mxu0 0.0
      %937 = vmatpush1.msra.mxu0 0.0
      %938 = vmatprep.subr.mxu0 0.0
      %939 = vmatpush1.msra.mxu0 0.0
      %940 = vmatprep.subr.mxu0 0.0
      %941 = vmatpush1.msra.mxu0 0.0
      %942 = vmatprep.subr.mxu0 0.0
      %943 = vmatpush1.msra.mxu0 0.0
      %944 = vmatprep.subr.mxu0 0.0
      %945 = vmatpush1.msra.mxu0 0.0
      %946 = vmatprep.subr.mxu0 0.0
      %947 = vmatpush1.msra.mxu0 0.0
      %948 = vmatprep.subr.mxu0 0.0
      %949 = vmatpush1.msra.mxu0 0.0
      %950 = vmatprep.subr.mxu0 0.0
      %951 = vmatpush1.msra.mxu0 0.0
      %952 = vmatprep.subr.mxu0 0.0
      %953 = vmatpush1.msra.mxu0 0.0
      %954 = vmatprep.mubr.f32.mxu0 0.0
      %955 = vmatmul.mubr.f32.gmra.mrb[0].mxu0 %v843
      %v956 = vpop.f32.mrb[0].mxu0
      %v957 = vadd.f32 0.0, %v956
      %v958 = vpop.f32.mrb[0].mxu0
      %959 = vmatprep.mubr.f32.mxu0 0.0
      %960 = vmatmul.mubr.f32.gmra.mrb[0].mxu0 %v846
      %v961 = vpop.f32.mrb[0].mxu0
      %v962 = vadd.f32 0.0, %v961
      %v963 = vpop.f32.mrb[0].mxu0
      %964 = vmatprep.mubr.f32.mxu0 0.0
      %965 = vmatmul.mubr.f32.gmra.mrb[0].mxu0 %v849
      %v966 = vpop.f32.mrb[0].mxu0
      %v967 = vadd.f32 0.0, %v966
      %v968 = vpop.f32.mrb[0].mxu0
      %969 = vmatprep.mubr.f32.mxu0 0.0
      %970 = vmatmul.mubr.f32.gmra.mrb[0].mxu0 %v852
      %v971 = vpop.f32.mrb[0].mxu0
      %v972 = vadd.f32 0.0, %v971
      %v973 = vpop.f32.mrb[0].mxu0
      %974 = vmatprep.mubr.f32.mxu0 0.0
      %975 = vmatmul.mubr.f32.gmra.mrb[0].mxu0 %v855
      %v976 = vpop.f32.mrb[0].mxu0
      %v977 = vadd.f32 0.0, %v976
      %v978 = vpop.f32.mrb[0].mxu0
      %979 = vmatprep.mubr.f32.mxu0 0.0
      %980 = vmatmul.mubr.f32.gmra.mrb[0].mxu0 %v858
      %v981 = vpop.f32.mrb[0].mxu0
      %v982 = vadd.f32 0.0, %v981
      %v983 = vpop.f32.mrb[0].mxu0
      %984 = vmatprep.mubr.f32.mxu0 0.0
      %985 = vmatmul.mubr.f32.gmra.mrb[0].mxu0 %v861
      %v986 = vpop.f32.mrb[0].mxu0
      %v987 = vadd.f32 0.0, %v986
      %v988 = vpop.f32.mrb[0].mxu0
      %989 = vmatprep.mubr.f32.mxu0 0.0
      %990 = vmatmul.mubr.f32.gmra.mrb[0].mxu0 %v864
      %v991 = vpop.f32.mrb[0].mxu0
      %v992 = vadd.f32 0.0, %v991
      %v993 = vpop.f32.mrb[0].mxu0
      %994 = vmatprep.mubr.f32.mxu0 0.0
      %995 = vmatmul.mubr.f32.gmra.mrb[0].mxu0 %v867
      %v996 = vpop.f32.mrb[0].mxu0
      %v997 = vadd.f32 0.0, %v996
      %v998 = vpop.f32.mrb[0].mxu0
      %999 = vmatprep.mubr.f32.mxu0 0.0
      %1000 = vmatmul.mubr.f32.gmra.mrb[0].mxu0 %v870
      %v1001 = vpop.f32.mrb[0].mxu0
      %v1002 = vadd.f32 0.0, %v1001
      %v1003 = vpop.f32.mrb[0].mxu0
      %1004 = vmatprep.mubr.f32.mxu0 0.0
      %1005 = vmatmul.mubr.f32.gmra.mrb[0].mxu0 %v873
      %v1006 = vpop.f32.mrb[0].mxu0
      %v1007 = vadd.f32 0.0, %v1006
      %v1008 = vpop.f32.mrb[0].mxu0
      %1009 = vmatprep.mubr.f32.mxu0 0.0
      %1010 = vmatmul.mubr.f32.gmra.mrb[0].mxu0 %v876
      %v1011 = vpop.f32.mrb[0].mxu0
      %v1012 = vadd.f32 0.0, %v1011
      %v1013 = vpop.f32.mrb[0].mxu0
      %1014 = vmatprep.mubr.f32.mxu0 0.0
      %1015 = vmatmul.mubr.f32.gmra.mrb[0].mxu0 %v879
      %v1016 = vpop.f32.mrb[0].mxu0
      %v1017 = vadd.f32 0.0, %v1016
      %v1018 = vpop.f32.mrb[0].mxu0
      %1019 = vmatprep.mubr.f32.mxu0 0.0
      %1020 = vmatmul.mubr.f32.gmra.mrb[0].mxu0 %v882
      %v1021 = vpop.f32.mrb[0].mxu0
      %v1022 = vadd.f32 0.0, %v1021
      %v1023 = vpop.f32.mrb[0].mxu0
      %1024 = vmatprep.mubr.f32.mxu0 0.0
      %1025 = vmatmul.mubr.f32.gmra.mrb[0].mxu0 %v885
      %v1026 = vpop.f32.mrb[0].mxu0
      %v1027 = vadd.f32 0.0, %v1026
      %v1028 = vpop.f32.mrb[0].mxu0
      %1029 = vmatprep.mubr.f32.mxu0 0.0
      %1030 = vmatmul.mubr.f32.gmra.mrb[0].mxu0 %v888
      %v1031 = vpop.f32.mrb[0].mxu0
      %v1032 = vadd.f32 0.0, %v1031
      %v1033 = vpop.f32.mrb[0].mxu0
      %1034 = vdwg.mxu0
      %v1035 = vadd.f32 %v808, %v957
      %v1036 = vadd.f32 %v809, %v962
      %v1037 = vadd.f32 %v810, %v967
      %v1038 = vadd.f32 %v811, %v972
      %v1039 = vadd.f32 %v812, %v977
      %v1040 = vadd.f32 %v813, %v982
      %v1041 = vadd.f32 %v814, %v987
      %v1042 = vadd.f32 %v815, %v992
      %v1043 = vadd.f32 %v816, %v997
      %v1044 = vadd.f32 %v817, %v1002
      %v1045 = vadd.f32 %v818, %v1007
      %v1046 = vadd.f32 %v819, %v1012
      %v1047 = vadd.f32 %v820, %v1017
      %v1048 = vadd.f32 %v821, %v1022
      %v1049 = vadd.f32 %v822, %v1027
      %v1050 = vadd.f32 %v823, %v1032
      %v1051 = vmax.f32 %v1035, 0.0
      %v1052 = vmax.f32 %v1036, 0.0
      %v1053 = vmax.f32 %v1037, 0.0
      %v1054 = vmax.f32 %v1038, 0.0
      %v1055 = vmax.f32 %v1039, 0.0
      %v1056 = vmax.f32 %v1040, 0.0
      %v1057 = vmax.f32 %v1041, 0.0
      %v1058 = vmax.f32 %v1042, 0.0
      %v1059 = vmax.f32 %v1043, 0.0
      %v1060 = vmax.f32 %v1044, 0.0
      %v1061 = vmax.f32 %v1045, 0.0
      %v1062 = vmax.f32 %v1046, 0.0
      %v1063 = vmax.f32 %v1047, 0.0
      %v1064 = vmax.f32 %v1048, 0.0
      %v1065 = vmax.f32 %v1049, 0.0
      %v1066 = vmax.f32 %v1050, 0.0
      %1067 = vst.msk [vmem:[%s167] sm:$0xff] %vm208, %v1051
      %1068 = vst.msk [vmem:[%s167 + $0x8] sm:$0xff] %vm208, %v1052
      %1069 = vst.msk [vmem:[%s167 + $0x10] sm:$0xff] %vm208, %v1053
      %1070 = vst.msk [vmem:[%s167 + $0x18] sm:$0xff] %vm208, %v1054
      %1071 = vst.msk [vmem:[%s167 + $0x20] sm:$0xff] %vm208, %v1055
      %1072 = vst.msk [vmem:[%s167 + $0x28] sm:$0xff] %vm208, %v1056
      %1073 = vst.msk [vmem:[%s167 + $0x30] sm:$0xff] %vm208, %v1057
      %1074 = vst.msk [vmem:[%s167 + $0x38] sm:$0xff] %vm208, %v1058
      %1075 = vst.msk [vmem:[%s167 + $0x40] sm:$0xff] %vm208, %v1059
      %1076 = vst.msk [vmem:[%s167 + $0x48] sm:$0xff] %vm208, %v1060
      %1077 = vst.msk [vmem:[%s167 + $0x50] sm:$0xff] %vm208, %v1061
      %1078 = vst.msk [vmem:[%s167 + $0x58] sm:$0xff] %vm208, %v1062
      %1079 = vst.msk [vmem:[%s167 + $0x60] sm:$0xff] %vm208, %v1063
      %1080 = vst.msk [vmem:[%s167 + $0x68] sm:$0xff] %vm208, %v1064
      %1081 = vst.msk [vmem:[%s167 + $0x70] sm:$0xff] %vm208, %v1065
      %1082 = vst.msk [vmem:[%s167 + $0x78] sm:$0xff] %vm208, %v1066
      %v1083 = vld [vmem:[%s172 + $0x2] sm:$0xff]
      %v1084 = vld [vmem:[%s172 + $0xa] sm:$0xff]
      %v1085 = vld [vmem:[%s172 + $0x1a] sm:$0xff]
      %v1086 = vld [vmem:[%s172 + $0x22] sm:$0xff]
      %v1087 = vld [vmem:[%s172 + $0x32] sm:$0xff]
      %v1088 = vld [vmem:[%s172 + $0x3a] sm:$0xff]
      %v1089 = vld [vmem:[%s172 + $0x4a] sm:$0xff]
      %v1090 = vld [vmem:[%s172 + $0x52] sm:$0xff]
      %v1091 = vld [vmem:[%s172 + $0x62] sm:$0xff]
      %v1092 = vld [vmem:[%s172 + $0x6a] sm:$0xff]
      %v1093 = vld [vmem:[%s172 + $0x7a] sm:$0xff]
      %v1094 = vld [vmem:[%s172 + $0x82] sm:$0xff]
      %v1095 = vld [vmem:[%s172 + $0x92] sm:$0xff]
      %v1096 = vld [vmem:[%s172 + $0x9a] sm:$0xff]
      %v1097 = vld [vmem:[%s172 + $0xaa] sm:$0xff]
      %v1098 = vld [vmem:[%s172 + $0xb2] sm:$0xff]
      %s1099 = scalar_lea.vmem %s1, 32
      %v1100 = vld [vmem:[%s1099] sm:$0xff]
      %v1101 = vld [vmem:[%s172 + $0x1] sm:$0xff]
      %v1102 = vld [vmem:[%s172 + $0x9] sm:$0xff]
      %v1103 = vld [vmem:[%s172 + $0x19] sm:$0xff]
      %v1104 = vld [vmem:[%s172 + $0x21] sm:$0xff]
      %v1105 = vld [vmem:[%s172 + $0x31] sm:$0xff]
      %v1106 = vld [vmem:[%s172 + $0x39] sm:$0xff]
      %v1107 = vld [vmem:[%s172 + $0x49] sm:$0xff]
      %v1108 = vld [vmem:[%s172 + $0x51] sm:$0xff]
      %v1109 = vld [vmem:[%s172 + $0x61] sm:$0xff]
      %v1110 = vld [vmem:[%s172 + $0x69] sm:$0xff]
      %v1111 = vld [vmem:[%s172 + $0x79] sm:$0xff]
      %v1112 = vld [vmem:[%s172 + $0x81] sm:$0xff]
      %v1113 = vld [vmem:[%s172 + $0x91] sm:$0xff]
      %v1114 = vld [vmem:[%s172 + $0x99] sm:$0xff]
      %v1115 = vld [vmem:[%s172 + $0xa9] sm:$0xff]
      %v1116 = vld [vmem:[%s172 + $0xb1] sm:$0xff]
      %s1117 = scalar_lea.vmem %s1, 40
      %v1118 = vld [vmem:[%s1117] sm:$0xff]
      %v1120 = vsel %vm208, %v1101, 0
      %v1123 = vsel %vm208, %v1102, 0
      %v1126 = vsel %vm208, %v1103, 0
      %v1129 = vsel %vm208, %v1104, 0
      %v1132 = vsel %vm208, %v1105, 0
      %v1135 = vsel %vm208, %v1106, 0
      %v1138 = vsel %vm208, %v1107, 0
      %v1141 = vsel %vm208, %v1108, 0
      %v1144 = vsel %vm208, %v1109, 0
      %v1147 = vsel %vm208, %v1110, 0
      %v1150 = vsel %vm208, %v1111, 0
      %v1153 = vsel %vm208, %v1112, 0
      %v1156 = vsel %vm208, %v1113, 0
      %v1159 = vsel %vm208, %v1114, 0
      %v1162 = vsel %vm208, %v1115, 0
      %v1165 = vsel %vm208, %v1116, 0
      %1167 = vmatprep.subr.mxu0 0.0
      %1168 = vmatpush1.msra.mxu0 %v1118
      %1169 = vmatprep.subr.mxu0 0.0
      %1170 = vmatpush1.msra.mxu0 0.0
      %1171 = vmatprep.subr.mxu0 0.0
      %1172 = vmatpush1.msra.mxu0 0.0
      %1173 = vmatprep.subr.mxu0 0.0
      %1174 = vmatpush1.msra.mxu0 0.0
      %1175 = vmatprep.subr.mxu0 0.0
      %1176 = vmatpush1.msra.mxu0 0.0
      %1177 = vmatprep.subr.mxu0 0.0
      %1178 = vmatpush1.msra.mxu0 0.0
      %1179 = vmatprep.subr.mxu0 0.0
      %1180 = vmatpush1.msra.mxu0 0.0
      %1181 = vmatprep.subr.mxu0 0.0
      %1182 = vmatpush1.msra.mxu0 0.0
      %1183 = vmatprep.subr.mxu0 0.0
      %1184 = vmatpush1.msra.mxu0 0.0
      %1185 = vmatprep.subr.mxu0 0.0
      %1186 = vmatpush1.msra.mxu0 0.0
      %1187 = vmatprep.subr.mxu0 0.0
      %1188 = vmatpush1.msra.mxu0 0.0
      %1189 = vmatprep.subr.mxu0 0.0
      %1190 = vmatpush1.msra.mxu0 0.0
      %1191 = vmatprep.subr.mxu0 0.0
      %1192 = vmatpush1.msra.mxu0 0.0
      %1193 = vmatprep.subr.mxu0 0.0
      %1194 = vmatpush1.msra.mxu0 0.0
      %1195 = vmatprep.subr.mxu0 0.0
      %1196 = vmatpush1.msra.mxu0 0.0
      %1197 = vmatprep.subr.mxu0 0.0
      %1198 = vmatpush1.msra.mxu0 0.0
      %1199 = vmatprep.subr.mxu0 0.0
      %1200 = vmatpush1.msra.mxu0 0.0
      %1201 = vmatprep.subr.mxu0 0.0
      %1202 = vmatpush1.msra.mxu0 0.0
      %1203 = vmatprep.subr.mxu0 0.0
      %1204 = vmatpush1.msra.mxu0 0.0
      %1205 = vmatprep.subr.mxu0 0.0
      %1206 = vmatpush1.msra.mxu0 0.0
      %1207 = vmatprep.subr.mxu0 0.0
      %1208 = vmatpush1.msra.mxu0 0.0
      %1209 = vmatprep.subr.mxu0 0.0
      %1210 = vmatpush1.msra.mxu0 0.0
      %1211 = vmatprep.subr.mxu0 0.0
      %1212 = vmatpush1.msra.mxu0 0.0
      %1213 = vmatprep.subr.mxu0 0.0
      %1214 = vmatpush1.msra.mxu0 0.0
      %1215 = vmatprep.subr.mxu0 0.0
      %1216 = vmatpush1.msra.mxu0 0.0
      %1217 = vmatprep.subr.mxu0 0.0
      %1218 = vmatpush1.msra.mxu0 0.0
      %1219 = vmatprep.subr.mxu0 0.0
      %1220 = vmatpush1.msra.mxu0 0.0
      %1221 = vmatprep.subr.mxu0 0.0
      %1222 = vmatpush1.msra.mxu0 0.0
      %1223 = vmatprep.subr.mxu0 0.0
      %1224 = vmatpush1.msra.mxu0 0.0
      %1225 = vmatprep.subr.mxu0 0.0
      %1226 = vmatpush1.msra.mxu0 0.0
      %1227 = vmatprep.subr.mxu0 0.0
      %1228 = vmatpush1.msra.mxu0 0.0
      %1229 = vmatprep.subr.mxu0 0.0
      %1230 = vmatpush1.msra.mxu0 0.0
      %1231 = vmatprep.mubr.f32.mxu0 0.0
      %1232 = vmatmul.mubr.f32.gmra.mrb[0].mxu0 %v1120
      %v1233 = vpop.f32.mrb[0].mxu0
      %v1234 = vadd.f32 0.0, %v1233
      %v1235 = vpop.f32.mrb[0].mxu0
      %1236 = vmatprep.mubr.f32.mxu0 0.0
      %1237 = vmatmul.mubr.f32.gmra.mrb[0].mxu0 %v1123
      %v1238 = vpop.f32.mrb[0].mxu0
      %v1239 = vadd.f32 0.0, %v1238
      %v1240 = vpop.f32.mrb[0].mxu0
      %1241 = vmatprep.mubr.f32.mxu0 0.0
      %1242 = vmatmul.mubr.f32.gmra.mrb[0].mxu0 %v1126
      %v1243 = vpop.f32.mrb[0].mxu0
      %v1244 = vadd.f32 0.0, %v1243
      %v1245 = vpop.f32.mrb[0].mxu0
      %1246 = vmatprep.mubr.f32.mxu0 0.0
      %1247 = vmatmul.mubr.f32.gmra.mrb[0].mxu0 %v1129
      %v1248 = vpop.f32.mrb[0].mxu0
      %v1249 = vadd.f32 0.0, %v1248
      %v1250 = vpop.f32.mrb[0].mxu0
      %1251 = vmatprep.mubr.f32.mxu0 0.0
      %1252 = vmatmul.mubr.f32.gmra.mrb[0].mxu0 %v1132
      %v1253 = vpop.f32.mrb[0].mxu0
      %v1254 = vadd.f32 0.0, %v1253
      %v1255 = vpop.f32.mrb[0].mxu0
      %1256 = vmatprep.mubr.f32.mxu0 0.0
      %1257 = vmatmul.mubr.f32.gmra.mrb[0].mxu0 %v1135
      %v1258 = vpop.f32.mrb[0].mxu0
      %v1259 = vadd.f32 0.0, %v1258
      %v1260 = vpop.f32.mrb[0].mxu0
      %1261 = vmatprep.mubr.f32.mxu0 0.0
      %1262 = vmatmul.mubr.f32.gmra.mrb[0].mxu0 %v1138
      %v1263 = vpop.f32.mrb[0].mxu0
      %v1264 = vadd.f32 0.0, %v1263
      %v1265 = vpop.f32.mrb[0].mxu0
      %1266 = vmatprep.mubr.f32.mxu0 0.0
      %1267 = vmatmul.mubr.f32.gmra.mrb[0].mxu0 %v1141
      %v1268 = vpop.f32.mrb[0].mxu0
      %v1269 = vadd.f32 0.0, %v1268
      %v1270 = vpop.f32.mrb[0].mxu0
      %1271 = vmatprep.mubr.f32.mxu0 0.0
      %1272 = vmatmul.mubr.f32.gmra.mrb[0].mxu0 %v1144
      %v1273 = vpop.f32.mrb[0].mxu0
      %v1274 = vadd.f32 0.0, %v1273
      %v1275 = vpop.f32.mrb[0].mxu0
      %1276 = vmatprep.mubr.f32.mxu0 0.0
      %1277 = vmatmul.mubr.f32.gmra.mrb[0].mxu0 %v1147
      %v1278 = vpop.f32.mrb[0].mxu0
      %v1279 = vadd.f32 0.0, %v1278
      %v1280 = vpop.f32.mrb[0].mxu0
      %1281 = vmatprep.mubr.f32.mxu0 0.0
      %1282 = vmatmul.mubr.f32.gmra.mrb[0].mxu0 %v1150
      %v1283 = vpop.f32.mrb[0].mxu0
      %v1284 = vadd.f32 0.0, %v1283
      %v1285 = vpop.f32.mrb[0].mxu0
      %1286 = vmatprep.mubr.f32.mxu0 0.0
      %1287 = vmatmul.mubr.f32.gmra.mrb[0].mxu0 %v1153
      %v1288 = vpop.f32.mrb[0].mxu0
      %v1289 = vadd.f32 0.0, %v1288
      %v1290 = vpop.f32.mrb[0].mxu0
      %1291 = vmatprep.mubr.f32.mxu0 0.0
      %1292 = vmatmul.mubr.f32.gmra.mrb[0].mxu0 %v1156
      %v1293 = vpop.f32.mrb[0].mxu0
      %v1294 = vadd.f32 0.0, %v1293
      %v1295 = vpop.f32.mrb[0].mxu0
      %1296 = vmatprep.mubr.f32.mxu0 0.0
      %1297 = vmatmul.mubr.f32.gmra.mrb[0].mxu0 %v1159
      %v1298 = vpop.f32.mrb[0].mxu0
      %v1299 = vadd.f32 0.0, %v1298
      %v1300 = vpop.f32.mrb[0].mxu0
      %1301 = vmatprep.mubr.f32.mxu0 0.0
      %1302 = vmatmul.mubr.f32.gmra.mrb[0].mxu0 %v1162
      %v1303 = vpop.f32.mrb[0].mxu0
      %v1304 = vadd.f32 0.0, %v1303
      %v1305 = vpop.f32.mrb[0].mxu0
      %1306 = vmatprep.mubr.f32.mxu0 0.0
      %1307 = vmatmul.mubr.f32.gmra.mrb[0].mxu0 %v1165
      %v1308 = vpop.f32.mrb[0].mxu0
      %v1309 = vadd.f32 0.0, %v1308
      %v1310 = vpop.f32.mrb[0].mxu0
      %1311 = vdwg.mxu0
      %v1313 = vsel %vm208, %v1083, 0
      %v1316 = vsel %vm208, %v1084, 0
      %v1319 = vsel %vm208, %v1085, 0
      %v1322 = vsel %vm208, %v1086, 0
      %v1325 = vsel %vm208, %v1087, 0
      %v1328 = vsel %vm208, %v1088, 0
      %v1331 = vsel %vm208, %v1089, 0
      %v1334 = vsel %vm208, %v1090, 0
      %v1337 = vsel %vm208, %v1091, 0
      %v1340 = vsel %vm208, %v1092, 0
      %v1343 = vsel %vm208, %v1093, 0
      %v1346 = vsel %vm208, %v1094, 0
      %v1349 = vsel %vm208, %v1095, 0
      %v1352 = vsel %vm208, %v1096, 0
      %v1355 = vsel %vm208, %v1097, 0
      %v1358 = vsel %vm208, %v1098, 0
      %1360 = vmatprep.subr.mxu0 0.0
      %1361 = vmatpush1.msra.mxu0 %v1100
      %1362 = vmatprep.subr.mxu0 0.0
      %1363 = vmatpush1.msra.mxu0 0.0
      %1364 = vmatprep.subr.mxu0 0.0
      %1365 = vmatpush1.msra.mxu0 0.0
      %1366 = vmatprep.subr.mxu0 0.0
      %1367 = vmatpush1.msra.mxu0 0.0
      %1368 = vmatprep.subr.mxu0 0.0
      %1369 = vmatpush1.msra.mxu0 0.0
      %1370 = vmatprep.subr.mxu0 0.0
      %1371 = vmatpush1.msra.mxu0 0.0
      %1372 = vmatprep.subr.mxu0 0.0
      %1373 = vmatpush1.msra.mxu0 0.0
      %1374 = vmatprep.subr.mxu0 0.0
      %1375 = vmatpush1.msra.mxu0 0.0
      %1376 = vmatprep.subr.mxu0 0.0
      %1377 = vmatpush1.msra.mxu0 0.0
      %1378 = vmatprep.subr.mxu0 0.0
      %1379 = vmatpush1.msra.mxu0 0.0
      %1380 = vmatprep.subr.mxu0 0.0
      %1381 = vmatpush1.msra.mxu0 0.0
      %1382 = vmatprep.subr.mxu0 0.0
      %1383 = vmatpush1.msra.mxu0 0.0
      %1384 = vmatprep.subr.mxu0 0.0
      %1385 = vmatpush1.msra.mxu0 0.0
      %1386 = vmatprep.subr.mxu0 0.0
      %1387 = vmatpush1.msra.mxu0 0.0
      %1388 = vmatprep.subr.mxu0 0.0
      %1389 = vmatpush1.msra.mxu0 0.0
      %1390 = vmatprep.subr.mxu0 0.0
      %1391 = vmatpush1.msra.mxu0 0.0
      %1392 = vmatprep.subr.mxu0 0.0
      %1393 = vmatpush1.msra.mxu0 0.0
      %1394 = vmatprep.subr.mxu0 0.0
      %1395 = vmatpush1.msra.mxu0 0.0
      %1396 = vmatprep.subr.mxu0 0.0
      %1397 = vmatpush1.msra.mxu0 0.0
      %1398 = vmatprep.subr.mxu0 0.0
      %1399 = vmatpush1.msra.mxu0 0.0
      %1400 = vmatprep.subr.mxu0 0.0
      %1401 = vmatpush1.msra.mxu0 0.0
      %1402 = vmatprep.subr.mxu0 0.0
      %1403 = vmatpush1.msra.mxu0 0.0
      %1404 = vmatprep.subr.mxu0 0.0
      %1405 = vmatpush1.msra.mxu0 0.0
      %1406 = vmatprep.subr.mxu0 0.0
      %1407 = vmatpush1.msra.mxu0 0.0
      %1408 = vmatprep.subr.mxu0 0.0
      %1409 = vmatpush1.msra.mxu0 0.0
      %1410 = vmatprep.subr.mxu0 0.0
      %1411 = vmatpush1.msra.mxu0 0.0
      %1412 = vmatprep.subr.mxu0 0.0
      %1413 = vmatpush1.msra.mxu0 0.0
      %1414 = vmatprep.subr.mxu0 0.0
      %1415 = vmatpush1.msra.mxu0 0.0
      %1416 = vmatprep.subr.mxu0 0.0
      %1417 = vmatpush1.msra.mxu0 0.0
      %1418 = vmatprep.subr.mxu0 0.0
      %1419 = vmatpush1.msra.mxu0 0.0
      %1420 = vmatprep.subr.mxu0 0.0
      %1421 = vmatpush1.msra.mxu0 0.0
      %1422 = vmatprep.subr.mxu0 0.0
      %1423 = vmatpush1.msra.mxu0 0.0
      %1424 = vmatprep.mubr.f32.mxu0 0.0
      %1425 = vmatmul.mubr.f32.gmra.mrb[0].mxu0 %v1313
      %v1426 = vpop.f32.mrb[0].mxu0
      %v1427 = vadd.f32 %v1234, %v1426
      %v1428 = vpop.f32.mrb[0].mxu0
      %1429 = vmatprep.mubr.f32.mxu0 0.0
      %1430 = vmatmul.mubr.f32.gmra.mrb[0].mxu0 %v1316
      %v1431 = vpop.f32.mrb[0].mxu0
      %v1432 = vadd.f32 %v1239, %v1431
      %v1433 = vpop.f32.mrb[0].mxu0
      %1434 = vmatprep.mubr.f32.mxu0 0.0
      %1435 = vmatmul.mubr.f32.gmra.mrb[0].mxu0 %v1319
      %v1436 = vpop.f32.mrb[0].mxu0
      %v1437 = vadd.f32 %v1244, %v1436
      %v1438 = vpop.f32.mrb[0].mxu0
      %1439 = vmatprep.mubr.f32.mxu0 0.0
      %1440 = vmatmul.mubr.f32.gmra.mrb[0].mxu0 %v1322
      %v1441 = vpop.f32.mrb[0].mxu0
      %v1442 = vadd.f32 %v1249, %v1441
      %v1443 = vpop.f32.mrb[0].mxu0
      %1444 = vmatprep.mubr.f32.mxu0 0.0
      %1445 = vmatmul.mubr.f32.gmra.mrb[0].mxu0 %v1325
      %v1446 = vpop.f32.mrb[0].mxu0
      %v1447 = vadd.f32 %v1254, %v1446
      %v1448 = vpop.f32.mrb[0].mxu0
      %1449 = vmatprep.mubr.f32.mxu0 0.0
      %1450 = vmatmul.mubr.f32.gmra.mrb[0].mxu0 %v1328
      %v1451 = vpop.f32.mrb[0].mxu0
      %v1452 = vadd.f32 %v1259, %v1451
      %v1453 = vpop.f32.mrb[0].mxu0
      %1454 = vmatprep.mubr.f32.mxu0 0.0
      %1455 = vmatmul.mubr.f32.gmra.mrb[0].mxu0 %v1331
      %v1456 = vpop.f32.mrb[0].mxu0
      %v1457 = vadd.f32 %v1264, %v1456
      %v1458 = vpop.f32.mrb[0].mxu0
      %1459 = vmatprep.mubr.f32.mxu0 0.0
      %1460 = vmatmul.mubr.f32.gmra.mrb[0].mxu0 %v1334
      %v1461 = vpop.f32.mrb[0].mxu0
      %v1462 = vadd.f32 %v1269, %v1461
      %v1463 = vpop.f32.mrb[0].mxu0
      %1464 = vmatprep.mubr.f32.mxu0 0.0
      %1465 = vmatmul.mubr.f32.gmra.mrb[0].mxu0 %v1337
      %v1466 = vpop.f32.mrb[0].mxu0
      %v1467 = vadd.f32 %v1274, %v1466
      %v1468 = vpop.f32.mrb[0].mxu0
      %1469 = vmatprep.mubr.f32.mxu0 0.0
      %1470 = vmatmul.mubr.f32.gmra.mrb[0].mxu0 %v1340
      %v1471 = vpop.f32.mrb[0].mxu0
      %v1472 = vadd.f32 %v1279, %v1471
      %v1473 = vpop.f32.mrb[0].mxu0
      %1474 = vmatprep.mubr.f32.mxu0 0.0
      %1475 = vmatmul.mubr.f32.gmra.mrb[0].mxu0 %v1343
      %v1476 = vpop.f32.mrb[0].mxu0
      %v1477 = vadd.f32 %v1284, %v1476
      %v1478 = vpop.f32.mrb[0].mxu0
      %1479 = vmatprep.mubr.f32.mxu0 0.0
      %1480 = vmatmul.mubr.f32.gmra.mrb[0].mxu0 %v1346
      %v1481 = vpop.f32.mrb[0].mxu0
      %v1482 = vadd.f32 %v1289, %v1481
      %v1483 = vpop.f32.mrb[0].mxu0
      %1484 = vmatprep.mubr.f32.mxu0 0.0
      %1485 = vmatmul.mubr.f32.gmra.mrb[0].mxu0 %v1349
      %v1486 = vpop.f32.mrb[0].mxu0
      %v1487 = vadd.f32 %v1294, %v1486
      %v1488 = vpop.f32.mrb[0].mxu0
      %1489 = vmatprep.mubr.f32.mxu0 0.0
      %1490 = vmatmul.mubr.f32.gmra.mrb[0].mxu0 %v1352
      %v1491 = vpop.f32.mrb[0].mxu0
      %v1492 = vadd.f32 %v1299, %v1491
      %v1493 = vpop.f32.mrb[0].mxu0
      %1494 = vmatprep.mubr.f32.mxu0 0.0
      %1495 = vmatmul.mubr.f32.gmra.mrb[0].mxu0 %v1355
      %v1496 = vpop.f32.mrb[0].mxu0
      %v1497 = vadd.f32 %v1304, %v1496
      %v1498 = vpop.f32.mrb[0].mxu0
      %1499 = vmatprep.mubr.f32.mxu0 0.0
      %1500 = vmatmul.mubr.f32.gmra.mrb[0].mxu0 %v1358
      %v1501 = vpop.f32.mrb[0].mxu0
      %v1502 = vadd.f32 %v1309, %v1501
      %v1503 = vpop.f32.mrb[0].mxu0
      %1504 = vdwg.mxu0
      %v1505 = vld [vmem:[%s596 + $0x2] sm:$0xff]
      %v1506 = vld [vmem:[%s596 + $0xa] sm:$0xff]
      %v1507 = vld [vmem:[%s596 + $0x1a] sm:$0xff]
      %v1508 = vld [vmem:[%s596 + $0x22] sm:$0xff]
      %v1509 = vld [vmem:[%s596 + $0x32] sm:$0xff]
      %v1510 = vld [vmem:[%s596 + $0x3a] sm:$0xff]
      %v1511 = vld [vmem:[%s596 + $0x4a] sm:$0xff]
      %v1512 = vld [vmem:[%s596 + $0x52] sm:$0xff]
      %v1513 = vld [vmem:[%s596 + $0x62] sm:$0xff]
      %v1514 = vld [vmem:[%s596 + $0x6a] sm:$0xff]
      %v1515 = vld [vmem:[%s596 + $0x7a] sm:$0xff]
      %v1516 = vld [vmem:[%s596 + $0x82] sm:$0xff]
      %v1517 = vld [vmem:[%s596 + $0x92] sm:$0xff]
      %v1518 = vld [vmem:[%s596 + $0x9a] sm:$0xff]
      %v1519 = vld [vmem:[%s596 + $0xaa] sm:$0xff]
      %v1520 = vld [vmem:[%s596 + $0xb2] sm:$0xff]
      %s1521 = scalar_lea.vmem %s1, 48
      %v1522 = vld [vmem:[%s1521] sm:$0xff]
      %v1524 = vsel %vm208, %v1505, 0
      %v1527 = vsel %vm208, %v1506, 0
      %v1530 = vsel %vm208, %v1507, 0
      %v1533 = vsel %vm208, %v1508, 0
      %v1536 = vsel %vm208, %v1509, 0
      %v1539 = vsel %vm208, %v1510, 0
      %v1542 = vsel %vm208, %v1511, 0
      %v1545 = vsel %vm208, %v1512, 0
      %v1548 = vsel %vm208, %v1513, 0
      %v1551 = vsel %vm208, %v1514, 0
      %v1554 = vsel %vm208, %v1515, 0
      %v1557 = vsel %vm208, %v1516, 0
      %v1560 = vsel %vm208, %v1517, 0
      %v1563 = vsel %vm208, %v1518, 0
      %v1566 = vsel %vm208, %v1519, 0
      %v1569 = vsel %vm208, %v1520, 0
      %1571 = vmatprep.subr.mxu0 0.0
      %1572 = vmatpush1.msra.mxu0 %v1522
      %1573 = vmatprep.subr.mxu0 0.0
      %1574 = vmatpush1.msra.mxu0 0.0
      %1575 = vmatprep.subr.mxu0 0.0
      %1576 = vmatpush1.msra.mxu0 0.0
      %1577 = vmatprep.subr.mxu0 0.0
      %1578 = vmatpush1.msra.mxu0 0.0
      %1579 = vmatprep.subr.mxu0 0.0
      %1580 = vmatpush1.msra.mxu0 0.0
      %1581 = vmatprep.subr.mxu0 0.0
      %1582 = vmatpush1.msra.mxu0 0.0
      %1583 = vmatprep.subr.mxu0 0.0
      %1584 = vmatpush1.msra.mxu0 0.0
      %1585 = vmatprep.subr.mxu0 0.0
      %1586 = vmatpush1.msra.mxu0 0.0
      %1587 = vmatprep.subr.mxu0 0.0
      %1588 = vmatpush1.msra.mxu0 0.0
      %1589 = vmatprep.subr.mxu0 0.0
      %1590 = vmatpush1.msra.mxu0 0.0
      %1591 = vmatprep.subr.mxu0 0.0
      %1592 = vmatpush1.msra.mxu0 0.0
      %1593 = vmatprep.subr.mxu0 0.0
      %1594 = vmatpush1.msra.mxu0 0.0
      %1595 = vmatprep.subr.mxu0 0.0
      %1596 = vmatpush1.msra.mxu0 0.0
      %1597 = vmatprep.subr.mxu0 0.0
      %1598 = vmatpush1.msra.mxu0 0.0
      %1599 = vmatprep.subr.mxu0 0.0
      %1600 = vmatpush1.msra.mxu0 0.0
      %1601 = vmatprep.subr.mxu0 0.0
      %1602 = vmatpush1.msra.mxu0 0.0
      %1603 = vmatprep.subr.mxu0 0.0
      %1604 = vmatpush1.msra.mxu0 0.0
      %1605 = vmatprep.subr.mxu0 0.0
      %1606 = vmatpush1.msra.mxu0 0.0
      %1607 = vmatprep.subr.mxu0 0.0
      %1608 = vmatpush1.msra.mxu0 0.0
      %1609 = vmatprep.subr.mxu0 0.0
      %1610 = vmatpush1.msra.mxu0 0.0
      %1611 = vmatprep.subr.mxu0 0.0
      %1612 = vmatpush1.msra.mxu0 0.0
      %1613 = vmatprep.subr.mxu0 0.0
      %1614 = vmatpush1.msra.mxu0 0.0
      %1615 = vmatprep.subr.mxu0 0.0
      %1616 = vmatpush1.msra.mxu0 0.0
      %1617 = vmatprep.subr.mxu0 0.0
      %1618 = vmatpush1.msra.mxu0 0.0
      %1619 = vmatprep.subr.mxu0 0.0
      %1620 = vmatpush1.msra.mxu0 0.0
      %1621 = vmatprep.subr.mxu0 0.0
      %1622 = vmatpush1.msra.mxu0 0.0
      %1623 = vmatprep.subr.mxu0 0.0
      %1624 = vmatpush1.msra.mxu0 0.0
      %1625 = vmatprep.subr.mxu0 0.0
      %1626 = vmatpush1.msra.mxu0 0.0
      %1627 = vmatprep.subr.mxu0 0.0
      %1628 = vmatpush1.msra.mxu0 0.0
      %1629 = vmatprep.subr.mxu0 0.0
      %1630 = vmatpush1.msra.mxu0 0.0
      %1631 = vmatprep.subr.mxu0 0.0
      %1632 = vmatpush1.msra.mxu0 0.0
      %1633 = vmatprep.subr.mxu0 0.0
      %1634 = vmatpush1.msra.mxu0 0.0
      %1635 = vmatprep.mubr.f32.mxu0 0.0
      %1636 = vmatmul.mubr.f32.gmra.mrb[0].mxu0 %v1524
      %v1637 = vpop.f32.mrb[0].mxu0
      %v1638 = vadd.f32 0.0, %v1637
      %v1639 = vpop.f32.mrb[0].mxu0
      %1640 = vmatprep.mubr.f32.mxu0 0.0
      %1641 = vmatmul.mubr.f32.gmra.mrb[0].mxu0 %v1527
      %v1642 = vpop.f32.mrb[0].mxu0
      %v1643 = vadd.f32 0.0, %v1642
      %v1644 = vpop.f32.mrb[0].mxu0
      %1645 = vmatprep.mubr.f32.mxu0 0.0
      %1646 = vmatmul.mubr.f32.gmra.mrb[0].mxu0 %v1530
      %v1647 = vpop.f32.mrb[0].mxu0
      %v1648 = vadd.f32 0.0, %v1647
      %v1649 = vpop.f32.mrb[0].mxu0
      %1650 = vmatprep.mubr.f32.mxu0 0.0
      %1651 = vmatmul.mubr.f32.gmra.mrb[0].mxu0 %v1533
      %v1652 = vpop.f32.mrb[0].mxu0
      %v1653 = vadd.f32 0.0, %v1652
      %v1654 = vpop.f32.mrb[0].mxu0
      %1655 = vmatprep.mubr.f32.mxu0 0.0
      %1656 = vmatmul.mubr.f32.gmra.mrb[0].mxu0 %v1536
      %v1657 = vpop.f32.mrb[0].mxu0
      %v1658 = vadd.f32 0.0, %v1657
      %v1659 = vpop.f32.mrb[0].mxu0
      %1660 = vmatprep.mubr.f32.mxu0 0.0
      %1661 = vmatmul.mubr.f32.gmra.mrb[0].mxu0 %v1539
      %v1662 = vpop.f32.mrb[0].mxu0
      %v1663 = vadd.f32 0.0, %v1662
      %v1664 = vpop.f32.mrb[0].mxu0
      %1665 = vmatprep.mubr.f32.mxu0 0.0
      %1666 = vmatmul.mubr.f32.gmra.mrb[0].mxu0 %v1542
      %v1667 = vpop.f32.mrb[0].mxu0
      %v1668 = vadd.f32 0.0, %v1667
      %v1669 = vpop.f32.mrb[0].mxu0
      %1670 = vmatprep.mubr.f32.mxu0 0.0
      %1671 = vmatmul.mubr.f32.gmra.mrb[0].mxu0 %v1545
      %v1672 = vpop.f32.mrb[0].mxu0
      %v1673 = vadd.f32 0.0, %v1672
      %v1674 = vpop.f32.mrb[0].mxu0
      %1675 = vmatprep.mubr.f32.mxu0 0.0
      %1676 = vmatmul.mubr.f32.gmra.mrb[0].mxu0 %v1548
      %v1677 = vpop.f32.mrb[0].mxu0
      %v1678 = vadd.f32 0.0, %v1677
      %v1679 = vpop.f32.mrb[0].mxu0
      %1680 = vmatprep.mubr.f32.mxu0 0.0
      %1681 = vmatmul.mubr.f32.gmra.mrb[0].mxu0 %v1551
      %v1682 = vpop.f32.mrb[0].mxu0
      %v1683 = vadd.f32 0.0, %v1682
      %v1684 = vpop.f32.mrb[0].mxu0
      %1685 = vmatprep.mubr.f32.mxu0 0.0
      %1686 = vmatmul.mubr.f32.gmra.mrb[0].mxu0 %v1554
      %v1687 = vpop.f32.mrb[0].mxu0
      %v1688 = vadd.f32 0.0, %v1687
      %v1689 = vpop.f32.mrb[0].mxu0
      %1690 = vmatprep.mubr.f32.mxu0 0.0
      %1691 = vmatmul.mubr.f32.gmra.mrb[0].mxu0 %v1557
      %v1692 = vpop.f32.mrb[0].mxu0
      %v1693 = vadd.f32 0.0, %v1692
      %v1694 = vpop.f32.mrb[0].mxu0
      %1695 = vmatprep.mubr.f32.mxu0 0.0
      %1696 = vmatmul.mubr.f32.gmra.mrb[0].mxu0 %v1560
      %v1697 = vpop.f32.mrb[0].mxu0
      %v1698 = vadd.f32 0.0, %v1697
      %v1699 = vpop.f32.mrb[0].mxu0
      %1700 = vmatprep.mubr.f32.mxu0 0.0
      %1701 = vmatmul.mubr.f32.gmra.mrb[0].mxu0 %v1563
      %v1702 = vpop.f32.mrb[0].mxu0
      %v1703 = vadd.f32 0.0, %v1702
      %v1704 = vpop.f32.mrb[0].mxu0
      %1705 = vmatprep.mubr.f32.mxu0 0.0
      %1706 = vmatmul.mubr.f32.gmra.mrb[0].mxu0 %v1566
      %v1707 = vpop.f32.mrb[0].mxu0
      %v1708 = vadd.f32 0.0, %v1707
      %v1709 = vpop.f32.mrb[0].mxu0
      %1710 = vmatprep.mubr.f32.mxu0 0.0
      %1711 = vmatmul.mubr.f32.gmra.mrb[0].mxu0 %v1569
      %v1712 = vpop.f32.mrb[0].mxu0
      %v1713 = vadd.f32 0.0, %v1712
      %v1714 = vpop.f32.mrb[0].mxu0
      %1715 = vdwg.mxu0
      %v1716 = vadd.f32 %v1427, %v1638
      %v1717 = vadd.f32 %v1432, %v1643
      %v1718 = vadd.f32 %v1437, %v1648
      %v1719 = vadd.f32 %v1442, %v1653
      %v1720 = vadd.f32 %v1447, %v1658
      %v1721 = vadd.f32 %v1452, %v1663
      %v1722 = vadd.f32 %v1457, %v1668
      %v1723 = vadd.f32 %v1462, %v1673
      %v1724 = vadd.f32 %v1467, %v1678
      %v1725 = vadd.f32 %v1472, %v1683
      %v1726 = vadd.f32 %v1477, %v1688
      %v1727 = vadd.f32 %v1482, %v1693
      %v1728 = vadd.f32 %v1487, %v1698
      %v1729 = vadd.f32 %v1492, %v1703
      %v1730 = vadd.f32 %v1497, %v1708
      %v1731 = vadd.f32 %v1502, %v1713
      %v1732 = vld [vmem:[%s596 + $0x1] sm:$0xff]
      %v1733 = vld [vmem:[%s596 + $0x9] sm:$0xff]
      %v1734 = vld [vmem:[%s596 + $0x19] sm:$0xff]
      %v1735 = vld [vmem:[%s596 + $0x21] sm:$0xff]
      %v1736 = vld [vmem:[%s596 + $0x31] sm:$0xff]
      %v1737 = vld [vmem:[%s596 + $0x39] sm:$0xff]
      %v1738 = vld [vmem:[%s596 + $0x49] sm:$0xff]
      %v1739 = vld [vmem:[%s596 + $0x51] sm:$0xff]
      %v1740 = vld [vmem:[%s596 + $0x61] sm:$0xff]
      %v1741 = vld [vmem:[%s596 + $0x69] sm:$0xff]
      %v1742 = vld [vmem:[%s596 + $0x79] sm:$0xff]
      %v1743 = vld [vmem:[%s596 + $0x81] sm:$0xff]
      %v1744 = vld [vmem:[%s596 + $0x91] sm:$0xff]
      %v1745 = vld [vmem:[%s596 + $0x99] sm:$0xff]
      %v1746 = vld [vmem:[%s596 + $0xa9] sm:$0xff]
      %v1747 = vld [vmem:[%s596 + $0xb1] sm:$0xff]
      %s1748 = scalar_lea.vmem %s1, 56
      %v1749 = vld [vmem:[%s1748] sm:$0xff]
      %v1751 = vsel %vm208, %v1732, 0
      %v1754 = vsel %vm208, %v1733, 0
      %v1757 = vsel %vm208, %v1734, 0
      %v1760 = vsel %vm208, %v1735, 0
      %v1763 = vsel %vm208, %v1736, 0
      %v1766 = vsel %vm208, %v1737, 0
      %v1769 = vsel %vm208, %v1738, 0
      %v1772 = vsel %vm208, %v1739, 0
      %v1775 = vsel %vm208, %v1740, 0
      %v1778 = vsel %vm208, %v1741, 0
      %v1781 = vsel %vm208, %v1742, 0
      %v1784 = vsel %vm208, %v1743, 0
      %v1787 = vsel %vm208, %v1744, 0
      %v1790 = vsel %vm208, %v1745, 0
      %v1793 = vsel %vm208, %v1746, 0
      %v1796 = vsel %vm208, %v1747, 0
      %1798 = vmatprep.subr.mxu0 0.0
      %1799 = vmatpush1.msra.mxu0 %v1749
      %1800 = vmatprep.subr.mxu0 0.0
      %1801 = vmatpush1.msra.mxu0 0.0
      %1802 = vmatprep.subr.mxu0 0.0
      %1803 = vmatpush1.msra.mxu0 0.0
      %1804 = vmatprep.subr.mxu0 0.0
      %1805 = vmatpush1.msra.mxu0 0.0
      %1806 = vmatprep.subr.mxu0 0.0
      %1807 = vmatpush1.msra.mxu0 0.0
      %1808 = vmatprep.subr.mxu0 0.0
      %1809 = vmatpush1.msra.mxu0 0.0
      %1810 = vmatprep.subr.mxu0 0.0
      %1811 = vmatpush1.msra.mxu0 0.0
      %1812 = vmatprep.subr.mxu0 0.0
      %1813 = vmatpush1.msra.mxu0 0.0
      %1814 = vmatprep.subr.mxu0 0.0
      %1815 = vmatpush1.msra.mxu0 0.0
      %1816 = vmatprep.subr.mxu0 0.0
      %1817 = vmatpush1.msra.mxu0 0.0
      %1818 = vmatprep.subr.mxu0 0.0
      %1819 = vmatpush1.msra.mxu0 0.0
      %1820 = vmatprep.subr.mxu0 0.0
      %1821 = vmatpush1.msra.mxu0 0.0
      %1822 = vmatprep.subr.mxu0 0.0
      %1823 = vmatpush1.msra.mxu0 0.0
      %1824 = vmatprep.subr.mxu0 0.0
      %1825 = vmatpush1.msra.mxu0 0.0
      %1826 = vmatprep.subr.mxu0 0.0
      %1827 = vmatpush1.msra.mxu0 0.0
      %1828 = vmatprep.subr.mxu0 0.0
      %1829 = vmatpush1.msra.mxu0 0.0
      %1830 = vmatprep.subr.mxu0 0.0
      %1831 = vmatpush1.msra.mxu0 0.0
      %1832 = vmatprep.subr.mxu0 0.0
      %1833 = vmatpush1.msra.mxu0 0.0
      %1834 = vmatprep.subr.mxu0 0.0
      %1835 = vmatpush1.msra.mxu0 0.0
      %1836 = vmatprep.subr.mxu0 0.0
      %1837 = vmatpush1.msra.mxu0 0.0
      %1838 = vmatprep.subr.mxu0 0.0
      %1839 = vmatpush1.msra.mxu0 0.0
      %1840 = vmatprep.subr.mxu0 0.0
      %1841 = vmatpush1.msra.mxu0 0.0
      %1842 = vmatprep.subr.mxu0 0.0
      %1843 = vmatpush1.msra.mxu0 0.0
      %1844 = vmatprep.subr.mxu0 0.0
      %1845 = vmatpush1.msra.mxu0 0.0
      %1846 = vmatprep.subr.mxu0 0.0
      %1847 = vmatpush1.msra.mxu0 0.0
      %1848 = vmatprep.subr.mxu0 0.0
      %1849 = vmatpush1.msra.mxu0 0.0
      %1850 = vmatprep.subr.mxu0 0.0
      %1851 = vmatpush1.msra.mxu0 0.0
      %1852 = vmatprep.subr.mxu0 0.0
      %1853 = vmatpush1.msra.mxu0 0.0
      %1854 = vmatprep.subr.mxu0 0.0
      %1855 = vmatpush1.msra.mxu0 0.0
      %1856 = vmatprep.subr.mxu0 0.0
      %1857 = vmatpush1.msra.mxu0 0.0
      %1858 = vmatprep.subr.mxu0 0.0
      %1859 = vmatpush1.msra.mxu0 0.0
      %1860 = vmatprep.subr.mxu0 0.0
      %1861 = vmatpush1.msra.mxu0 0.0
      %1862 = vmatprep.mubr.f32.mxu0 0.0
      %1863 = vmatmul.mubr.f32.gmra.mrb[0].mxu0 %v1751
      %v1864 = vpop.f32.mrb[0].mxu0
      %v1865 = vadd.f32 0.0, %v1864
      %v1866 = vpop.f32.mrb[0].mxu0
      %1867 = vmatprep.mubr.f32.mxu0 0.0
      %1868 = vmatmul.mubr.f32.gmra.mrb[0].mxu0 %v1754
      %v1869 = vpop.f32.mrb[0].mxu0
      %v1870 = vadd.f32 0.0, %v1869
      %v1871 = vpop.f32.mrb[0].mxu0
      %1872 = vmatprep.mubr.f32.mxu0 0.0
      %1873 = vmatmul.mubr.f32.gmra.mrb[0].mxu0 %v1757
      %v1874 = vpop.f32.mrb[0].mxu0
      %v1875 = vadd.f32 0.0, %v1874
      %v1876 = vpop.f32.mrb[0].mxu0
      %1877 = vmatprep.mubr.f32.mxu0 0.0
      %1878 = vmatmul.mubr.f32.gmra.mrb[0].mxu0 %v1760
      %v1879 = vpop.f32.mrb[0].mxu0
      %v1880 = vadd.f32 0.0, %v1879
      %v1881 = vpop.f32.mrb[0].mxu0
      %1882 = vmatprep.mubr.f32.mxu0 0.0
      %1883 = vmatmul.mubr.f32.gmra.mrb[0].mxu0 %v1763
      %v1884 = vpop.f32.mrb[0].mxu0
      %v1885 = vadd.f32 0.0, %v1884
      %v1886 = vpop.f32.mrb[0].mxu0
      %1887 = vmatprep.mubr.f32.mxu0 0.0
      %1888 = vmatmul.mubr.f32.gmra.mrb[0].mxu0 %v1766
      %v1889 = vpop.f32.mrb[0].mxu0
      %v1890 = vadd.f32 0.0, %v1889
      %v1891 = vpop.f32.mrb[0].mxu0
      %1892 = vmatprep.mubr.f32.mxu0 0.0
      %1893 = vmatmul.mubr.f32.gmra.mrb[0].mxu0 %v1769
      %v1894 = vpop.f32.mrb[0].mxu0
      %v1895 = vadd.f32 0.0, %v1894
      %v1896 = vpop.f32.mrb[0].mxu0
      %1897 = vmatprep.mubr.f32.mxu0 0.0
      %1898 = vmatmul.mubr.f32.gmra.mrb[0].mxu0 %v1772
      %v1899 = vpop.f32.mrb[0].mxu0
      %v1900 = vadd.f32 0.0, %v1899
      %v1901 = vpop.f32.mrb[0].mxu0
      %1902 = vmatprep.mubr.f32.mxu0 0.0
      %1903 = vmatmul.mubr.f32.gmra.mrb[0].mxu0 %v1775
      %v1904 = vpop.f32.mrb[0].mxu0
      %v1905 = vadd.f32 0.0, %v1904
      %v1906 = vpop.f32.mrb[0].mxu0
      %1907 = vmatprep.mubr.f32.mxu0 0.0
      %1908 = vmatmul.mubr.f32.gmra.mrb[0].mxu0 %v1778
      %v1909 = vpop.f32.mrb[0].mxu0
      %v1910 = vadd.f32 0.0, %v1909
      %v1911 = vpop.f32.mrb[0].mxu0
      %1912 = vmatprep.mubr.f32.mxu0 0.0
      %1913 = vmatmul.mubr.f32.gmra.mrb[0].mxu0 %v1781
      %v1914 = vpop.f32.mrb[0].mxu0
      %v1915 = vadd.f32 0.0, %v1914
      %v1916 = vpop.f32.mrb[0].mxu0
      %1917 = vmatprep.mubr.f32.mxu0 0.0
      %1918 = vmatmul.mubr.f32.gmra.mrb[0].mxu0 %v1784
      %v1919 = vpop.f32.mrb[0].mxu0
      %v1920 = vadd.f32 0.0, %v1919
      %v1921 = vpop.f32.mrb[0].mxu0
      %1922 = vmatprep.mubr.f32.mxu0 0.0
      %1923 = vmatmul.mubr.f32.gmra.mrb[0].mxu0 %v1787
      %v1924 = vpop.f32.mrb[0].mxu0
      %v1925 = vadd.f32 0.0, %v1924
      %v1926 = vpop.f32.mrb[0].mxu0
      %1927 = vmatprep.mubr.f32.mxu0 0.0
      %1928 = vmatmul.mubr.f32.gmra.mrb[0].mxu0 %v1790
      %v1929 = vpop.f32.mrb[0].mxu0
      %v1930 = vadd.f32 0.0, %v1929
      %v1931 = vpop.f32.mrb[0].mxu0
      %1932 = vmatprep.mubr.f32.mxu0 0.0
      %1933 = vmatmul.mubr.f32.gmra.mrb[0].mxu0 %v1793
      %v1934 = vpop.f32.mrb[0].mxu0
      %v1935 = vadd.f32 0.0, %v1934
      %v1936 = vpop.f32.mrb[0].mxu0
      %1937 = vmatprep.mubr.f32.mxu0 0.0
      %1938 = vmatmul.mubr.f32.gmra.mrb[0].mxu0 %v1796
      %v1939 = vpop.f32.mrb[0].mxu0
      %v1940 = vadd.f32 0.0, %v1939
      %v1941 = vpop.f32.mrb[0].mxu0
      %1942 = vdwg.mxu0
      %v1943 = vadd.f32 %v1716, %v1865
      %v1944 = vadd.f32 %v1717, %v1870
      %v1945 = vadd.f32 %v1718, %v1875
      %v1946 = vadd.f32 %v1719, %v1880
      %v1947 = vadd.f32 %v1720, %v1885
      %v1948 = vadd.f32 %v1721, %v1890
      %v1949 = vadd.f32 %v1722, %v1895
      %v1950 = vadd.f32 %v1723, %v1900
      %v1951 = vadd.f32 %v1724, %v1905
      %v1952 = vadd.f32 %v1725, %v1910
      %v1953 = vadd.f32 %v1726, %v1915
      %v1954 = vadd.f32 %v1727, %v1920
      %v1955 = vadd.f32 %v1728, %v1925
      %v1956 = vadd.f32 %v1729, %v1930
      %v1957 = vadd.f32 %v1730, %v1935
      %v1958 = vadd.f32 %v1731, %v1940
      %v1959 = vmax.f32 %v1943, 0.0
      %v1960 = vmax.f32 %v1944, 0.0
      %v1961 = vmax.f32 %v1945, 0.0
      %v1962 = vmax.f32 %v1946, 0.0
      %v1963 = vmax.f32 %v1947, 0.0
      %v1964 = vmax.f32 %v1948, 0.0
      %v1965 = vmax.f32 %v1949, 0.0
      %v1966 = vmax.f32 %v1950, 0.0
      %v1967 = vmax.f32 %v1951, 0.0
      %v1968 = vmax.f32 %v1952, 0.0
      %v1969 = vmax.f32 %v1953, 0.0
      %v1970 = vmax.f32 %v1954, 0.0
      %v1971 = vmax.f32 %v1955, 0.0
      %v1972 = vmax.f32 %v1956, 0.0
      %v1973 = vmax.f32 %v1957, 0.0
      %v1974 = vmax.f32 %v1958, 0.0
      %1991 = vrot.lane.b32.xlu0 %v1959, 8
      %v1992 = vpop.permute.xlu0 %1991
      %1993 = vrot.lane.b32.xlu0 %v1960, 8
      %v1994 = vpop.permute.xlu0 %1993
      %1995 = vrot.lane.b32.xlu0 %v1961, 8
      %v1996 = vpop.permute.xlu0 %1995
      %1997 = vrot.lane.b32.xlu0 %v1962, 8
      %v1998 = vpop.permute.xlu0 %1997
      %1999 = vrot.lane.b32.xlu0 %v1963, 8
      %v2000 = vpop.permute.xlu0 %1999
      %2001 = vrot.lane.b32.xlu0 %v1964, 8
      %v2002 = vpop.permute.xlu0 %2001
      %2003 = vrot.lane.b32.xlu0 %v1965, 8
      %v2004 = vpop.permute.xlu0 %2003
      %2005 = vrot.lane.b32.xlu0 %v1966, 8
      %v2006 = vpop.permute.xlu0 %2005
      %2007 = vrot.lane.b32.xlu0 %v1967, 8
      %v2008 = vpop.permute.xlu0 %2007
      %2009 = vrot.lane.b32.xlu0 %v1968, 8
      %v2010 = vpop.permute.xlu0 %2009
      %2011 = vrot.lane.b32.xlu0 %v1969, 8
      %v2012 = vpop.permute.xlu0 %2011
      %2013 = vrot.lane.b32.xlu0 %v1970, 8
      %v2014 = vpop.permute.xlu0 %2013
      %2015 = vrot.lane.b32.xlu0 %v1971, 8
      %v2016 = vpop.permute.xlu0 %2015
      %2017 = vrot.lane.b32.xlu0 %v1972, 8
      %v2018 = vpop.permute.xlu0 %2017
      %2019 = vrot.lane.b32.xlu0 %v1973, 8
      %v2020 = vpop.permute.xlu0 %2019
      %2021 = vrot.lane.b32.xlu0 %v1974, 8
      %v2022 = vpop.permute.xlu0 %2021
      %vm2039 = vcmask 130112
      %2040 = vst.msk [vmem:[%s167] sm:$0xff] %vm2039, %v1992
      %2041 = vst.msk [vmem:[%s167 + $0x8] sm:$0xff] %vm2039, %v1994
      %2042 = vst.msk [vmem:[%s167 + $0x10] sm:$0xff] %vm2039, %v1996
      %2043 = vst.msk [vmem:[%s167 + $0x18] sm:$0xff] %vm2039, %v1998
      %2044 = vst.msk [vmem:[%s167 + $0x20] sm:$0xff] %vm2039, %v2000
      %2045 = vst.msk [vmem:[%s167 + $0x28] sm:$0xff] %vm2039, %v2002
      %2046 = vst.msk [vmem:[%s167 + $0x30] sm:$0xff] %vm2039, %v2004
      %2047 = vst.msk [vmem:[%s167 + $0x38] sm:$0xff] %vm2039, %v2006
      %2048 = vst.msk [vmem:[%s167 + $0x40] sm:$0xff] %vm2039, %v2008
      %2049 = vst.msk [vmem:[%s167 + $0x48] sm:$0xff] %vm2039, %v2010
      %2050 = vst.msk [vmem:[%s167 + $0x50] sm:$0xff] %vm2039, %v2012
      %2051 = vst.msk [vmem:[%s167 + $0x58] sm:$0xff] %vm2039, %v2014
      %2052 = vst.msk [vmem:[%s167 + $0x60] sm:$0xff] %vm2039, %v2016
      %2053 = vst.msk [vmem:[%s167 + $0x68] sm:$0xff] %vm2039, %v2018
      %2054 = vst.msk [vmem:[%s167 + $0x70] sm:$0xff] %vm2039, %v2020
      %2055 = vst.msk [vmem:[%s167 + $0x78] sm:$0xff] %vm2039, %v2022
      %s2056 = sadd.s32 %s169, 2
      %s2057 = smul.u32 %s2056, 24
      %s2058 = scalar_lea.vmem %s157, %s2057
      %v2059 = vld [vmem:[%s2058 + $0x1] sm:$0xff]
      %v2060 = vld [vmem:[%s2058 + $0x9] sm:$0xff]
      %v2061 = vld [vmem:[%s2058 + $0x19] sm:$0xff]
      %v2062 = vld [vmem:[%s2058 + $0x21] sm:$0xff]
      %v2063 = vld [vmem:[%s2058 + $0x31] sm:$0xff]
      %v2064 = vld [vmem:[%s2058 + $0x39] sm:$0xff]
      %v2065 = vld [vmem:[%s2058 + $0x49] sm:$0xff]
      %v2066 = vld [vmem:[%s2058 + $0x51] sm:$0xff]
      %v2067 = vld [vmem:[%s2058 + $0x61] sm:$0xff]
      %v2068 = vld [vmem:[%s2058 + $0x69] sm:$0xff]
      %v2069 = vld [vmem:[%s2058 + $0x79] sm:$0xff]
      %v2070 = vld [vmem:[%s2058 + $0x81] sm:$0xff]
      %v2071 = vld [vmem:[%s2058 + $0x91] sm:$0xff]
      %v2072 = vld [vmem:[%s2058 + $0x99] sm:$0xff]
      %v2073 = vld [vmem:[%s2058 + $0xa9] sm:$0xff]
      %v2074 = vld [vmem:[%s2058 + $0xb1] sm:$0xff]
      %s2075 = scalar_lea.vmem %s1, 64
      %v2076 = vld [vmem:[%s2075] sm:$0xff]
      %v2077 = vld [vmem:[%s2058] sm:$0xff]
      %v2078 = vld [vmem:[%s2058 + $0x8] sm:$0xff]
      %v2079 = vld [vmem:[%s2058 + $0x18] sm:$0xff]
      %v2080 = vld [vmem:[%s2058 + $0x20] sm:$0xff]
      %v2081 = vld [vmem:[%s2058 + $0x30] sm:$0xff]
      %v2082 = vld [vmem:[%s2058 + $0x38] sm:$0xff]
      %v2083 = vld [vmem:[%s2058 + $0x48] sm:$0xff]
      %v2084 = vld [vmem:[%s2058 + $0x50] sm:$0xff]
      %v2085 = vld [vmem:[%s2058 + $0x60] sm:$0xff]
      %v2086 = vld [vmem:[%s2058 + $0x68] sm:$0xff]
      %v2087 = vld [vmem:[%s2058 + $0x78] sm:$0xff]
      %v2088 = vld [vmem:[%s2058 + $0x80] sm:$0xff]
      %v2089 = vld [vmem:[%s2058 + $0x90] sm:$0xff]
      %v2090 = vld [vmem:[%s2058 + $0x98] sm:$0xff]
      %v2091 = vld [vmem:[%s2058 + $0xa8] sm:$0xff]
      %v2092 = vld [vmem:[%s2058 + $0xb0] sm:$0xff]
      %s2093 = scalar_lea.vmem %s1, 72
      %v2094 = vld [vmem:[%s2093] sm:$0xff]
      %v2096 = vsel %vm208, %v2077, 0
      %v2099 = vsel %vm208, %v2078, 0
      %v2102 = vsel %vm208, %v2079, 0
      %v2105 = vsel %vm208, %v2080, 0
      %v2108 = vsel %vm208, %v2081, 0
      %v2111 = vsel %vm208, %v2082, 0
      %v2114 = vsel %vm208, %v2083, 0
      %v2117 = vsel %vm208, %v2084, 0
      %v2120 = vsel %vm208, %v2085, 0
      %v2123 = vsel %vm208, %v2086, 0
      %v2126 = vsel %vm208, %v2087, 0
      %v2129 = vsel %vm208, %v2088, 0
      %v2132 = vsel %vm208, %v2089, 0
      %v2135 = vsel %vm208, %v2090, 0
      %v2138 = vsel %vm208, %v2091, 0
      %v2141 = vsel %vm208, %v2092, 0
      %2143 = vmatprep.subr.mxu0 0.0
      %2144 = vmatpush1.msra.mxu0 %v2094
      %2145 = vmatprep.subr.mxu0 0.0
      %2146 = vmatpush1.msra.mxu0 0.0
      %2147 = vmatprep.subr.mxu0 0.0
      %2148 = vmatpush1.msra.mxu0 0.0
      %2149 = vmatprep.subr.mxu0 0.0
      %2150 = vmatpush1.msra.mxu0 0.0
      %2151 = vmatprep.subr.mxu0 0.0
      %2152 = vmatpush1.msra.mxu0 0.0
      %2153 = vmatprep.subr.mxu0 0.0
      %2154 = vmatpush1.msra.mxu0 0.0
      %2155 = vmatprep.subr.mxu0 0.0
      %2156 = vmatpush1.msra.mxu0 0.0
      %2157 = vmatprep.subr.mxu0 0.0
      %2158 = vmatpush1.msra.mxu0 0.0
      %2159 = vmatprep.subr.mxu0 0.0
      %2160 = vmatpush1.msra.mxu0 0.0
      %2161 = vmatprep.subr.mxu0 0.0
      %2162 = vmatpush1.msra.mxu0 0.0
      %2163 = vmatprep.subr.mxu0 0.0
      %2164 = vmatpush1.msra.mxu0 0.0
      %2165 = vmatprep.subr.mxu0 0.0
      %2166 = vmatpush1.msra.mxu0 0.0
      %2167 = vmatprep.subr.mxu0 0.0
      %2168 = vmatpush1.msra.mxu0 0.0
      %2169 = vmatprep.subr.mxu0 0.0
      %2170 = vmatpush1.msra.mxu0 0.0
      %2171 = vmatprep.subr.mxu0 0.0
      %2172 = vmatpush1.msra.mxu0 0.0
      %2173 = vmatprep.subr.mxu0 0.0
      %2174 = vmatpush1.msra.mxu0 0.0
      %2175 = vmatprep.subr.mxu0 0.0
      %2176 = vmatpush1.msra.mxu0 0.0
      %2177 = vmatprep.subr.mxu0 0.0
      %2178 = vmatpush1.msra.mxu0 0.0
      %2179 = vmatprep.subr.mxu0 0.0
      %2180 = vmatpush1.msra.mxu0 0.0
      %2181 = vmatprep.subr.mxu0 0.0
      %2182 = vmatpush1.msra.mxu0 0.0
      %2183 = vmatprep.subr.mxu0 0.0
      %2184 = vmatpush1.msra.mxu0 0.0
      %2185 = vmatprep.subr.mxu0 0.0
      %2186 = vmatpush1.msra.mxu0 0.0
      %2187 = vmatprep.subr.mxu0 0.0
      %2188 = vmatpush1.msra.mxu0 0.0
      %2189 = vmatprep.subr.mxu0 0.0
      %2190 = vmatpush1.msra.mxu0 0.0
      %2191 = vmatprep.subr.mxu0 0.0
      %2192 = vmatpush1.msra.mxu0 0.0
      %2193 = vmatprep.subr.mxu0 0.0
      %2194 = vmatpush1.msra.mxu0 0.0
      %2195 = vmatprep.subr.mxu0 0.0
      %2196 = vmatpush1.msra.mxu0 0.0
      %2197 = vmatprep.subr.mxu0 0.0
      %2198 = vmatpush1.msra.mxu0 0.0
      %2199 = vmatprep.subr.mxu0 0.0
      %2200 = vmatpush1.msra.mxu0 0.0
      %2201 = vmatprep.subr.mxu0 0.0
      %2202 = vmatpush1.msra.mxu0 0.0
      %2203 = vmatprep.subr.mxu0 0.0
      %2204 = vmatpush1.msra.mxu0 0.0
      %2205 = vmatprep.subr.mxu0 0.0
      %2206 = vmatpush1.msra.mxu0 0.0
      %2207 = vmatprep.mubr.f32.mxu0 0.0
      %2208 = vmatmul.mubr.f32.gmra.mrb[0].mxu0 %v2096
      %v2209 = vpop.f32.mrb[0].mxu0
      %v2210 = vadd.f32 0.0, %v2209
      %v2211 = vpop.f32.mrb[0].mxu0
      %2212 = vmatprep.mubr.f32.mxu0 0.0
      %2213 = vmatmul.mubr.f32.gmra.mrb[0].mxu0 %v2099
      %v2214 = vpop.f32.mrb[0].mxu0
      %v2215 = vadd.f32 0.0, %v2214
      %v2216 = vpop.f32.mrb[0].mxu0
      %2217 = vmatprep.mubr.f32.mxu0 0.0
      %2218 = vmatmul.mubr.f32.gmra.mrb[0].mxu0 %v2102
      %v2219 = vpop.f32.mrb[0].mxu0
      %v2220 = vadd.f32 0.0, %v2219
      %v2221 = vpop.f32.mrb[0].mxu0
      %2222 = vmatprep.mubr.f32.mxu0 0.0
      %2223 = vmatmul.mubr.f32.gmra.mrb[0].mxu0 %v2105
      %v2224 = vpop.f32.mrb[0].mxu0
      %v2225 = vadd.f32 0.0, %v2224
      %v2226 = vpop.f32.mrb[0].mxu0
      %2227 = vmatprep.mubr.f32.mxu0 0.0
      %2228 = vmatmul.mubr.f32.gmra.mrb[0].mxu0 %v2108
      %v2229 = vpop.f32.mrb[0].mxu0
      %v2230 = vadd.f32 0.0, %v2229
      %v2231 = vpop.f32.mrb[0].mxu0
      %2232 = vmatprep.mubr.f32.mxu0 0.0
      %2233 = vmatmul.mubr.f32.gmra.mrb[0].mxu0 %v2111
      %v2234 = vpop.f32.mrb[0].mxu0
      %v2235 = vadd.f32 0.0, %v2234
      %v2236 = vpop.f32.mrb[0].mxu0
      %2237 = vmatprep.mubr.f32.mxu0 0.0
      %2238 = vmatmul.mubr.f32.gmra.mrb[0].mxu0 %v2114
      %v2239 = vpop.f32.mrb[0].mxu0
      %v2240 = vadd.f32 0.0, %v2239
      %v2241 = vpop.f32.mrb[0].mxu0
      %2242 = vmatprep.mubr.f32.mxu0 0.0
      %2243 = vmatmul.mubr.f32.gmra.mrb[0].mxu0 %v2117
      %v2244 = vpop.f32.mrb[0].mxu0
      %v2245 = vadd.f32 0.0, %v2244
      %v2246 = vpop.f32.mrb[0].mxu0
      %2247 = vmatprep.mubr.f32.mxu0 0.0
      %2248 = vmatmul.mubr.f32.gmra.mrb[0].mxu0 %v2120
      %v2249 = vpop.f32.mrb[0].mxu0
      %v2250 = vadd.f32 0.0, %v2249
      %v2251 = vpop.f32.mrb[0].mxu0
      %2252 = vmatprep.mubr.f32.mxu0 0.0
      %2253 = vmatmul.mubr.f32.gmra.mrb[0].mxu0 %v2123
      %v2254 = vpop.f32.mrb[0].mxu0
      %v2255 = vadd.f32 0.0, %v2254
      %v2256 = vpop.f32.mrb[0].mxu0
      %2257 = vmatprep.mubr.f32.mxu0 0.0
      %2258 = vmatmul.mubr.f32.gmra.mrb[0].mxu0 %v2126
      %v2259 = vpop.f32.mrb[0].mxu0
      %v2260 = vadd.f32 0.0, %v2259
      %v2261 = vpop.f32.mrb[0].mxu0
      %2262 = vmatprep.mubr.f32.mxu0 0.0
      %2263 = vmatmul.mubr.f32.gmra.mrb[0].mxu0 %v2129
      %v2264 = vpop.f32.mrb[0].mxu0
      %v2265 = vadd.f32 0.0, %v2264
      %v2266 = vpop.f32.mrb[0].mxu0
      %2267 = vmatprep.mubr.f32.mxu0 0.0
      %2268 = vmatmul.mubr.f32.gmra.mrb[0].mxu0 %v2132
      %v2269 = vpop.f32.mrb[0].mxu0
      %v2270 = vadd.f32 0.0, %v2269
      %v2271 = vpop.f32.mrb[0].mxu0
      %2272 = vmatprep.mubr.f32.mxu0 0.0
      %2273 = vmatmul.mubr.f32.gmra.mrb[0].mxu0 %v2135
      %v2274 = vpop.f32.mrb[0].mxu0
      %v2275 = vadd.f32 0.0, %v2274
      %v2276 = vpop.f32.mrb[0].mxu0
      %2277 = vmatprep.mubr.f32.mxu0 0.0
      %2278 = vmatmul.mubr.f32.gmra.mrb[0].mxu0 %v2138
      %v2279 = vpop.f32.mrb[0].mxu0
      %v2280 = vadd.f32 0.0, %v2279
      %v2281 = vpop.f32.mrb[0].mxu0
      %2282 = vmatprep.mubr.f32.mxu0 0.0
      %2283 = vmatmul.mubr.f32.gmra.mrb[0].mxu0 %v2141
      %v2284 = vpop.f32.mrb[0].mxu0
      %v2285 = vadd.f32 0.0, %v2284
      %v2286 = vpop.f32.mrb[0].mxu0
      %2287 = vdwg.mxu0
      %v2289 = vsel %vm208, %v2059, 0
      %v2292 = vsel %vm208, %v2060, 0
      %v2295 = vsel %vm208, %v2061, 0
      %v2298 = vsel %vm208, %v2062, 0
      %v2301 = vsel %vm208, %v2063, 0
      %v2304 = vsel %vm208, %v2064, 0
      %v2307 = vsel %vm208, %v2065, 0
      %v2310 = vsel %vm208, %v2066, 0
      %v2313 = vsel %vm208, %v2067, 0
      %v2316 = vsel %vm208, %v2068, 0
      %v2319 = vsel %vm208, %v2069, 0
      %v2322 = vsel %vm208, %v2070, 0
      %v2325 = vsel %vm208, %v2071, 0
      %v2328 = vsel %vm208, %v2072, 0
      %v2331 = vsel %vm208, %v2073, 0
      %v2334 = vsel %vm208, %v2074, 0
      %2336 = vmatprep.subr.mxu0 0.0
      %2337 = vmatpush1.msra.mxu0 %v2076
      %2338 = vmatprep.subr.mxu0 0.0
      %2339 = vmatpush1.msra.mxu0 0.0
      %2340 = vmatprep.subr.mxu0 0.0
      %2341 = vmatpush1.msra.mxu0 0.0
      %2342 = vmatprep.subr.mxu0 0.0
      %2343 = vmatpush1.msra.mxu0 0.0
      %2344 = vmatprep.subr.mxu0 0.0
      %2345 = vmatpush1.msra.mxu0 0.0
      %2346 = vmatprep.subr.mxu0 0.0
      %2347 = vmatpush1.msra.mxu0 0.0
      %2348 = vmatprep.subr.mxu0 0.0
      %2349 = vmatpush1.msra.mxu0 0.0
      %2350 = vmatprep.subr.mxu0 0.0
      %2351 = vmatpush1.msra.mxu0 0.0
      %2352 = vmatprep.subr.mxu0 0.0
      %2353 = vmatpush1.msra.mxu0 0.0
      %2354 = vmatprep.subr.mxu0 0.0
      %2355 = vmatpush1.msra.mxu0 0.0
      %2356 = vmatprep.subr.mxu0 0.0
      %2357 = vmatpush1.msra.mxu0 0.0
      %2358 = vmatprep.subr.mxu0 0.0
      %2359 = vmatpush1.msra.mxu0 0.0
      %2360 = vmatprep.subr.mxu0 0.0
      %2361 = vmatpush1.msra.mxu0 0.0
      %2362 = vmatprep.subr.mxu0 0.0
      %2363 = vmatpush1.msra.mxu0 0.0
      %2364 = vmatprep.subr.mxu0 0.0
      %2365 = vmatpush1.msra.mxu0 0.0
      %2366 = vmatprep.subr.mxu0 0.0
      %2367 = vmatpush1.msra.mxu0 0.0
      %2368 = vmatprep.subr.mxu0 0.0
      %2369 = vmatpush1.msra.mxu0 0.0
      %2370 = vmatprep.subr.mxu0 0.0
      %2371 = vmatpush1.msra.mxu0 0.0
      %2372 = vmatprep.subr.mxu0 0.0
      %2373 = vmatpush1.msra.mxu0 0.0
      %2374 = vmatprep.subr.mxu0 0.0
      %2375 = vmatpush1.msra.mxu0 0.0
      %2376 = vmatprep.subr.mxu0 0.0
      %2377 = vmatpush1.msra.mxu0 0.0
      %2378 = vmatprep.subr.mxu0 0.0
      %2379 = vmatpush1.msra.mxu0 0.0
      %2380 = vmatprep.subr.mxu0 0.0
      %2381 = vmatpush1.msra.mxu0 0.0
      %2382 = vmatprep.subr.mxu0 0.0
      %2383 = vmatpush1.msra.mxu0 0.0
      %2384 = vmatprep.subr.mxu0 0.0
      %2385 = vmatpush1.msra.mxu0 0.0
      %2386 = vmatprep.subr.mxu0 0.0
      %2387 = vmatpush1.msra.mxu0 0.0
      %2388 = vmatprep.subr.mxu0 0.0
      %2389 = vmatpush1.msra.mxu0 0.0
      %2390 = vmatprep.subr.mxu0 0.0
      %2391 = vmatpush1.msra.mxu0 0.0
      %2392 = vmatprep.subr.mxu0 0.0
      %2393 = vmatpush1.msra.mxu0 0.0
      %2394 = vmatprep.subr.mxu0 0.0
      %2395 = vmatpush1.msra.mxu0 0.0
      %2396 = vmatprep.subr.mxu0 0.0
      %2397 = vmatpush1.msra.mxu0 0.0
      %2398 = vmatprep.subr.mxu0 0.0
      %2399 = vmatpush1.msra.mxu0 0.0
      %2400 = vmatprep.mubr.f32.mxu0 0.0
      %2401 = vmatmul.mubr.f32.gmra.mrb[0].mxu0 %v2289
      %v2402 = vpop.f32.mrb[0].mxu0
      %v2403 = vadd.f32 %v2210, %v2402
      %v2404 = vpop.f32.mrb[0].mxu0
      %2405 = vmatprep.mubr.f32.mxu0 0.0
      %2406 = vmatmul.mubr.f32.gmra.mrb[0].mxu0 %v2292
      %v2407 = vpop.f32.mrb[0].mxu0
      %v2408 = vadd.f32 %v2215, %v2407
      %v2409 = vpop.f32.mrb[0].mxu0
      %2410 = vmatprep.mubr.f32.mxu0 0.0
      %2411 = vmatmul.mubr.f32.gmra.mrb[0].mxu0 %v2295
      %v2412 = vpop.f32.mrb[0].mxu0
      %v2413 = vadd.f32 %v2220, %v2412
      %v2414 = vpop.f32.mrb[0].mxu0
      %2415 = vmatprep.mubr.f32.mxu0 0.0
      %2416 = vmatmul.mubr.f32.gmra.mrb[0].mxu0 %v2298
      %v2417 = vpop.f32.mrb[0].mxu0
      %v2418 = vadd.f32 %v2225, %v2417
      %v2419 = vpop.f32.mrb[0].mxu0
      %2420 = vmatprep.mubr.f32.mxu0 0.0
      %2421 = vmatmul.mubr.f32.gmra.mrb[0].mxu0 %v2301
      %v2422 = vpop.f32.mrb[0].mxu0
      %v2423 = vadd.f32 %v2230, %v2422
      %v2424 = vpop.f32.mrb[0].mxu0
      %2425 = vmatprep.mubr.f32.mxu0 0.0
      %2426 = vmatmul.mubr.f32.gmra.mrb[0].mxu0 %v2304
      %v2427 = vpop.f32.mrb[0].mxu0
      %v2428 = vadd.f32 %v2235, %v2427
      %v2429 = vpop.f32.mrb[0].mxu0
      %2430 = vmatprep.mubr.f32.mxu0 0.0
      %2431 = vmatmul.mubr.f32.gmra.mrb[0].mxu0 %v2307
      %v2432 = vpop.f32.mrb[0].mxu0
      %v2433 = vadd.f32 %v2240, %v2432
      %v2434 = vpop.f32.mrb[0].mxu0
      %2435 = vmatprep.mubr.f32.mxu0 0.0
      %2436 = vmatmul.mubr.f32.gmra.mrb[0].mxu0 %v2310
      %v2437 = vpop.f32.mrb[0].mxu0
      %v2438 = vadd.f32 %v2245, %v2437
      %v2439 = vpop.f32.mrb[0].mxu0
      %2440 = vmatprep.mubr.f32.mxu0 0.0
      %2441 = vmatmul.mubr.f32.gmra.mrb[0].mxu0 %v2313
      %v2442 = vpop.f32.mrb[0].mxu0
      %v2443 = vadd.f32 %v2250, %v2442
      %v2444 = vpop.f32.mrb[0].mxu0
      %2445 = vmatprep.mubr.f32.mxu0 0.0
      %2446 = vmatmul.mubr.f32.gmra.mrb[0].mxu0 %v2316
      %v2447 = vpop.f32.mrb[0].mxu0
      %v2448 = vadd.f32 %v2255, %v2447
      %v2449 = vpop.f32.mrb[0].mxu0
      %2450 = vmatprep.mubr.f32.mxu0 0.0
      %2451 = vmatmul.mubr.f32.gmra.mrb[0].mxu0 %v2319
      %v2452 = vpop.f32.mrb[0].mxu0
      %v2453 = vadd.f32 %v2260, %v2452
      %v2454 = vpop.f32.mrb[0].mxu0
      %2455 = vmatprep.mubr.f32.mxu0 0.0
      %2456 = vmatmul.mubr.f32.gmra.mrb[0].mxu0 %v2322
      %v2457 = vpop.f32.mrb[0].mxu0
      %v2458 = vadd.f32 %v2265, %v2457
      %v2459 = vpop.f32.mrb[0].mxu0
      %2460 = vmatprep.mubr.f32.mxu0 0.0
      %2461 = vmatmul.mubr.f32.gmra.mrb[0].mxu0 %v2325
      %v2462 = vpop.f32.mrb[0].mxu0
      %v2463 = vadd.f32 %v2270, %v2462
      %v2464 = vpop.f32.mrb[0].mxu0
      %2465 = vmatprep.mubr.f32.mxu0 0.0
      %2466 = vmatmul.mubr.f32.gmra.mrb[0].mxu0 %v2328
      %v2467 = vpop.f32.mrb[0].mxu0
      %v2468 = vadd.f32 %v2275, %v2467
      %v2469 = vpop.f32.mrb[0].mxu0
      %2470 = vmatprep.mubr.f32.mxu0 0.0
      %2471 = vmatmul.mubr.f32.gmra.mrb[0].mxu0 %v2331
      %v2472 = vpop.f32.mrb[0].mxu0
      %v2473 = vadd.f32 %v2280, %v2472
      %v2474 = vpop.f32.mrb[0].mxu0
      %2475 = vmatprep.mubr.f32.mxu0 0.0
      %2476 = vmatmul.mubr.f32.gmra.mrb[0].mxu0 %v2334
      %v2477 = vpop.f32.mrb[0].mxu0
      %v2478 = vadd.f32 %v2285, %v2477
      %v2479 = vpop.f32.mrb[0].mxu0
      %2480 = vdwg.mxu0
      %v2481 = vld [vmem:[%s172 + $0x1] sm:$0xff]
      %v2482 = vld [vmem:[%s172 + $0x9] sm:$0xff]
      %v2483 = vld [vmem:[%s172 + $0x19] sm:$0xff]
      %v2484 = vld [vmem:[%s172 + $0x21] sm:$0xff]
      %v2485 = vld [vmem:[%s172 + $0x31] sm:$0xff]
      %v2486 = vld [vmem:[%s172 + $0x39] sm:$0xff]
      %v2487 = vld [vmem:[%s172 + $0x49] sm:$0xff]
      %v2488 = vld [vmem:[%s172 + $0x51] sm:$0xff]
      %v2489 = vld [vmem:[%s172 + $0x61] sm:$0xff]
      %v2490 = vld [vmem:[%s172 + $0x69] sm:$0xff]
      %v2491 = vld [vmem:[%s172 + $0x79] sm:$0xff]
      %v2492 = vld [vmem:[%s172 + $0x81] sm:$0xff]
      %v2493 = vld [vmem:[%s172 + $0x91] sm:$0xff]
      %v2494 = vld [vmem:[%s172 + $0x99] sm:$0xff]
      %v2495 = vld [vmem:[%s172 + $0xa9] sm:$0xff]
      %v2496 = vld [vmem:[%s172 + $0xb1] sm:$0xff]
      %s2497 = scalar_lea.vmem %s1, 80
      %v2498 = vld [vmem:[%s2497] sm:$0xff]
      %v2500 = vsel %vm208, %v2481, 0
      %v2503 = vsel %vm208, %v2482, 0
      %v2506 = vsel %vm208, %v2483, 0
      %v2509 = vsel %vm208, %v2484, 0
      %v2512 = vsel %vm208, %v2485, 0
      %v2515 = vsel %vm208, %v2486, 0
      %v2518 = vsel %vm208, %v2487, 0
      %v2521 = vsel %vm208, %v2488, 0
      %v2524 = vsel %vm208, %v2489, 0
      %v2527 = vsel %vm208, %v2490, 0
      %v2530 = vsel %vm208, %v2491, 0
      %v2533 = vsel %vm208, %v2492, 0
      %v2536 = vsel %vm208, %v2493, 0
      %v2539 = vsel %vm208, %v2494, 0
      %v2542 = vsel %vm208, %v2495, 0
      %v2545 = vsel %vm208, %v2496, 0
      %2547 = vmatprep.subr.mxu0 0.0
      %2548 = vmatpush1.msra.mxu0 %v2498
      %2549 = vmatprep.subr.mxu0 0.0
      %2550 = vmatpush1.msra.mxu0 0.0
      %2551 = vmatprep.subr.mxu0 0.0
      %2552 = vmatpush1.msra.mxu0 0.0
      %2553 = vmatprep.subr.mxu0 0.0
      %2554 = vmatpush1.msra.mxu0 0.0
      %2555 = vmatprep.subr.mxu0 0.0
      %2556 = vmatpush1.msra.mxu0 0.0
      %2557 = vmatprep.subr.mxu0 0.0
      %2558 = vmatpush1.msra.mxu0 0.0
      %2559 = vmatprep.subr.mxu0 0.0
      %2560 = vmatpush1.msra.mxu0 0.0
      %2561 = vmatprep.subr.mxu0 0.0
      %2562 = vmatpush1.msra.mxu0 0.0
      %2563 = vmatprep.subr.mxu0 0.0
      %2564 = vmatpush1.msra.mxu0 0.0
      %2565 = vmatprep.subr.mxu0 0.0
      %2566 = vmatpush1.msra.mxu0 0.0
      %2567 = vmatprep.subr.mxu0 0.0
      %2568 = vmatpush1.msra.mxu0 0.0
      %2569 = vmatprep.subr.mxu0 0.0
      %2570 = vmatpush1.msra.mxu0 0.0
      %2571 = vmatprep.subr.mxu0 0.0
      %2572 = vmatpush1.msra.mxu0 0.0
      %2573 = vmatprep.subr.mxu0 0.0
      %2574 = vmatpush1.msra.mxu0 0.0
      %2575 = vmatprep.subr.mxu0 0.0
      %2576 = vmatpush1.msra.mxu0 0.0
      %2577 = vmatprep.subr.mxu0 0.0
      %2578 = vmatpush1.msra.mxu0 0.0
      %2579 = vmatprep.subr.mxu0 0.0
      %2580 = vmatpush1.msra.mxu0 0.0
      %2581 = vmatprep.subr.mxu0 0.0
      %2582 = vmatpush1.msra.mxu0 0.0
      %2583 = vmatprep.subr.mxu0 0.0
      %2584 = vmatpush1.msra.mxu0 0.0
      %2585 = vmatprep.subr.mxu0 0.0
      %2586 = vmatpush1.msra.mxu0 0.0
      %2587 = vmatprep.subr.mxu0 0.0
      %2588 = vmatpush1.msra.mxu0 0.0
      %2589 = vmatprep.subr.mxu0 0.0
      %2590 = vmatpush1.msra.mxu0 0.0
      %2591 = vmatprep.subr.mxu0 0.0
      %2592 = vmatpush1.msra.mxu0 0.0
      %2593 = vmatprep.subr.mxu0 0.0
      %2594 = vmatpush1.msra.mxu0 0.0
      %2595 = vmatprep.subr.mxu0 0.0
      %2596 = vmatpush1.msra.mxu0 0.0
      %2597 = vmatprep.subr.mxu0 0.0
      %2598 = vmatpush1.msra.mxu0 0.0
      %2599 = vmatprep.subr.mxu0 0.0
      %2600 = vmatpush1.msra.mxu0 0.0
      %2601 = vmatprep.subr.mxu0 0.0
      %2602 = vmatpush1.msra.mxu0 0.0
      %2603 = vmatprep.subr.mxu0 0.0
      %2604 = vmatpush1.msra.mxu0 0.0
      %2605 = vmatprep.subr.mxu0 0.0
      %2606 = vmatpush1.msra.mxu0 0.0
      %2607 = vmatprep.subr.mxu0 0.0
      %2608 = vmatpush1.msra.mxu0 0.0
      %2609 = vmatprep.subr.mxu0 0.0
      %2610 = vmatpush1.msra.mxu0 0.0
      %2611 = vmatprep.mubr.f32.mxu0 0.0
      %2612 = vmatmul.mubr.f32.gmra.mrb[0].mxu0 %v2500
      %v2613 = vpop.f32.mrb[0].mxu0
      %v2614 = vadd.f32 0.0, %v2613
      %v2615 = vpop.f32.mrb[0].mxu0
      %2616 = vmatprep.mubr.f32.mxu0 0.0
      %2617 = vmatmul.mubr.f32.gmra.mrb[0].mxu0 %v2503
      %v2618 = vpop.f32.mrb[0].mxu0
      %v2619 = vadd.f32 0.0, %v2618
      %v2620 = vpop.f32.mrb[0].mxu0
      %2621 = vmatprep.mubr.f32.mxu0 0.0
      %2622 = vmatmul.mubr.f32.gmra.mrb[0].mxu0 %v2506
      %v2623 = vpop.f32.mrb[0].mxu0
      %v2624 = vadd.f32 0.0, %v2623
      %v2625 = vpop.f32.mrb[0].mxu0
      %2626 = vmatprep.mubr.f32.mxu0 0.0
      %2627 = vmatmul.mubr.f32.gmra.mrb[0].mxu0 %v2509
      %v2628 = vpop.f32.mrb[0].mxu0
      %v2629 = vadd.f32 0.0, %v2628
      %v2630 = vpop.f32.mrb[0].mxu0
      %2631 = vmatprep.mubr.f32.mxu0 0.0
      %2632 = vmatmul.mubr.f32.gmra.mrb[0].mxu0 %v2512
      %v2633 = vpop.f32.mrb[0].mxu0
      %v2634 = vadd.f32 0.0, %v2633
      %v2635 = vpop.f32.mrb[0].mxu0
      %2636 = vmatprep.mubr.f32.mxu0 0.0
      %2637 = vmatmul.mubr.f32.gmra.mrb[0].mxu0 %v2515
      %v2638 = vpop.f32.mrb[0].mxu0
      %v2639 = vadd.f32 0.0, %v2638
      %v2640 = vpop.f32.mrb[0].mxu0
      %2641 = vmatprep.mubr.f32.mxu0 0.0
      %2642 = vmatmul.mubr.f32.gmra.mrb[0].mxu0 %v2518
      %v2643 = vpop.f32.mrb[0].mxu0
      %v2644 = vadd.f32 0.0, %v2643
      %v2645 = vpop.f32.mrb[0].mxu0
      %2646 = vmatprep.mubr.f32.mxu0 0.0
      %2647 = vmatmul.mubr.f32.gmra.mrb[0].mxu0 %v2521
      %v2648 = vpop.f32.mrb[0].mxu0
      %v2649 = vadd.f32 0.0, %v2648
      %v2650 = vpop.f32.mrb[0].mxu0
      %2651 = vmatprep.mubr.f32.mxu0 0.0
      %2652 = vmatmul.mubr.f32.gmra.mrb[0].mxu0 %v2524
      %v2653 = vpop.f32.mrb[0].mxu0
      %v2654 = vadd.f32 0.0, %v2653
      %v2655 = vpop.f32.mrb[0].mxu0
      %2656 = vmatprep.mubr.f32.mxu0 0.0
      %2657 = vmatmul.mubr.f32.gmra.mrb[0].mxu0 %v2527
      %v2658 = vpop.f32.mrb[0].mxu0
      %v2659 = vadd.f32 0.0, %v2658
      %v2660 = vpop.f32.mrb[0].mxu0
      %2661 = vmatprep.mubr.f32.mxu0 0.0
      %2662 = vmatmul.mubr.f32.gmra.mrb[0].mxu0 %v2530
      %v2663 = vpop.f32.mrb[0].mxu0
      %v2664 = vadd.f32 0.0, %v2663
      %v2665 = vpop.f32.mrb[0].mxu0
      %2666 = vmatprep.mubr.f32.mxu0 0.0
      %2667 = vmatmul.mubr.f32.gmra.mrb[0].mxu0 %v2533
      %v2668 = vpop.f32.mrb[0].mxu0
      %v2669 = vadd.f32 0.0, %v2668
      %v2670 = vpop.f32.mrb[0].mxu0
      %2671 = vmatprep.mubr.f32.mxu0 0.0
      %2672 = vmatmul.mubr.f32.gmra.mrb[0].mxu0 %v2536
      %v2673 = vpop.f32.mrb[0].mxu0
      %v2674 = vadd.f32 0.0, %v2673
      %v2675 = vpop.f32.mrb[0].mxu0
      %2676 = vmatprep.mubr.f32.mxu0 0.0
      %2677 = vmatmul.mubr.f32.gmra.mrb[0].mxu0 %v2539
      %v2678 = vpop.f32.mrb[0].mxu0
      %v2679 = vadd.f32 0.0, %v2678
      %v2680 = vpop.f32.mrb[0].mxu0
      %2681 = vmatprep.mubr.f32.mxu0 0.0
      %2682 = vmatmul.mubr.f32.gmra.mrb[0].mxu0 %v2542
      %v2683 = vpop.f32.mrb[0].mxu0
      %v2684 = vadd.f32 0.0, %v2683
      %v2685 = vpop.f32.mrb[0].mxu0
      %2686 = vmatprep.mubr.f32.mxu0 0.0
      %2687 = vmatmul.mubr.f32.gmra.mrb[0].mxu0 %v2545
      %v2688 = vpop.f32.mrb[0].mxu0
      %v2689 = vadd.f32 0.0, %v2688
      %v2690 = vpop.f32.mrb[0].mxu0
      %2691 = vdwg.mxu0
      %v2692 = vadd.f32 %v2403, %v2614
      %v2693 = vadd.f32 %v2408, %v2619
      %v2694 = vadd.f32 %v2413, %v2624
      %v2695 = vadd.f32 %v2418, %v2629
      %v2696 = vadd.f32 %v2423, %v2634
      %v2697 = vadd.f32 %v2428, %v2639
      %v2698 = vadd.f32 %v2433, %v2644
      %v2699 = vadd.f32 %v2438, %v2649
      %v2700 = vadd.f32 %v2443, %v2654
      %v2701 = vadd.f32 %v2448, %v2659
      %v2702 = vadd.f32 %v2453, %v2664
      %v2703 = vadd.f32 %v2458, %v2669
      %v2704 = vadd.f32 %v2463, %v2674
      %v2705 = vadd.f32 %v2468, %v2679
      %v2706 = vadd.f32 %v2473, %v2684
      %v2707 = vadd.f32 %v2478, %v2689
      %v2708 = vld [vmem:[%s172] sm:$0xff]
      %v2709 = vld [vmem:[%s172 + $0x8] sm:$0xff]
      %v2710 = vld [vmem:[%s172 + $0x18] sm:$0xff]
      %v2711 = vld [vmem:[%s172 + $0x20] sm:$0xff]
      %v2712 = vld [vmem:[%s172 + $0x30] sm:$0xff]
      %v2713 = vld [vmem:[%s172 + $0x38] sm:$0xff]
      %v2714 = vld [vmem:[%s172 + $0x48] sm:$0xff]
      %v2715 = vld [vmem:[%s172 + $0x50] sm:$0xff]
      %v2716 = vld [vmem:[%s172 + $0x60] sm:$0xff]
      %v2717 = vld [vmem:[%s172 + $0x68] sm:$0xff]
      %v2718 = vld [vmem:[%s172 + $0x78] sm:$0xff]
      %v2719 = vld [vmem:[%s172 + $0x80] sm:$0xff]
      %v2720 = vld [vmem:[%s172 + $0x90] sm:$0xff]
      %v2721 = vld [vmem:[%s172 + $0x98] sm:$0xff]
      %v2722 = vld [vmem:[%s172 + $0xa8] sm:$0xff]
      %v2723 = vld [vmem:[%s172 + $0xb0] sm:$0xff]
      %s2724 = scalar_lea.vmem %s1, 88
      %v2725 = vld [vmem:[%s2724] sm:$0xff]
      %v2727 = vsel %vm208, %v2708, 0
      %v2730 = vsel %vm208, %v2709, 0
      %v2733 = vsel %vm208, %v2710, 0
      %v2736 = vsel %vm208, %v2711, 0
      %v2739 = vsel %vm208, %v2712, 0
      %v2742 = vsel %vm208, %v2713, 0
      %v2745 = vsel %vm208, %v2714, 0
      %v2748 = vsel %vm208, %v2715, 0
      %v2751 = vsel %vm208, %v2716, 0
      %v2754 = vsel %vm208, %v2717, 0
      %v2757 = vsel %vm208, %v2718, 0
      %v2760 = vsel %vm208, %v2719, 0
      %v2763 = vsel %vm208, %v2720, 0
      %v2766 = vsel %vm208, %v2721, 0
      %v2769 = vsel %vm208, %v2722, 0
      %v2772 = vsel %vm208, %v2723, 0
      %2774 = vmatprep.subr.mxu0 0.0
      %2775 = vmatpush1.msra.mxu0 %v2725
      %2776 = vmatprep.subr.mxu0 0.0
      %2777 = vmatpush1.msra.mxu0 0.0
      %2778 = vmatprep.subr.mxu0 0.0
      %2779 = vmatpush1.msra.mxu0 0.0
      %2780 = vmatprep.subr.mxu0 0.0
      %2781 = vmatpush1.msra.mxu0 0.0
      %2782 = vmatprep.subr.mxu0 0.0
      %2783 = vmatpush1.msra.mxu0 0.0
      %2784 = vmatprep.subr.mxu0 0.0
      %2785 = vmatpush1.msra.mxu0 0.0
      %2786 = vmatprep.subr.mxu0 0.0
      %2787 = vmatpush1.msra.mxu0 0.0
      %2788 = vmatprep.subr.mxu0 0.0
      %2789 = vmatpush1.msra.mxu0 0.0
      %2790 = vmatprep.subr.mxu0 0.0
      %2791 = vmatpush1.msra.mxu0 0.0
      %2792 = vmatprep.subr.mxu0 0.0
      %2793 = vmatpush1.msra.mxu0 0.0
      %2794 = vmatprep.subr.mxu0 0.0
      %2795 = vmatpush1.msra.mxu0 0.0
      %2796 = vmatprep.subr.mxu0 0.0
      %2797 = vmatpush1.msra.mxu0 0.0
      %2798 = vmatprep.subr.mxu0 0.0
      %2799 = vmatpush1.msra.mxu0 0.0
      %2800 = vmatprep.subr.mxu0 0.0
      %2801 = vmatpush1.msra.mxu0 0.0
      %2802 = vmatprep.subr.mxu0 0.0
      %2803 = vmatpush1.msra.mxu0 0.0
      %2804 = vmatprep.subr.mxu0 0.0
      %2805 = vmatpush1.msra.mxu0 0.0
      %2806 = vmatprep.subr.mxu0 0.0
      %2807 = vmatpush1.msra.mxu0 0.0
      %2808 = vmatprep.subr.mxu0 0.0
      %2809 = vmatpush1.msra.mxu0 0.0
      %2810 = vmatprep.subr.mxu0 0.0
      %2811 = vmatpush1.msra.mxu0 0.0
      %2812 = vmatprep.subr.mxu0 0.0
      %2813 = vmatpush1.msra.mxu0 0.0
      %2814 = vmatprep.subr.mxu0 0.0
      %2815 = vmatpush1.msra.mxu0 0.0
      %2816 = vmatprep.subr.mxu0 0.0
      %2817 = vmatpush1.msra.mxu0 0.0
      %2818 = vmatprep.subr.mxu0 0.0
      %2819 = vmatpush1.msra.mxu0 0.0
      %2820 = vmatprep.subr.mxu0 0.0
      %2821 = vmatpush1.msra.mxu0 0.0
      %2822 = vmatprep.subr.mxu0 0.0
      %2823 = vmatpush1.msra.mxu0 0.0
      %2824 = vmatprep.subr.mxu0 0.0
      %2825 = vmatpush1.msra.mxu0 0.0
      %2826 = vmatprep.subr.mxu0 0.0
      %2827 = vmatpush1.msra.mxu0 0.0
      %2828 = vmatprep.subr.mxu0 0.0
      %2829 = vmatpush1.msra.mxu0 0.0
      %2830 = vmatprep.subr.mxu0 0.0
      %2831 = vmatpush1.msra.mxu0 0.0
      %2832 = vmatprep.subr.mxu0 0.0
      %2833 = vmatpush1.msra.mxu0 0.0
      %2834 = vmatprep.subr.mxu0 0.0
      %2835 = vmatpush1.msra.mxu0 0.0
      %2836 = vmatprep.subr.mxu0 0.0
      %2837 = vmatpush1.msra.mxu0 0.0
      %2838 = vmatprep.mubr.f32.mxu0 0.0
      %2839 = vmatmul.mubr.f32.gmra.mrb[0].mxu0 %v2727
      %v2840 = vpop.f32.mrb[0].mxu0
      %v2841 = vadd.f32 0.0, %v2840
      %v2842 = vpop.f32.mrb[0].mxu0
      %2843 = vmatprep.mubr.f32.mxu0 0.0
      %2844 = vmatmul.mubr.f32.gmra.mrb[0].mxu0 %v2730
      %v2845 = vpop.f32.mrb[0].mxu0
      %v2846 = vadd.f32 0.0, %v2845
      %v2847 = vpop.f32.mrb[0].mxu0
      %2848 = vmatprep.mubr.f32.mxu0 0.0
      %2849 = vmatmul.mubr.f32.gmra.mrb[0].mxu0 %v2733
      %v2850 = vpop.f32.mrb[0].mxu0
      %v2851 = vadd.f32 0.0, %v2850
      %v2852 = vpop.f32.mrb[0].mxu0
      %2853 = vmatprep.mubr.f32.mxu0 0.0
      %2854 = vmatmul.mubr.f32.gmra.mrb[0].mxu0 %v2736
      %v2855 = vpop.f32.mrb[0].mxu0
      %v2856 = vadd.f32 0.0, %v2855
      %v2857 = vpop.f32.mrb[0].mxu0
      %2858 = vmatprep.mubr.f32.mxu0 0.0
      %2859 = vmatmul.mubr.f32.gmra.mrb[0].mxu0 %v2739
      %v2860 = vpop.f32.mrb[0].mxu0
      %v2861 = vadd.f32 0.0, %v2860
      %v2862 = vpop.f32.mrb[0].mxu0
      %2863 = vmatprep.mubr.f32.mxu0 0.0
      %2864 = vmatmul.mubr.f32.gmra.mrb[0].mxu0 %v2742
      %v2865 = vpop.f32.mrb[0].mxu0
      %v2866 = vadd.f32 0.0, %v2865
      %v2867 = vpop.f32.mrb[0].mxu0
      %2868 = vmatprep.mubr.f32.mxu0 0.0
      %2869 = vmatmul.mubr.f32.gmra.mrb[0].mxu0 %v2745
      %v2870 = vpop.f32.mrb[0].mxu0
      %v2871 = vadd.f32 0.0, %v2870
      %v2872 = vpop.f32.mrb[0].mxu0
      %2873 = vmatprep.mubr.f32.mxu0 0.0
      %2874 = vmatmul.mubr.f32.gmra.mrb[0].mxu0 %v2748
      %v2875 = vpop.f32.mrb[0].mxu0
      %v2876 = vadd.f32 0.0, %v2875
      %v2877 = vpop.f32.mrb[0].mxu0
      %2878 = vmatprep.mubr.f32.mxu0 0.0
      %2879 = vmatmul.mubr.f32.gmra.mrb[0].mxu0 %v2751
      %v2880 = vpop.f32.mrb[0].mxu0
      %v2881 = vadd.f32 0.0, %v2880
      %v2882 = vpop.f32.mrb[0].mxu0
      %2883 = vmatprep.mubr.f32.mxu0 0.0
      %2884 = vmatmul.mubr.f32.gmra.mrb[0].mxu0 %v2754
      %v2885 = vpop.f32.mrb[0].mxu0
      %v2886 = vadd.f32 0.0, %v2885
      %v2887 = vpop.f32.mrb[0].mxu0
      %2888 = vmatprep.mubr.f32.mxu0 0.0
      %2889 = vmatmul.mubr.f32.gmra.mrb[0].mxu0 %v2757
      %v2890 = vpop.f32.mrb[0].mxu0
      %v2891 = vadd.f32 0.0, %v2890
      %v2892 = vpop.f32.mrb[0].mxu0
      %2893 = vmatprep.mubr.f32.mxu0 0.0
      %2894 = vmatmul.mubr.f32.gmra.mrb[0].mxu0 %v2760
      %v2895 = vpop.f32.mrb[0].mxu0
      %v2896 = vadd.f32 0.0, %v2895
      %v2897 = vpop.f32.mrb[0].mxu0
      %2898 = vmatprep.mubr.f32.mxu0 0.0
      %2899 = vmatmul.mubr.f32.gmra.mrb[0].mxu0 %v2763
      %v2900 = vpop.f32.mrb[0].mxu0
      %v2901 = vadd.f32 0.0, %v2900
      %v2902 = vpop.f32.mrb[0].mxu0
      %2903 = vmatprep.mubr.f32.mxu0 0.0
      %2904 = vmatmul.mubr.f32.gmra.mrb[0].mxu0 %v2766
      %v2905 = vpop.f32.mrb[0].mxu0
      %v2906 = vadd.f32 0.0, %v2905
      %v2907 = vpop.f32.mrb[0].mxu0
      %2908 = vmatprep.mubr.f32.mxu0 0.0
      %2909 = vmatmul.mubr.f32.gmra.mrb[0].mxu0 %v2769
      %v2910 = vpop.f32.mrb[0].mxu0
      %v2911 = vadd.f32 0.0, %v2910
      %v2912 = vpop.f32.mrb[0].mxu0
      %2913 = vmatprep.mubr.f32.mxu0 0.0
      %2914 = vmatmul.mubr.f32.gmra.mrb[0].mxu0 %v2772
      %v2915 = vpop.f32.mrb[0].mxu0
      %v2916 = vadd.f32 0.0, %v2915
      %v2917 = vpop.f32.mrb[0].mxu0
      %2918 = vdwg.mxu0
      %v2919 = vadd.f32 %v2692, %v2841
      %v2920 = vadd.f32 %v2693, %v2846
      %v2921 = vadd.f32 %v2694, %v2851
      %v2922 = vadd.f32 %v2695, %v2856
      %v2923 = vadd.f32 %v2696, %v2861
      %v2924 = vadd.f32 %v2697, %v2866
      %v2925 = vadd.f32 %v2698, %v2871
      %v2926 = vadd.f32 %v2699, %v2876
      %v2927 = vadd.f32 %v2700, %v2881
      %v2928 = vadd.f32 %v2701, %v2886
      %v2929 = vadd.f32 %v2702, %v2891
      %v2930 = vadd.f32 %v2703, %v2896
      %v2931 = vadd.f32 %v2704, %v2901
      %v2932 = vadd.f32 %v2705, %v2906
      %v2933 = vadd.f32 %v2706, %v2911
      %v2934 = vadd.f32 %v2707, %v2916
      %v2935 = vmax.f32 %v2919, 0.0
      %v2936 = vmax.f32 %v2920, 0.0
      %v2937 = vmax.f32 %v2921, 0.0
      %v2938 = vmax.f32 %v2922, 0.0
      %v2939 = vmax.f32 %v2923, 0.0
      %v2940 = vmax.f32 %v2924, 0.0
      %v2941 = vmax.f32 %v2925, 0.0
      %v2942 = vmax.f32 %v2926, 0.0
      %v2943 = vmax.f32 %v2927, 0.0
      %v2944 = vmax.f32 %v2928, 0.0
      %v2945 = vmax.f32 %v2929, 0.0
      %v2946 = vmax.f32 %v2930, 0.0
      %v2947 = vmax.f32 %v2931, 0.0
      %v2948 = vmax.f32 %v2932, 0.0
      %v2949 = vmax.f32 %v2933, 0.0
      %v2950 = vmax.f32 %v2934, 0.0
      %2967 = vrot.lane.b32.xlu0 %v2935, 16
      %v2968 = vpop.permute.xlu0 %2967
      %2969 = vrot.lane.b32.xlu0 %v2936, 16
      %v2970 = vpop.permute.xlu0 %2969
      %2971 = vrot.lane.b32.xlu0 %v2937, 16
      %v2972 = vpop.permute.xlu0 %2971
      %2973 = vrot.lane.b32.xlu0 %v2938, 16
      %v2974 = vpop.permute.xlu0 %2973
      %2975 = vrot.lane.b32.xlu0 %v2939, 16
      %v2976 = vpop.permute.xlu0 %2975
      %2977 = vrot.lane.b32.xlu0 %v2940, 16
      %v2978 = vpop.permute.xlu0 %2977
      %2979 = vrot.lane.b32.xlu0 %v2941, 16
      %v2980 = vpop.permute.xlu0 %2979
      %2981 = vrot.lane.b32.xlu0 %v2942, 16
      %v2982 = vpop.permute.xlu0 %2981
      %2983 = vrot.lane.b32.xlu0 %v2943, 16
      %v2984 = vpop.permute.xlu0 %2983
      %2985 = vrot.lane.b32.xlu0 %v2944, 16
      %v2986 = vpop.permute.xlu0 %2985
      %2987 = vrot.lane.b32.xlu0 %v2945, 16
      %v2988 = vpop.permute.xlu0 %2987
      %2989 = vrot.lane.b32.xlu0 %v2946, 16
      %v2990 = vpop.permute.xlu0 %2989
      %2991 = vrot.lane.b32.xlu0 %v2947, 16
      %v2992 = vpop.permute.xlu0 %2991
      %2993 = vrot.lane.b32.xlu0 %v2948, 16
      %v2994 = vpop.permute.xlu0 %2993
      %2995 = vrot.lane.b32.xlu0 %v2949, 16
      %v2996 = vpop.permute.xlu0 %2995
      %2997 = vrot.lane.b32.xlu0 %v2950, 16
      %v2998 = vpop.permute.xlu0 %2997
      %vm3015 = vcmask 195712
      %3016 = vst.msk [vmem:[%s167] sm:$0xff] %vm3015, %v2968
      %3017 = vst.msk [vmem:[%s167 + $0x8] sm:$0xff] %vm3015, %v2970
      %3018 = vst.msk [vmem:[%s167 + $0x10] sm:$0xff] %vm3015, %v2972
      %3019 = vst.msk [vmem:[%s167 + $0x18] sm:$0xff] %vm3015, %v2974
      %3020 = vst.msk [vmem:[%s167 + $0x20] sm:$0xff] %vm3015, %v2976
      %3021 = vst.msk [vmem:[%s167 + $0x28] sm:$0xff] %vm3015, %v2978
      %3022 = vst.msk [vmem:[%s167 + $0x30] sm:$0xff] %vm3015, %v2980
      %3023 = vst.msk [vmem:[%s167 + $0x38] sm:$0xff] %vm3015, %v2982
      %3024 = vst.msk [vmem:[%s167 + $0x40] sm:$0xff] %vm3015, %v2984
      %3025 = vst.msk [vmem:[%s167 + $0x48] sm:$0xff] %vm3015, %v2986
      %3026 = vst.msk [vmem:[%s167 + $0x50] sm:$0xff] %vm3015, %v2988
      %3027 = vst.msk [vmem:[%s167 + $0x58] sm:$0xff] %vm3015, %v2990
      %3028 = vst.msk [vmem:[%s167 + $0x60] sm:$0xff] %vm3015, %v2992
      %3029 = vst.msk [vmem:[%s167 + $0x68] sm:$0xff] %vm3015, %v2994
      %3030 = vst.msk [vmem:[%s167 + $0x70] sm:$0xff] %vm3015, %v2996
      %3031 = vst.msk [vmem:[%s167 + $0x78] sm:$0xff] %vm3015, %v2998
      %v3032 = vld [vmem:[%s2058 + $0x2] sm:$0xff]
      %v3033 = vld [vmem:[%s2058 + $0xa] sm:$0xff]
      %v3034 = vld [vmem:[%s2058 + $0x1a] sm:$0xff]
      %v3035 = vld [vmem:[%s2058 + $0x22] sm:$0xff]
      %v3036 = vld [vmem:[%s2058 + $0x32] sm:$0xff]
      %v3037 = vld [vmem:[%s2058 + $0x3a] sm:$0xff]
      %v3038 = vld [vmem:[%s2058 + $0x4a] sm:$0xff]
      %v3039 = vld [vmem:[%s2058 + $0x52] sm:$0xff]
      %v3040 = vld [vmem:[%s2058 + $0x62] sm:$0xff]
      %v3041 = vld [vmem:[%s2058 + $0x6a] sm:$0xff]
      %v3042 = vld [vmem:[%s2058 + $0x7a] sm:$0xff]
      %v3043 = vld [vmem:[%s2058 + $0x82] sm:$0xff]
      %v3044 = vld [vmem:[%s2058 + $0x92] sm:$0xff]
      %v3045 = vld [vmem:[%s2058 + $0x9a] sm:$0xff]
      %v3046 = vld [vmem:[%s2058 + $0xaa] sm:$0xff]
      %v3047 = vld [vmem:[%s2058 + $0xb2] sm:$0xff]
      %s3048 = scalar_lea.vmem %s1, 96
      %v3049 = vld [vmem:[%s3048] sm:$0xff]
      %v3050 = vld [vmem:[%s2058 + $0x1] sm:$0xff]
      %v3051 = vld [vmem:[%s2058 + $0x9] sm:$0xff]
      %v3052 = vld [vmem:[%s2058 + $0x19] sm:$0xff]
      %v3053 = vld [vmem:[%s2058 + $0x21] sm:$0xff]
      %v3054 = vld [vmem:[%s2058 + $0x31] sm:$0xff]
      %v3055 = vld [vmem:[%s2058 + $0x39] sm:$0xff]
      %v3056 = vld [vmem:[%s2058 + $0x49] sm:$0xff]
      %v3057 = vld [vmem:[%s2058 + $0x51] sm:$0xff]
      %v3058 = vld [vmem:[%s2058 + $0x61] sm:$0xff]
      %v3059 = vld [vmem:[%s2058 + $0x69] sm:$0xff]
      %v3060 = vld [vmem:[%s2058 + $0x79] sm:$0xff]
      %v3061 = vld [vmem:[%s2058 + $0x81] sm:$0xff]
      %v3062 = vld [vmem:[%s2058 + $0x91] sm:$0xff]
      %v3063 = vld [vmem:[%s2058 + $0x99] sm:$0xff]
      %v3064 = vld [vmem:[%s2058 + $0xa9] sm:$0xff]
      %v3065 = vld [vmem:[%s2058 + $0xb1] sm:$0xff]
      %s3066 = scalar_lea.vmem %s1, 104
      %v3067 = vld [vmem:[%s3066] sm:$0xff]
      %v3069 = vsel %vm208, %v3050, 0
      %v3072 = vsel %vm208, %v3051, 0
      %v3075 = vsel %vm208, %v3052, 0
      %v3078 = vsel %vm208, %v3053, 0
      %v3081 = vsel %vm208, %v3054, 0
      %v3084 = vsel %vm208, %v3055, 0
      %v3087 = vsel %vm208, %v3056, 0
      %v3090 = vsel %vm208, %v3057, 0
      %v3093 = vsel %vm208, %v3058, 0
      %v3096 = vsel %vm208, %v3059, 0
      %v3099 = vsel %vm208, %v3060, 0
      %v3102 = vsel %vm208, %v3061, 0
      %v3105 = vsel %vm208, %v3062, 0
      %v3108 = vsel %vm208, %v3063, 0
      %v3111 = vsel %vm208, %v3064, 0
      %v3114 = vsel %vm208, %v3065, 0
      %3116 = vmatprep.subr.mxu0 0.0
      %3117 = vmatpush1.msra.mxu0 %v3067
      %3118 = vmatprep.subr.mxu0 0.0
      %3119 = vmatpush1.msra.mxu0 0.0
      %3120 = vmatprep.subr.mxu0 0.0
      %3121 = vmatpush1.msra.mxu0 0.0
      %3122 = vmatprep.subr.mxu0 0.0
      %3123 = vmatpush1.msra.mxu0 0.0
      %3124 = vmatprep.subr.mxu0 0.0
      %3125 = vmatpush1.msra.mxu0 0.0
      %3126 = vmatprep.subr.mxu0 0.0
      %3127 = vmatpush1.msra.mxu0 0.0
      %3128 = vmatprep.subr.mxu0 0.0
      %3129 = vmatpush1.msra.mxu0 0.0
      %3130 = vmatprep.subr.mxu0 0.0
      %3131 = vmatpush1.msra.mxu0 0.0
      %3132 = vmatprep.subr.mxu0 0.0
      %3133 = vmatpush1.msra.mxu0 0.0
      %3134 = vmatprep.subr.mxu0 0.0
      %3135 = vmatpush1.msra.mxu0 0.0
      %3136 = vmatprep.subr.mxu0 0.0
      %3137 = vmatpush1.msra.mxu0 0.0
      %3138 = vmatprep.subr.mxu0 0.0
      %3139 = vmatpush1.msra.mxu0 0.0
      %3140 = vmatprep.subr.mxu0 0.0
      %3141 = vmatpush1.msra.mxu0 0.0
      %3142 = vmatprep.subr.mxu0 0.0
      %3143 = vmatpush1.msra.mxu0 0.0
      %3144 = vmatprep.subr.mxu0 0.0
      %3145 = vmatpush1.msra.mxu0 0.0
      %3146 = vmatprep.subr.mxu0 0.0
      %3147 = vmatpush1.msra.mxu0 0.0
      %3148 = vmatprep.subr.mxu0 0.0
      %3149 = vmatpush1.msra.mxu0 0.0
      %3150 = vmatprep.subr.mxu0 0.0
      %3151 = vmatpush1.msra.mxu0 0.0
      %3152 = vmatprep.subr.mxu0 0.0
      %3153 = vmatpush1.msra.mxu0 0.0
      %3154 = vmatprep.subr.mxu0 0.0
      %3155 = vmatpush1.msra.mxu0 0.0
      %3156 = vmatprep.subr.mxu0 0.0
      %3157 = vmatpush1.msra.mxu0 0.0
      %3158 = vmatprep.subr.mxu0 0.0
      %3159 = vmatpush1.msra.mxu0 0.0
      %3160 = vmatprep.subr.mxu0 0.0
      %3161 = vmatpush1.msra.mxu0 0.0
      %3162 = vmatprep.subr.mxu0 0.0
      %3163 = vmatpush1.msra.mxu0 0.0
      %3164 = vmatprep.subr.mxu0 0.0
      %3165 = vmatpush1.msra.mxu0 0.0
      %3166 = vmatprep.subr.mxu0 0.0
      %3167 = vmatpush1.msra.mxu0 0.0
      %3168 = vmatprep.subr.mxu0 0.0
      %3169 = vmatpush1.msra.mxu0 0.0
      %3170 = vmatprep.subr.mxu0 0.0
      %3171 = vmatpush1.msra.mxu0 0.0
      %3172 = vmatprep.subr.mxu0 0.0
      %3173 = vmatpush1.msra.mxu0 0.0
      %3174 = vmatprep.subr.mxu0 0.0
      %3175 = vmatpush1.msra.mxu0 0.0
      %3176 = vmatprep.subr.mxu0 0.0
      %3177 = vmatpush1.msra.mxu0 0.0
      %3178 = vmatprep.subr.mxu0 0.0
      %3179 = vmatpush1.msra.mxu0 0.0
      %3180 = vmatprep.mubr.f32.mxu0 0.0
      %3181 = vmatmul.mubr.f32.gmra.mrb[0].mxu0 %v3069
      %v3182 = vpop.f32.mrb[0].mxu0
      %v3183 = vadd.f32 0.0, %v3182
      %v3184 = vpop.f32.mrb[0].mxu0
      %3185 = vmatprep.mubr.f32.mxu0 0.0
      %3186 = vmatmul.mubr.f32.gmra.mrb[0].mxu0 %v3072
      %v3187 = vpop.f32.mrb[0].mxu0
      %v3188 = vadd.f32 0.0, %v3187
      %v3189 = vpop.f32.mrb[0].mxu0
      %3190 = vmatprep.mubr.f32.mxu0 0.0
      %3191 = vmatmul.mubr.f32.gmra.mrb[0].mxu0 %v3075
      %v3192 = vpop.f32.mrb[0].mxu0
      %v3193 = vadd.f32 0.0, %v3192
      %v3194 = vpop.f32.mrb[0].mxu0
      %3195 = vmatprep.mubr.f32.mxu0 0.0
      %3196 = vmatmul.mubr.f32.gmra.mrb[0].mxu0 %v3078
      %v3197 = vpop.f32.mrb[0].mxu0
      %v3198 = vadd.f32 0.0, %v3197
      %v3199 = vpop.f32.mrb[0].mxu0
      %3200 = vmatprep.mubr.f32.mxu0 0.0
      %3201 = vmatmul.mubr.f32.gmra.mrb[0].mxu0 %v3081
      %v3202 = vpop.f32.mrb[0].mxu0
      %v3203 = vadd.f32 0.0, %v3202
      %v3204 = vpop.f32.mrb[0].mxu0
      %3205 = vmatprep.mubr.f32.mxu0 0.0
      %3206 = vmatmul.mubr.f32.gmra.mrb[0].mxu0 %v3084
      %v3207 = vpop.f32.mrb[0].mxu0
      %v3208 = vadd.f32 0.0, %v3207
      %v3209 = vpop.f32.mrb[0].mxu0
      %3210 = vmatprep.mubr.f32.mxu0 0.0
      %3211 = vmatmul.mubr.f32.gmra.mrb[0].mxu0 %v3087
      %v3212 = vpop.f32.mrb[0].mxu0
      %v3213 = vadd.f32 0.0, %v3212
      %v3214 = vpop.f32.mrb[0].mxu0
      %3215 = vmatprep.mubr.f32.mxu0 0.0
      %3216 = vmatmul.mubr.f32.gmra.mrb[0].mxu0 %v3090
      %v3217 = vpop.f32.mrb[0].mxu0
      %v3218 = vadd.f32 0.0, %v3217
      %v3219 = vpop.f32.mrb[0].mxu0
      %3220 = vmatprep.mubr.f32.mxu0 0.0
      %3221 = vmatmul.mubr.f32.gmra.mrb[0].mxu0 %v3093
      %v3222 = vpop.f32.mrb[0].mxu0
      %v3223 = vadd.f32 0.0, %v3222
      %v3224 = vpop.f32.mrb[0].mxu0
      %3225 = vmatprep.mubr.f32.mxu0 0.0
      %3226 = vmatmul.mubr.f32.gmra.mrb[0].mxu0 %v3096
      %v3227 = vpop.f32.mrb[0].mxu0
      %v3228 = vadd.f32 0.0, %v3227
      %v3229 = vpop.f32.mrb[0].mxu0
      %3230 = vmatprep.mubr.f32.mxu0 0.0
      %3231 = vmatmul.mubr.f32.gmra.mrb[0].mxu0 %v3099
      %v3232 = vpop.f32.mrb[0].mxu0
      %v3233 = vadd.f32 0.0, %v3232
      %v3234 = vpop.f32.mrb[0].mxu0
      %3235 = vmatprep.mubr.f32.mxu0 0.0
      %3236 = vmatmul.mubr.f32.gmra.mrb[0].mxu0 %v3102
      %v3237 = vpop.f32.mrb[0].mxu0
      %v3238 = vadd.f32 0.0, %v3237
      %v3239 = vpop.f32.mrb[0].mxu0
      %3240 = vmatprep.mubr.f32.mxu0 0.0
      %3241 = vmatmul.mubr.f32.gmra.mrb[0].mxu0 %v3105
      %v3242 = vpop.f32.mrb[0].mxu0
      %v3243 = vadd.f32 0.0, %v3242
      %v3244 = vpop.f32.mrb[0].mxu0
      %3245 = vmatprep.mubr.f32.mxu0 0.0
      %3246 = vmatmul.mubr.f32.gmra.mrb[0].mxu0 %v3108
      %v3247 = vpop.f32.mrb[0].mxu0
      %v3248 = vadd.f32 0.0, %v3247
      %v3249 = vpop.f32.mrb[0].mxu0
      %3250 = vmatprep.mubr.f32.mxu0 0.0
      %3251 = vmatmul.mubr.f32.gmra.mrb[0].mxu0 %v3111
      %v3252 = vpop.f32.mrb[0].mxu0
      %v3253 = vadd.f32 0.0, %v3252
      %v3254 = vpop.f32.mrb[0].mxu0
      %3255 = vmatprep.mubr.f32.mxu0 0.0
      %3256 = vmatmul.mubr.f32.gmra.mrb[0].mxu0 %v3114
      %v3257 = vpop.f32.mrb[0].mxu0
      %v3258 = vadd.f32 0.0, %v3257
      %v3259 = vpop.f32.mrb[0].mxu0
      %3260 = vdwg.mxu0
      %v3262 = vsel %vm208, %v3032, 0
      %v3265 = vsel %vm208, %v3033, 0
      %v3268 = vsel %vm208, %v3034, 0
      %v3271 = vsel %vm208, %v3035, 0
      %v3274 = vsel %vm208, %v3036, 0
      %v3277 = vsel %vm208, %v3037, 0
      %v3280 = vsel %vm208, %v3038, 0
      %v3283 = vsel %vm208, %v3039, 0
      %v3286 = vsel %vm208, %v3040, 0
      %v3289 = vsel %vm208, %v3041, 0
      %v3292 = vsel %vm208, %v3042, 0
      %v3295 = vsel %vm208, %v3043, 0
      %v3298 = vsel %vm208, %v3044, 0
      %v3301 = vsel %vm208, %v3045, 0
      %v3304 = vsel %vm208, %v3046, 0
      %v3307 = vsel %vm208, %v3047, 0
      %3309 = vmatprep.subr.mxu0 0.0
      %3310 = vmatpush1.msra.mxu0 %v3049
      %3311 = vmatprep.subr.mxu0 0.0
      %3312 = vmatpush1.msra.mxu0 0.0
      %3313 = vmatprep.subr.mxu0 0.0
      %3314 = vmatpush1.msra.mxu0 0.0
      %3315 = vmatprep.subr.mxu0 0.0
      %3316 = vmatpush1.msra.mxu0 0.0
      %3317 = vmatprep.subr.mxu0 0.0
      %3318 = vmatpush1.msra.mxu0 0.0
      %3319 = vmatprep.subr.mxu0 0.0
      %3320 = vmatpush1.msra.mxu0 0.0
      %3321 = vmatprep.subr.mxu0 0.0
      %3322 = vmatpush1.msra.mxu0 0.0
      %3323 = vmatprep.subr.mxu0 0.0
      %3324 = vmatpush1.msra.mxu0 0.0
      %3325 = vmatprep.subr.mxu0 0.0
      %3326 = vmatpush1.msra.mxu0 0.0
      %3327 = vmatprep.subr.mxu0 0.0
      %3328 = vmatpush1.msra.mxu0 0.0
      %3329 = vmatprep.subr.mxu0 0.0
      %3330 = vmatpush1.msra.mxu0 0.0
      %3331 = vmatprep.subr.mxu0 0.0
      %3332 = vmatpush1.msra.mxu0 0.0
      %3333 = vmatprep.subr.mxu0 0.0
      %3334 = vmatpush1.msra.mxu0 0.0
      %3335 = vmatprep.subr.mxu0 0.0
      %3336 = vmatpush1.msra.mxu0 0.0
      %3337 = vmatprep.subr.mxu0 0.0
      %3338 = vmatpush1.msra.mxu0 0.0
      %3339 = vmatprep.subr.mxu0 0.0
      %3340 = vmatpush1.msra.mxu0 0.0
      %3341 = vmatprep.subr.mxu0 0.0
      %3342 = vmatpush1.msra.mxu0 0.0
      %3343 = vmatprep.subr.mxu0 0.0
      %3344 = vmatpush1.msra.mxu0 0.0
      %3345 = vmatprep.subr.mxu0 0.0
      %3346 = vmatpush1.msra.mxu0 0.0
      %3347 = vmatprep.subr.mxu0 0.0
      %3348 = vmatpush1.msra.mxu0 0.0
      %3349 = vmatprep.subr.mxu0 0.0
      %3350 = vmatpush1.msra.mxu0 0.0
      %3351 = vmatprep.subr.mxu0 0.0
      %3352 = vmatpush1.msra.mxu0 0.0
      %3353 = vmatprep.subr.mxu0 0.0
      %3354 = vmatpush1.msra.mxu0 0.0
      %3355 = vmatprep.subr.mxu0 0.0
      %3356 = vmatpush1.msra.mxu0 0.0
      %3357 = vmatprep.subr.mxu0 0.0
      %3358 = vmatpush1.msra.mxu0 0.0
      %3359 = vmatprep.subr.mxu0 0.0
      %3360 = vmatpush1.msra.mxu0 0.0
      %3361 = vmatprep.subr.mxu0 0.0
      %3362 = vmatpush1.msra.mxu0 0.0
      %3363 = vmatprep.subr.mxu0 0.0
      %3364 = vmatpush1.msra.mxu0 0.0
      %3365 = vmatprep.subr.mxu0 0.0
      %3366 = vmatpush1.msra.mxu0 0.0
      %3367 = vmatprep.subr.mxu0 0.0
      %3368 = vmatpush1.msra.mxu0 0.0
      %3369 = vmatprep.subr.mxu0 0.0
      %3370 = vmatpush1.msra.mxu0 0.0
      %3371 = vmatprep.subr.mxu0 0.0
      %3372 = vmatpush1.msra.mxu0 0.0
      %3373 = vmatprep.mubr.f32.mxu0 0.0
      %3374 = vmatmul.mubr.f32.gmra.mrb[0].mxu0 %v3262
      %v3375 = vpop.f32.mrb[0].mxu0
      %v3376 = vadd.f32 %v3183, %v3375
      %v3377 = vpop.f32.mrb[0].mxu0
      %3378 = vmatprep.mubr.f32.mxu0 0.0
      %3379 = vmatmul.mubr.f32.gmra.mrb[0].mxu0 %v3265
      %v3380 = vpop.f32.mrb[0].mxu0
      %v3381 = vadd.f32 %v3188, %v3380
      %v3382 = vpop.f32.mrb[0].mxu0
      %3383 = vmatprep.mubr.f32.mxu0 0.0
      %3384 = vmatmul.mubr.f32.gmra.mrb[0].mxu0 %v3268
      %v3385 = vpop.f32.mrb[0].mxu0
      %v3386 = vadd.f32 %v3193, %v3385
      %v3387 = vpop.f32.mrb[0].mxu0
      %3388 = vmatprep.mubr.f32.mxu0 0.0
      %3389 = vmatmul.mubr.f32.gmra.mrb[0].mxu0 %v3271
      %v3390 = vpop.f32.mrb[0].mxu0
      %v3391 = vadd.f32 %v3198, %v3390
      %v3392 = vpop.f32.mrb[0].mxu0
      %3393 = vmatprep.mubr.f32.mxu0 0.0
      %3394 = vmatmul.mubr.f32.gmra.mrb[0].mxu0 %v3274
      %v3395 = vpop.f32.mrb[0].mxu0
      %v3396 = vadd.f32 %v3203, %v3395
      %v3397 = vpop.f32.mrb[0].mxu0
      %3398 = vmatprep.mubr.f32.mxu0 0.0
      %3399 = vmatmul.mubr.f32.gmra.mrb[0].mxu0 %v3277
      %v3400 = vpop.f32.mrb[0].mxu0
      %v3401 = vadd.f32 %v3208, %v3400
      %v3402 = vpop.f32.mrb[0].mxu0
      %3403 = vmatprep.mubr.f32.mxu0 0.0
      %3404 = vmatmul.mubr.f32.gmra.mrb[0].mxu0 %v3280
      %v3405 = vpop.f32.mrb[0].mxu0
      %v3406 = vadd.f32 %v3213, %v3405
      %v3407 = vpop.f32.mrb[0].mxu0
      %3408 = vmatprep.mubr.f32.mxu0 0.0
      %3409 = vmatmul.mubr.f32.gmra.mrb[0].mxu0 %v3283
      %v3410 = vpop.f32.mrb[0].mxu0
      %v3411 = vadd.f32 %v3218, %v3410
      %v3412 = vpop.f32.mrb[0].mxu0
      %3413 = vmatprep.mubr.f32.mxu0 0.0
      %3414 = vmatmul.mubr.f32.gmra.mrb[0].mxu0 %v3286
      %v3415 = vpop.f32.mrb[0].mxu0
      %v3416 = vadd.f32 %v3223, %v3415
      %v3417 = vpop.f32.mrb[0].mxu0
      %3418 = vmatprep.mubr.f32.mxu0 0.0
      %3419 = vmatmul.mubr.f32.gmra.mrb[0].mxu0 %v3289
      %v3420 = vpop.f32.mrb[0].mxu0
      %v3421 = vadd.f32 %v3228, %v3420
      %v3422 = vpop.f32.mrb[0].mxu0
      %3423 = vmatprep.mubr.f32.mxu0 0.0
      %3424 = vmatmul.mubr.f32.gmra.mrb[0].mxu0 %v3292
      %v3425 = vpop.f32.mrb[0].mxu0
      %v3426 = vadd.f32 %v3233, %v3425
      %v3427 = vpop.f32.mrb[0].mxu0
      %3428 = vmatprep.mubr.f32.mxu0 0.0
      %3429 = vmatmul.mubr.f32.gmra.mrb[0].mxu0 %v3295
      %v3430 = vpop.f32.mrb[0].mxu0
      %v3431 = vadd.f32 %v3238, %v3430
      %v3432 = vpop.f32.mrb[0].mxu0
      %3433 = vmatprep.mubr.f32.mxu0 0.0
      %3434 = vmatmul.mubr.f32.gmra.mrb[0].mxu0 %v3298
      %v3435 = vpop.f32.mrb[0].mxu0
      %v3436 = vadd.f32 %v3243, %v3435
      %v3437 = vpop.f32.mrb[0].mxu0
      %3438 = vmatprep.mubr.f32.mxu0 0.0
      %3439 = vmatmul.mubr.f32.gmra.mrb[0].mxu0 %v3301
      %v3440 = vpop.f32.mrb[0].mxu0
      %v3441 = vadd.f32 %v3248, %v3440
      %v3442 = vpop.f32.mrb[0].mxu0
      %3443 = vmatprep.mubr.f32.mxu0 0.0
      %3444 = vmatmul.mubr.f32.gmra.mrb[0].mxu0 %v3304
      %v3445 = vpop.f32.mrb[0].mxu0
      %v3446 = vadd.f32 %v3253, %v3445
      %v3447 = vpop.f32.mrb[0].mxu0
      %3448 = vmatprep.mubr.f32.mxu0 0.0
      %3449 = vmatmul.mubr.f32.gmra.mrb[0].mxu0 %v3307
      %v3450 = vpop.f32.mrb[0].mxu0
      %v3451 = vadd.f32 %v3258, %v3450
      %v3452 = vpop.f32.mrb[0].mxu0
      %3453 = vdwg.mxu0
      %v3454 = vld [vmem:[%s172 + $0x2] sm:$0xff]
      %v3455 = vld [vmem:[%s172 + $0xa] sm:$0xff]
      %v3456 = vld [vmem:[%s172 + $0x1a] sm:$0xff]
      %v3457 = vld [vmem:[%s172 + $0x22] sm:$0xff]
      %v3458 = vld [vmem:[%s172 + $0x32] sm:$0xff]
      %v3459 = vld [vmem:[%s172 + $0x3a] sm:$0xff]
      %v3460 = vld [vmem:[%s172 + $0x4a] sm:$0xff]
      %v3461 = vld [vmem:[%s172 + $0x52] sm:$0xff]
      %v3462 = vld [vmem:[%s172 + $0x62] sm:$0xff]
      %v3463 = vld [vmem:[%s172 + $0x6a] sm:$0xff]
      %v3464 = vld [vmem:[%s172 + $0x7a] sm:$0xff]
      %v3465 = vld [vmem:[%s172 + $0x82] sm:$0xff]
      %v3466 = vld [vmem:[%s172 + $0x92] sm:$0xff]
      %v3467 = vld [vmem:[%s172 + $0x9a] sm:$0xff]
      %v3468 = vld [vmem:[%s172 + $0xaa] sm:$0xff]
      %v3469 = vld [vmem:[%s172 + $0xb2] sm:$0xff]
      %s3470 = scalar_lea.vmem %s1, 112
      %v3471 = vld [vmem:[%s3470] sm:$0xff]
      %v3473 = vsel %vm208, %v3454, 0
      %v3476 = vsel %vm208, %v3455, 0
      %v3479 = vsel %vm208, %v3456, 0
      %v3482 = vsel %vm208, %v3457, 0
      %v3485 = vsel %vm208, %v3458, 0
      %v3488 = vsel %vm208, %v3459, 0
      %v3491 = vsel %vm208, %v3460, 0
      %v3494 = vsel %vm208, %v3461, 0
      %v3497 = vsel %vm208, %v3462, 0
      %v3500 = vsel %vm208, %v3463, 0
      %v3503 = vsel %vm208, %v3464, 0
      %v3506 = vsel %vm208, %v3465, 0
      %v3509 = vsel %vm208, %v3466, 0
      %v3512 = vsel %vm208, %v3467, 0
      %v3515 = vsel %vm208, %v3468, 0
      %v3518 = vsel %vm208, %v3469, 0
      %3520 = vmatprep.subr.mxu0 0.0
      %3521 = vmatpush1.msra.mxu0 %v3471
      %3522 = vmatprep.subr.mxu0 0.0
      %3523 = vmatpush1.msra.mxu0 0.0
      %3524 = vmatprep.subr.mxu0 0.0
      %3525 = vmatpush1.msra.mxu0 0.0
      %3526 = vmatprep.subr.mxu0 0.0
      %3527 = vmatpush1.msra.mxu0 0.0
      %3528 = vmatprep.subr.mxu0 0.0
      %3529 = vmatpush1.msra.mxu0 0.0
      %3530 = vmatprep.subr.mxu0 0.0
      %3531 = vmatpush1.msra.mxu0 0.0
      %3532 = vmatprep.subr.mxu0 0.0
      %3533 = vmatpush1.msra.mxu0 0.0
      %3534 = vmatprep.subr.mxu0 0.0
      %3535 = vmatpush1.msra.mxu0 0.0
      %3536 = vmatprep.subr.mxu0 0.0
      %3537 = vmatpush1.msra.mxu0 0.0
      %3538 = vmatprep.subr.mxu0 0.0
      %3539 = vmatpush1.msra.mxu0 0.0
      %3540 = vmatprep.subr.mxu0 0.0
      %3541 = vmatpush1.msra.mxu0 0.0
      %3542 = vmatprep.subr.mxu0 0.0
      %3543 = vmatpush1.msra.mxu0 0.0
      %3544 = vmatprep.subr.mxu0 0.0
      %3545 = vmatpush1.msra.mxu0 0.0
      %3546 = vmatprep.subr.mxu0 0.0
      %3547 = vmatpush1.msra.mxu0 0.0
      %3548 = vmatprep.subr.mxu0 0.0
      %3549 = vmatpush1.msra.mxu0 0.0
      %3550 = vmatprep.subr.mxu0 0.0
      %3551 = vmatpush1.msra.mxu0 0.0
      %3552 = vmatprep.subr.mxu0 0.0
      %3553 = vmatpush1.msra.mxu0 0.0
      %3554 = vmatprep.subr.mxu0 0.0
      %3555 = vmatpush1.msra.mxu0 0.0
      %3556 = vmatprep.subr.mxu0 0.0
      %3557 = vmatpush1.msra.mxu0 0.0
      %3558 = vmatprep.subr.mxu0 0.0
      %3559 = vmatpush1.msra.mxu0 0.0
      %3560 = vmatprep.subr.mxu0 0.0
      %3561 = vmatpush1.msra.mxu0 0.0
      %3562 = vmatprep.subr.mxu0 0.0
      %3563 = vmatpush1.msra.mxu0 0.0
      %3564 = vmatprep.subr.mxu0 0.0
      %3565 = vmatpush1.msra.mxu0 0.0
      %3566 = vmatprep.subr.mxu0 0.0
      %3567 = vmatpush1.msra.mxu0 0.0
      %3568 = vmatprep.subr.mxu0 0.0
      %3569 = vmatpush1.msra.mxu0 0.0
      %3570 = vmatprep.subr.mxu0 0.0
      %3571 = vmatpush1.msra.mxu0 0.0
      %3572 = vmatprep.subr.mxu0 0.0
      %3573 = vmatpush1.msra.mxu0 0.0
      %3574 = vmatprep.subr.mxu0 0.0
      %3575 = vmatpush1.msra.mxu0 0.0
      %3576 = vmatprep.subr.mxu0 0.0
      %3577 = vmatpush1.msra.mxu0 0.0
      %3578 = vmatprep.subr.mxu0 0.0
      %3579 = vmatpush1.msra.mxu0 0.0
      %3580 = vmatprep.subr.mxu0 0.0
      %3581 = vmatpush1.msra.mxu0 0.0
      %3582 = vmatprep.subr.mxu0 0.0
      %3583 = vmatpush1.msra.mxu0 0.0
      %3584 = vmatprep.mubr.f32.mxu0 0.0
      %3585 = vmatmul.mubr.f32.gmra.mrb[0].mxu0 %v3473
      %v3586 = vpop.f32.mrb[0].mxu0
      %v3587 = vadd.f32 0.0, %v3586
      %v3588 = vpop.f32.mrb[0].mxu0
      %3589 = vmatprep.mubr.f32.mxu0 0.0
      %3590 = vmatmul.mubr.f32.gmra.mrb[0].mxu0 %v3476
      %v3591 = vpop.f32.mrb[0].mxu0
      %v3592 = vadd.f32 0.0, %v3591
      %v3593 = vpop.f32.mrb[0].mxu0
      %3594 = vmatprep.mubr.f32.mxu0 0.0
      %3595 = vmatmul.mubr.f32.gmra.mrb[0].mxu0 %v3479
      %v3596 = vpop.f32.mrb[0].mxu0
      %v3597 = vadd.f32 0.0, %v3596
      %v3598 = vpop.f32.mrb[0].mxu0
      %3599 = vmatprep.mubr.f32.mxu0 0.0
      %3600 = vmatmul.mubr.f32.gmra.mrb[0].mxu0 %v3482
      %v3601 = vpop.f32.mrb[0].mxu0
      %v3602 = vadd.f32 0.0, %v3601
      %v3603 = vpop.f32.mrb[0].mxu0
      %3604 = vmatprep.mubr.f32.mxu0 0.0
      %3605 = vmatmul.mubr.f32.gmra.mrb[0].mxu0 %v3485
      %v3606 = vpop.f32.mrb[0].mxu0
      %v3607 = vadd.f32 0.0, %v3606
      %v3608 = vpop.f32.mrb[0].mxu0
      %3609 = vmatprep.mubr.f32.mxu0 0.0
      %3610 = vmatmul.mubr.f32.gmra.mrb[0].mxu0 %v3488
      %v3611 = vpop.f32.mrb[0].mxu0
      %v3612 = vadd.f32 0.0, %v3611
      %v3613 = vpop.f32.mrb[0].mxu0
      %3614 = vmatprep.mubr.f32.mxu0 0.0
      %3615 = vmatmul.mubr.f32.gmra.mrb[0].mxu0 %v3491
      %v3616 = vpop.f32.mrb[0].mxu0
      %v3617 = vadd.f32 0.0, %v3616
      %v3618 = vpop.f32.mrb[0].mxu0
      %3619 = vmatprep.mubr.f32.mxu0 0.0
      %3620 = vmatmul.mubr.f32.gmra.mrb[0].mxu0 %v3494
      %v3621 = vpop.f32.mrb[0].mxu0
      %v3622 = vadd.f32 0.0, %v3621
      %v3623 = vpop.f32.mrb[0].mxu0
      %3624 = vmatprep.mubr.f32.mxu0 0.0
      %3625 = vmatmul.mubr.f32.gmra.mrb[0].mxu0 %v3497
      %v3626 = vpop.f32.mrb[0].mxu0
      %v3627 = vadd.f32 0.0, %v3626
      %v3628 = vpop.f32.mrb[0].mxu0
      %3629 = vmatprep.mubr.f32.mxu0 0.0
      %3630 = vmatmul.mubr.f32.gmra.mrb[0].mxu0 %v3500
      %v3631 = vpop.f32.mrb[0].mxu0
      %v3632 = vadd.f32 0.0, %v3631
      %v3633 = vpop.f32.mrb[0].mxu0
      %3634 = vmatprep.mubr.f32.mxu0 0.0
      %3635 = vmatmul.mubr.f32.gmra.mrb[0].mxu0 %v3503
      %v3636 = vpop.f32.mrb[0].mxu0
      %v3637 = vadd.f32 0.0, %v3636
      %v3638 = vpop.f32.mrb[0].mxu0
      %3639 = vmatprep.mubr.f32.mxu0 0.0
      %3640 = vmatmul.mubr.f32.gmra.mrb[0].mxu0 %v3506
      %v3641 = vpop.f32.mrb[0].mxu0
      %v3642 = vadd.f32 0.0, %v3641
      %v3643 = vpop.f32.mrb[0].mxu0
      %3644 = vmatprep.mubr.f32.mxu0 0.0
      %3645 = vmatmul.mubr.f32.gmra.mrb[0].mxu0 %v3509
      %v3646 = vpop.f32.mrb[0].mxu0
      %v3647 = vadd.f32 0.0, %v3646
      %v3648 = vpop.f32.mrb[0].mxu0
      %3649 = vmatprep.mubr.f32.mxu0 0.0
      %3650 = vmatmul.mubr.f32.gmra.mrb[0].mxu0 %v3512
      %v3651 = vpop.f32.mrb[0].mxu0
      %v3652 = vadd.f32 0.0, %v3651
      %v3653 = vpop.f32.mrb[0].mxu0
      %3654 = vmatprep.mubr.f32.mxu0 0.0
      %3655 = vmatmul.mubr.f32.gmra.mrb[0].mxu0 %v3515
      %v3656 = vpop.f32.mrb[0].mxu0
      %v3657 = vadd.f32 0.0, %v3656
      %v3658 = vpop.f32.mrb[0].mxu0
      %3659 = vmatprep.mubr.f32.mxu0 0.0
      %3660 = vmatmul.mubr.f32.gmra.mrb[0].mxu0 %v3518
      %v3661 = vpop.f32.mrb[0].mxu0
      %v3662 = vadd.f32 0.0, %v3661
      %v3663 = vpop.f32.mrb[0].mxu0
      %3664 = vdwg.mxu0
      %v3665 = vadd.f32 %v3376, %v3587
      %v3666 = vadd.f32 %v3381, %v3592
      %v3667 = vadd.f32 %v3386, %v3597
      %v3668 = vadd.f32 %v3391, %v3602
      %v3669 = vadd.f32 %v3396, %v3607
      %v3670 = vadd.f32 %v3401, %v3612
      %v3671 = vadd.f32 %v3406, %v3617
      %v3672 = vadd.f32 %v3411, %v3622
      %v3673 = vadd.f32 %v3416, %v3627
      %v3674 = vadd.f32 %v3421, %v3632
      %v3675 = vadd.f32 %v3426, %v3637
      %v3676 = vadd.f32 %v3431, %v3642
      %v3677 = vadd.f32 %v3436, %v3647
      %v3678 = vadd.f32 %v3441, %v3652
      %v3679 = vadd.f32 %v3446, %v3657
      %v3680 = vadd.f32 %v3451, %v3662
      %v3681 = vld [vmem:[%s172 + $0x1] sm:$0xff]
      %v3682 = vld [vmem:[%s172 + $0x9] sm:$0xff]
      %v3683 = vld [vmem:[%s172 + $0x19] sm:$0xff]
      %v3684 = vld [vmem:[%s172 + $0x21] sm:$0xff]
      %v3685 = vld [vmem:[%s172 + $0x31] sm:$0xff]
      %v3686 = vld [vmem:[%s172 + $0x39] sm:$0xff]
      %v3687 = vld [vmem:[%s172 + $0x49] sm:$0xff]
      %v3688 = vld [vmem:[%s172 + $0x51] sm:$0xff]
      %v3689 = vld [vmem:[%s172 + $0x61] sm:$0xff]
      %v3690 = vld [vmem:[%s172 + $0x69] sm:$0xff]
      %v3691 = vld [vmem:[%s172 + $0x79] sm:$0xff]
      %v3692 = vld [vmem:[%s172 + $0x81] sm:$0xff]
      %v3693 = vld [vmem:[%s172 + $0x91] sm:$0xff]
      %v3694 = vld [vmem:[%s172 + $0x99] sm:$0xff]
      %v3695 = vld [vmem:[%s172 + $0xa9] sm:$0xff]
      %v3696 = vld [vmem:[%s172 + $0xb1] sm:$0xff]
      %s3697 = scalar_lea.vmem %s1, 120
      %v3698 = vld [vmem:[%s3697] sm:$0xff]
      %v3700 = vsel %vm208, %v3681, 0
      %v3703 = vsel %vm208, %v3682, 0
      %v3706 = vsel %vm208, %v3683, 0
      %v3709 = vsel %vm208, %v3684, 0
      %v3712 = vsel %vm208, %v3685, 0
      %v3715 = vsel %vm208, %v3686, 0
      %v3718 = vsel %vm208, %v3687, 0
      %v3721 = vsel %vm208, %v3688, 0
      %v3724 = vsel %vm208, %v3689, 0
      %v3727 = vsel %vm208, %v3690, 0
      %v3730 = vsel %vm208, %v3691, 0
      %v3733 = vsel %vm208, %v3692, 0
      %v3736 = vsel %vm208, %v3693, 0
      %v3739 = vsel %vm208, %v3694, 0
      %v3742 = vsel %vm208, %v3695, 0
      %v3745 = vsel %vm208, %v3696, 0
      %3747 = vmatprep.subr.mxu0 0.0
      %3748 = vmatpush1.msra.mxu0 %v3698
      %3749 = vmatprep.subr.mxu0 0.0
      %3750 = vmatpush1.msra.mxu0 0.0
      %3751 = vmatprep.subr.mxu0 0.0
      %3752 = vmatpush1.msra.mxu0 0.0
      %3753 = vmatprep.subr.mxu0 0.0
      %3754 = vmatpush1.msra.mxu0 0.0
      %3755 = vmatprep.subr.mxu0 0.0
      %3756 = vmatpush1.msra.mxu0 0.0
      %3757 = vmatprep.subr.mxu0 0.0
      %3758 = vmatpush1.msra.mxu0 0.0
      %3759 = vmatprep.subr.mxu0 0.0
      %3760 = vmatpush1.msra.mxu0 0.0
      %3761 = vmatprep.subr.mxu0 0.0
      %3762 = vmatpush1.msra.mxu0 0.0
      %3763 = vmatprep.subr.mxu0 0.0
      %3764 = vmatpush1.msra.mxu0 0.0
      %3765 = vmatprep.subr.mxu0 0.0
      %3766 = vmatpush1.msra.mxu0 0.0
      %3767 = vmatprep.subr.mxu0 0.0
      %3768 = vmatpush1.msra.mxu0 0.0
      %3769 = vmatprep.subr.mxu0 0.0
      %3770 = vmatpush1.msra.mxu0 0.0
      %3771 = vmatprep.subr.mxu0 0.0
      %3772 = vmatpush1.msra.mxu0 0.0
      %3773 = vmatprep.subr.mxu0 0.0
      %3774 = vmatpush1.msra.mxu0 0.0
      %3775 = vmatprep.subr.mxu0 0.0
      %3776 = vmatpush1.msra.mxu0 0.0
      %3777 = vmatprep.subr.mxu0 0.0
      %3778 = vmatpush1.msra.mxu0 0.0
      %3779 = vmatprep.subr.mxu0 0.0
      %3780 = vmatpush1.msra.mxu0 0.0
      %3781 = vmatprep.subr.mxu0 0.0
      %3782 = vmatpush1.msra.mxu0 0.0
      %3783 = vmatprep.subr.mxu0 0.0
      %3784 = vmatpush1.msra.mxu0 0.0
      %3785 = vmatprep.subr.mxu0 0.0
      %3786 = vmatpush1.msra.mxu0 0.0
      %3787 = vmatprep.subr.mxu0 0.0
      %3788 = vmatpush1.msra.mxu0 0.0
      %3789 = vmatprep.subr.mxu0 0.0
      %3790 = vmatpush1.msra.mxu0 0.0
      %3791 = vmatprep.subr.mxu0 0.0
      %3792 = vmatpush1.msra.mxu0 0.0
      %3793 = vmatprep.subr.mxu0 0.0
      %3794 = vmatpush1.msra.mxu0 0.0
      %3795 = vmatprep.subr.mxu0 0.0
      %3796 = vmatpush1.msra.mxu0 0.0
      %3797 = vmatprep.subr.mxu0 0.0
      %3798 = vmatpush1.msra.mxu0 0.0
      %3799 = vmatprep.subr.mxu0 0.0
      %3800 = vmatpush1.msra.mxu0 0.0
      %3801 = vmatprep.subr.mxu0 0.0
      %3802 = vmatpush1.msra.mxu0 0.0
      %3803 = vmatprep.subr.mxu0 0.0
      %3804 = vmatpush1.msra.mxu0 0.0
      %3805 = vmatprep.subr.mxu0 0.0
      %3806 = vmatpush1.msra.mxu0 0.0
      %3807 = vmatprep.subr.mxu0 0.0
      %3808 = vmatpush1.msra.mxu0 0.0
      %3809 = vmatprep.subr.mxu0 0.0
      %3810 = vmatpush1.msra.mxu0 0.0
      %3811 = vmatprep.mubr.f32.mxu0 0.0
      %3812 = vmatmul.mubr.f32.gmra.mrb[0].mxu0 %v3700
      %v3813 = vpop.f32.mrb[0].mxu0
      %v3814 = vadd.f32 0.0, %v3813
      %v3815 = vpop.f32.mrb[0].mxu0
      %3816 = vmatprep.mubr.f32.mxu0 0.0
      %3817 = vmatmul.mubr.f32.gmra.mrb[0].mxu0 %v3703
      %v3818 = vpop.f32.mrb[0].mxu0
      %v3819 = vadd.f32 0.0, %v3818
      %v3820 = vpop.f32.mrb[0].mxu0
      %3821 = vmatprep.mubr.f32.mxu0 0.0
      %3822 = vmatmul.mubr.f32.gmra.mrb[0].mxu0 %v3706
      %v3823 = vpop.f32.mrb[0].mxu0
      %v3824 = vadd.f32 0.0, %v3823
      %v3825 = vpop.f32.mrb[0].mxu0
      %3826 = vmatprep.mubr.f32.mxu0 0.0
      %3827 = vmatmul.mubr.f32.gmra.mrb[0].mxu0 %v3709
      %v3828 = vpop.f32.mrb[0].mxu0
      %v3829 = vadd.f32 0.0, %v3828
      %v3830 = vpop.f32.mrb[0].mxu0
      %3831 = vmatprep.mubr.f32.mxu0 0.0
      %3832 = vmatmul.mubr.f32.gmra.mrb[0].mxu0 %v3712
      %v3833 = vpop.f32.mrb[0].mxu0
      %v3834 = vadd.f32 0.0, %v3833
      %v3835 = vpop.f32.mrb[0].mxu0
      %3836 = vmatprep.mubr.f32.mxu0 0.0
      %3837 = vmatmul.mubr.f32.gmra.mrb[0].mxu0 %v3715
      %v3838 = vpop.f32.mrb[0].mxu0
      %v3839 = vadd.f32 0.0, %v3838
      %v3840 = vpop.f32.mrb[0].mxu0
      %3841 = vmatprep.mubr.f32.mxu0 0.0
      %3842 = vmatmul.mubr.f32.gmra.mrb[0].mxu0 %v3718
      %v3843 = vpop.f32.mrb[0].mxu0
      %v3844 = vadd.f32 0.0, %v3843
      %v3845 = vpop.f32.mrb[0].mxu0
      %3846 = vmatprep.mubr.f32.mxu0 0.0
      %3847 = vmatmul.mubr.f32.gmra.mrb[0].mxu0 %v3721
      %v3848 = vpop.f32.mrb[0].mxu0
      %v3849 = vadd.f32 0.0, %v3848
      %v3850 = vpop.f32.mrb[0].mxu0
      %3851 = vmatprep.mubr.f32.mxu0 0.0
      %3852 = vmatmul.mubr.f32.gmra.mrb[0].mxu0 %v3724
      %v3853 = vpop.f32.mrb[0].mxu0
      %v3854 = vadd.f32 0.0, %v3853
      %v3855 = vpop.f32.mrb[0].mxu0
      %3856 = vmatprep.mubr.f32.mxu0 0.0
      %3857 = vmatmul.mubr.f32.gmra.mrb[0].mxu0 %v3727
      %v3858 = vpop.f32.mrb[0].mxu0
      %v3859 = vadd.f32 0.0, %v3858
      %v3860 = vpop.f32.mrb[0].mxu0
      %3861 = vmatprep.mubr.f32.mxu0 0.0
      %3862 = vmatmul.mubr.f32.gmra.mrb[0].mxu0 %v3730
      %v3863 = vpop.f32.mrb[0].mxu0
      %v3864 = vadd.f32 0.0, %v3863
      %v3865 = vpop.f32.mrb[0].mxu0
      %3866 = vmatprep.mubr.f32.mxu0 0.0
      %3867 = vmatmul.mubr.f32.gmra.mrb[0].mxu0 %v3733
      %v3868 = vpop.f32.mrb[0].mxu0
      %v3869 = vadd.f32 0.0, %v3868
      %v3870 = vpop.f32.mrb[0].mxu0
      %3871 = vmatprep.mubr.f32.mxu0 0.0
      %3872 = vmatmul.mubr.f32.gmra.mrb[0].mxu0 %v3736
      %v3873 = vpop.f32.mrb[0].mxu0
      %v3874 = vadd.f32 0.0, %v3873
      %v3875 = vpop.f32.mrb[0].mxu0
      %3876 = vmatprep.mubr.f32.mxu0 0.0
      %3877 = vmatmul.mubr.f32.gmra.mrb[0].mxu0 %v3739
      %v3878 = vpop.f32.mrb[0].mxu0
      %v3879 = vadd.f32 0.0, %v3878
      %v3880 = vpop.f32.mrb[0].mxu0
      %3881 = vmatprep.mubr.f32.mxu0 0.0
      %3882 = vmatmul.mubr.f32.gmra.mrb[0].mxu0 %v3742
      %v3883 = vpop.f32.mrb[0].mxu0
      %v3884 = vadd.f32 0.0, %v3883
      %v3885 = vpop.f32.mrb[0].mxu0
      %3886 = vmatprep.mubr.f32.mxu0 0.0
      %3887 = vmatmul.mubr.f32.gmra.mrb[0].mxu0 %v3745
      %v3888 = vpop.f32.mrb[0].mxu0
      %v3889 = vadd.f32 0.0, %v3888
      %v3890 = vpop.f32.mrb[0].mxu0
      %3891 = vdwg.mxu0
      %v3892 = vadd.f32 %v3665, %v3814
      %v3893 = vadd.f32 %v3666, %v3819
      %v3894 = vadd.f32 %v3667, %v3824
      %v3895 = vadd.f32 %v3668, %v3829
      %v3896 = vadd.f32 %v3669, %v3834
      %v3897 = vadd.f32 %v3670, %v3839
      %v3898 = vadd.f32 %v3671, %v3844
      %v3899 = vadd.f32 %v3672, %v3849
      %v3900 = vadd.f32 %v3673, %v3854
      %v3901 = vadd.f32 %v3674, %v3859
      %v3902 = vadd.f32 %v3675, %v3864
      %v3903 = vadd.f32 %v3676, %v3869
      %v3904 = vadd.f32 %v3677, %v3874
      %v3905 = vadd.f32 %v3678, %v3879
      %v3906 = vadd.f32 %v3679, %v3884
      %v3907 = vadd.f32 %v3680, %v3889
      %v3908 = vmax.f32 %v3892, 0.0
      %v3909 = vmax.f32 %v3893, 0.0
      %v3910 = vmax.f32 %v3894, 0.0
      %v3911 = vmax.f32 %v3895, 0.0
      %v3912 = vmax.f32 %v3896, 0.0
      %v3913 = vmax.f32 %v3897, 0.0
      %v3914 = vmax.f32 %v3898, 0.0
      %v3915 = vmax.f32 %v3899, 0.0
      %v3916 = vmax.f32 %v3900, 0.0
      %v3917 = vmax.f32 %v3901, 0.0
      %v3918 = vmax.f32 %v3902, 0.0
      %v3919 = vmax.f32 %v3903, 0.0
      %v3920 = vmax.f32 %v3904, 0.0
      %v3921 = vmax.f32 %v3905, 0.0
      %v3922 = vmax.f32 %v3906, 0.0
      %v3923 = vmax.f32 %v3907, 0.0
      %3940 = vrot.lane.b32.xlu0 %v3908, 24
      %v3941 = vpop.permute.xlu0 %3940
      %3942 = vrot.lane.b32.xlu0 %v3909, 24
      %v3943 = vpop.permute.xlu0 %3942
      %3944 = vrot.lane.b32.xlu0 %v3910, 24
      %v3945 = vpop.permute.xlu0 %3944
      %3946 = vrot.lane.b32.xlu0 %v3911, 24
      %v3947 = vpop.permute.xlu0 %3946
      %3948 = vrot.lane.b32.xlu0 %v3912, 24
      %v3949 = vpop.permute.xlu0 %3948
      %3950 = vrot.lane.b32.xlu0 %v3913, 24
      %v3951 = vpop.permute.xlu0 %3950
      %3952 = vrot.lane.b32.xlu0 %v3914, 24
      %v3953 = vpop.permute.xlu0 %3952
      %3954 = vrot.lane.b32.xlu0 %v3915, 24
      %v3955 = vpop.permute.xlu0 %3954
      %3956 = vrot.lane.b32.xlu0 %v3916, 24
      %v3957 = vpop.permute.xlu0 %3956
      %3958 = vrot.lane.b32.xlu0 %v3917, 24
      %v3959 = vpop.permute.xlu0 %3958
      %3960 = vrot.lane.b32.xlu0 %v3918, 24
      %v3961 = vpop.permute.xlu0 %3960
      %3962 = vrot.lane.b32.xlu0 %v3919, 24
      %v3963 = vpop.permute.xlu0 %3962
      %3964 = vrot.lane.b32.xlu0 %v3920, 24
      %v3965 = vpop.permute.xlu0 %3964
      %3966 = vrot.lane.b32.xlu0 %v3921, 24
      %v3967 = vpop.permute.xlu0 %3966
      %3968 = vrot.lane.b32.xlu0 %v3922, 24
      %v3969 = vpop.permute.xlu0 %3968
      %3970 = vrot.lane.b32.xlu0 %v3923, 24
      %v3971 = vpop.permute.xlu0 %3970
      %vm3988 = vcmask 261312
      %3989 = vst.msk [vmem:[%s167] sm:$0xff] %vm3988, %v3941
      %3990 = vst.msk [vmem:[%s167 + $0x8] sm:$0xff] %vm3988, %v3943
      %3991 = vst.msk [vmem:[%s167 + $0x10] sm:$0xff] %vm3988, %v3945
      %3992 = vst.msk [vmem:[%s167 + $0x18] sm:$0xff] %vm3988, %v3947
      %3993 = vst.msk [vmem:[%s167 + $0x20] sm:$0xff] %vm3988, %v3949
      %3994 = vst.msk [vmem:[%s167 + $0x28] sm:$0xff] %vm3988, %v3951
      %3995 = vst.msk [vmem:[%s167 + $0x30] sm:$0xff] %vm3988, %v3953
      %3996 = vst.msk [vmem:[%s167 + $0x38] sm:$0xff] %vm3988, %v3955
      %3997 = vst.msk [vmem:[%s167 + $0x40] sm:$0xff] %vm3988, %v3957
      %3998 = vst.msk [vmem:[%s167 + $0x48] sm:$0xff] %vm3988, %v3959
      %3999 = vst.msk [vmem:[%s167 + $0x50] sm:$0xff] %vm3988, %v3961
      %4000 = vst.msk [vmem:[%s167 + $0x58] sm:$0xff] %vm3988, %v3963
      %4001 = vst.msk [vmem:[%s167 + $0x60] sm:$0xff] %vm3988, %v3965
      %4002 = vst.msk [vmem:[%s167 + $0x68] sm:$0xff] %vm3988, %v3967
      %4003 = vst.msk [vmem:[%s167 + $0x70] sm:$0xff] %vm3988, %v3969
      %4004 = vst.msk [vmem:[%s167 + $0x78] sm:$0xff] %vm3988, %v3971
      %s4005 = smul.u32 8, %s18
      %p4006 = scmp.lt.s32.totalorder %s17, 1
      %s4007 = scalar_select %p4006, %s17, 1
      %p4008 = scmp.lt.s32.totalorder %s4005, 15
      %s4009 = scalar_select %p4008, %s4005, 15
      %s4010 = smul.addr %s4009, 2
      %s4011 = smul.addr %s4007, 32
      %s4012 = sadd.s32 %s4010, %s4011
      %s4013 = smul.addr %s4012, 8
      %s4014 = scalar_lea.vmem %s2, %s4013
      // Predicated region
      $region29: #{conv_block_t.1} parent=27 // pred_check
        %p4015 = pneg %p92
      $region30: #{conv_block_t.1} parent=27 // pred_check_branch
        %4017 = sbr.rel (%p4015) target = $region32
      $region31: #{conv_block_t.1} parent=27 // pred_region
        %s4018 = smul.u32 8, %s18
      $region32: #{conv_block_t.1} parent=27 // pred_fallthru
        _
    $region28: #{conv_block_t.1} parent=5 // pred_fallthru
      _
    %p4019 = scmp.le.s32.totalorder 2, %s8
    // Predicated region
    $region33: #{conv_block_t.1} parent=5 // pred_check
      %p4020 = pneg %p4019
    $region34: #{conv_block_t.1} parent=5 // pred_check_branch
      %4022 = sbr.rel (%p4020) target = $region36
    $region35: #{conv_block_t.1} parent=5 // pred_region
      %s4023 = ssub.s32 %s8, 2
      // Predicated region
      $region37: #{conv_block_t.1} parent=35 // pred_check
        %p4024 = pneg %p98
      $region38: #{conv_block_t.1} parent=35 // pred_check_branch
        %4026 = sbr.rel (%p4024) target = $region40
      $region39: #{conv_block_t.1} parent=35 // pred_region
        %s4027 = smul.u32 8, %s20
        %p4028 = scmp.lt.s32.totalorder %s19, 1
        %s4029 = scalar_select %p4028, %s19, 1
        %p4030 = scmp.lt.s32.totalorder %s4027, 15
        %s4031 = scalar_select %p4030, %s4027, 15
        %s4032 = smul.addr %s4031, 2
        %s4033 = smul.addr %s4029, 32
        %s4034 = sadd.s32 %s4032, %s4033
        %s4035 = smul.addr %s4034, 8
        %s4036 = scalar_lea.vmem %s2, %s4035
      $region40: #{conv_block_t.1} parent=35 // pred_fallthru
        _
    $region36: #{conv_block_t.1} parent=5 // pred_fallthru
      _
  $region6: #{conv_block_t.1} parent=0 // loop_footer
    %s12 = sadd.s32 1, %s8
  $region7: #{conv_block_t.1} parent=0 // loop_footer_branch
    %7 = sbr.rel target = $region3
  $region8: #{conv_block_t.1} parent=0 // loop_exit
    _

</llo_original>
